<compile_context>
chip_gen: v5e
topology: v5e:2x2
jax: 0.10.0
libtpu: 0.0.40
codegen_flags: <defaults>
</compile_context>

<pallas_src>
import functools

import jax
import jax.numpy as jnp
from jax.experimental import pallas as pl
from jax.experimental.pallas import tpu as pltpu

_EPS = 1e-5
_LANES = 128


# ----------------------------------------------------------------------------
# Small helpers
# ----------------------------------------------------------------------------
def _round_up(x, m=_LANES):
    return ((x + m - 1) // m) * m


def _pad_ch(x, cp):
    c = x.shape[-1]
    if c == cp:
        return x
    pad = [(0, 0)] * (x.ndim - 1) + [(0, cp - c)]
    return jnp.pad(x, pad)


def _pad_vec(v, cp):
    v = v.astype(jnp.float32)
    if v.shape[0] == cp:
        return v
    return jnp.pad(v, (0, cp - v.shape[0]))


def _w3x3(w, ci_p, co_p):
    """(O, I, 3, 3) -> (9, ci_p, co_p) bf16, tap index = kh*3 + kw."""
    o, i = w.shape[0], w.shape[1]
    wt = jnp.transpose(w, (2, 3, 1, 0)).reshape(9, i, o)
    wt = jnp.pad(wt, ((0, 0), (0, ci_p - i), (0, co_p - o)))
    return wt.astype(jnp.bfloat16)


def _w1x1(w, ci_p, co_p):
    """(O, I, 1, 1) -> (ci_p, co_p) bf16."""
    o, i = w.shape[0], w.shape[1]
    wt = jnp.transpose(w[:, :, 0, 0], (1, 0))
    wt = jnp.pad(wt, ((0, ci_p - i), (0, co_p - o)))
    return wt.astype(jnp.bfloat16)


def _row_tiling(m):
    """Prefer big (512-row) tiles; pad ragged M instead of a full-extent block."""
    for t in (512, 256, 128, 64, 32, 16, 8):
        if m % t == 0:
            return m, t
    mp = _round_up(m, 256)
    return mp, 256


# ----------------------------------------------------------------------------
# Pallas kernels
# ----------------------------------------------------------------------------
def _conv3x3_s1_kernel(*refs, fuse_input):
    """3x3 conv, stride 1, pad 1, over one batch element.

    Optionally applies relu(x*scale+bias) (the previous stage's folded BN) to
    the input tile before the convolution.  Emits per-block partial BN stats.
    """
    if fuse_input:
        x_ref, s_ref, b_ref, w_ref, y_ref, sum_ref, sq_ref, xpad_ref = refs
    else:
        x_ref, w_ref, y_ref, sum_ref, sq_ref, xpad_ref = refs
    _, h, w, ci = x_ref.shape
    co = w_ref.shape[-1]

    x = x_ref[0].astype(jnp.float32)                        # (h, w, ci)
    if fuse_input:
        x = jnp.maximum(x * s_ref[0] + b_ref[0], 0.0)       # fused BN + ReLU

    # zero-padded activation lives only in VMEM (never materialized in HBM)
    xpad_ref[...] = jnp.zeros_like(xpad_ref)
    xpad_ref[1:h + 1, 1:w + 1, :] = x
    xp = xpad_ref[...]                                      # (h+2, w+2, ci) f32

    acc = jnp.zeros((h * w, co), jnp.float32)
    for kh in range(3):
        for kw in range(3):
            patch = xp[kh:kh + h, kw:kw + w, :].reshape(h * w, ci)
            acc = acc + jnp.dot(patch.astype(jnp.bfloat16),
                                w_ref[kh * 3 + kw],
                                preferred_element_type=jnp.float32)

    y_ref[...] = acc.reshape(1, h, w, co).astype(y_ref.dtype)
    sum_ref[...] = jnp.sum(acc, axis=0).reshape(1, 1, co)
    sq_ref[...] = jnp.sum(acc * acc, axis=0).reshape(1, 1, co)


def _conv3x3_s2_kernel(p00_ref, p01_ref, p10_ref, p11_ref, w_ref,
                       y_ref, sum_ref, sq_ref):
    """3x3 conv, stride 2, pad 1, using 4 polyphase components of the padded
    input so every in-kernel slice is contiguous."""
    _, ho, wo, co = y_ref.shape
    ci = w_ref.shape[1]
    comps = ((p00_ref[0].astype(jnp.float32), p01_ref[0].astype(jnp.float32)),
             (p10_ref[0].astype(jnp.float32), p11_ref[0].astype(jnp.float32)))

    acc = jnp.zeros((ho * wo, co), jnp.float32)
    for kh in range(3):
        for kw in range(3):
            c = comps[kh % 2][kw % 2]
            a, b = kh // 2, kw // 2
            patch = c[a:a + ho, b:b + wo, :].reshape(ho * wo, ci)
            acc = acc + jnp.dot(patch.astype(jnp.bfloat16),
                                w_ref[kh * 3 + kw],
                                preferred_element_type=jnp.float32)

    y_ref[...] = acc.reshape(1, ho, wo, co).astype(y_ref.dtype)
    sum_ref[...] = jnp.sum(acc, axis=0).reshape(1, 1, co)
    sq_ref[...] = jnp.sum(acc * acc, axis=0).reshape(1, 1, co)


def _matmul_stats_kernel(x_ref, w_ref, y_ref, sum_ref, sq_ref):
    """1x1 conv (projection shortcut) as a bf16 matmul + partial BN stats."""
    y = jnp.dot(x_ref[...], w_ref[...], preferred_element_type=jnp.float32)
    y_ref[...] = y
    sum_ref[...] = jnp.sum(y, axis=0).reshape(1, 1, -1)
    sq_ref[...] = jnp.sum(y * y, axis=0).reshape(1, 1, -1)


def _fused_out_kernel(*refs, res_affine):
    """out = relu(y*scale + bias + residual[*rscale + rbias])."""
    if res_affine:
        y_ref, s_ref, b_ref, r_ref, rs_ref, rb_ref, o_ref = refs
    else:
        y_ref, s_ref, b_ref, r_ref, o_ref = refs
    out = y_ref[...].astype(jnp.float32) * s_ref[...] + b_ref[...]
    res = r_ref[...].astype(jnp.float32)
    if res_affine:
        res = res * rs_ref[...] + rb_ref[...]
    o_ref[...] = jnp.maximum(out + res, 0.0)


# ----------------------------------------------------------------------------
# Pallas wrappers
# ----------------------------------------------------------------------------
def conv3x3_s1(x, w9, scale_in=None, bias_in=None, out_dtype=jnp.float32):
    n, h, w, ci = x.shape
    co = w9.shape[-1]
    fuse = scale_in is not None
    kernel = functools.partial(_conv3x3_s1_kernel, fuse_input=fuse)

    in_specs = [pl.BlockSpec((1, h, w, ci), lambda b: (b, 0, 0, 0))]
    args = [x]
    if fuse:
        in_specs += [pl.BlockSpec((1, ci), lambda b: (0, 0)),
                     pl.BlockSpec((1, ci), lambda b: (0, 0))]
        args += [scale_in, bias_in]
    in_specs.append(pl.BlockSpec((9, ci, co), lambda b: (0, 0, 0)))
    args.append(w9)

    out_shape = (jax.ShapeDtypeStruct((n, h, w, co), out_dtype),
                 jax.ShapeDtypeStruct((n, 1, co), jnp.float32),
                 jax.ShapeDtypeStruct((n, 1, co), jnp.float32))
    out_specs = [pl.BlockSpec((1, h, w, co), lambda b: (b, 0, 0, 0)),
                 pl.BlockSpec((1, 1, co), lambda b: (b, 0, 0)),
                 pl.BlockSpec((1, 1, co), lambda b: (b, 0, 0))]

    return pl.pallas_call(
        kernel,
        out_shape=out_shape,
        grid_spec=pltpu.PrefetchScalarGridSpec(
            num_scalar_prefetch=0,
            grid=(n,),
            in_specs=in_specs,
            out_specs=out_specs,
            scratch_shapes=[pltpu.VMEM((h + 2, w + 2, ci), jnp.float32)]),
        compiler_params=pltpu.CompilerParams(dimension_semantics=("parallel",)),
    )(*args)


def conv3x3_s2(comps, w9, ho, wo, out_dtype=jnp.float32):
    n = comps[0].shape[0]
    ci = comps[0].shape[-1]
    co = w9.shape[-1]

    in_specs = [pl.BlockSpec((1,) + c.shape[1:], lambda b: (b, 0, 0, 0))
                for c in comps]
    in_specs.append(pl.BlockSpec((9, ci, co), lambda b: (0, 0, 0)))

    out_shape = (jax.ShapeDtypeStruct((n, ho, wo, co), out_dtype),
                 jax.ShapeDtypeStruct((n, 1, co), jnp.float32),
                 jax.ShapeDtypeStruct((n, 1, co), jnp.float32))
    out_specs = [pl.BlockSpec((1, ho, wo, co), lambda b: (b, 0, 0, 0)),
                 pl.BlockSpec((1, 1, co), lambda b: (b, 0, 0)),
                 pl.BlockSpec((1, 1, co), lambda b: (b, 0, 0))]

    return pl.pallas_call(
        _conv3x3_s2_kernel,
        out_shape=out_shape,
        grid_spec=pltpu.PrefetchScalarGridSpec(
            num_scalar_prefetch=0,
            grid=(n,),
            in_specs=in_specs,
            out_specs=out_specs),
        compiler_params=pltpu.CompilerParams(dimension_semantics=("parallel",)),
    )(*list(comps) + [w9])


def matmul_with_stats(x2d, w):
    m, k = x2d.shape
    nch = w.shape[-1]
    mp, tm = _row_tiling(m)
    if mp != m:
        x2d = jnp.pad(x2d, ((0, mp - m), (0, 0)))   # zero rows: stats unaffected
    grid = (mp // tm,)
    y, ps, pq = pl.pallas_call(
        _matmul_stats_kernel,
        out_shape=(jax.ShapeDtypeStruct((mp, nch), jnp.float32),
                   jax.ShapeDtypeStruct((grid[0], 1, nch), jnp.float32),
                   jax.ShapeDtypeStruct((grid[0], 1, nch), jnp.float32)),
        grid_spec=pltpu.PrefetchScalarGridSpec(
            num_scalar_prefetch=0,
            grid=grid,
            in_specs=[pl.BlockSpec((tm, k), lambda i: (i, 0)),
                      pl.BlockSpec((k, nch), lambda i: (0, 0))],
            out_specs=[pl.BlockSpec((tm, nch), lambda i: (i, 0)),
                       pl.BlockSpec((1, 1, nch), lambda i: (i, 0, 0)),
                       pl.BlockSpec((1, 1, nch), lambda i: (i, 0, 0))]),
        compiler_params=pltpu.CompilerParams(dimension_semantics=("parallel",)),
    )(x2d, w)
    return y[:m], ps, pq


def fused_output(y, scale, bias, res, res_scale=None, res_bias=None):
    m, nch = y.shape
    mp, tm = _row_tiling(m)
    if mp != m:
        y = jnp.pad(y, ((0, mp - m), (0, 0)))
        res = jnp.pad(res, ((0, mp - m), (0, 0)))
    res_affine = res_scale is not None
    kernel = functools.partial(_fused_out_kernel, res_affine=res_affine)

    in_specs = [pl.BlockSpec((tm, nch), lambda i: (i, 0)),
                pl.BlockSpec((1, nch), lambda i: (0, 0)),
                pl.BlockSpec((1, nch), lambda i: (0, 0)),
                pl.BlockSpec((tm, nch), lambda i: (i, 0))]
    args = [y, scale, bias, res]
    if res_affine:
        in_specs += [pl.BlockSpec((1, nch), lambda i: (0, 0)),
                     pl.BlockSpec((1, nch), lambda i: (0, 0))]
        args += [res_scale, res_bias]

    out = pl.pallas_call(
        kernel,
        out_shape=jax.ShapeDtypeStruct((mp, nch), jnp.float32),
        grid_spec=pltpu.PrefetchScalarGridSpec(
            num_scalar_prefetch=0,
            grid=(mp // tm,),
            in_specs=in_specs,
            out_specs=pl.BlockSpec((tm, nch), lambda i: (i, 0))),
        input_output_aliases={0: 0},
        compiler_params=pltpu.CompilerParams(dimension_semantics=("parallel",)),
    )(*args)
    return out[:m]


def _bn_fold(psum, psq, gamma, beta, count):
    """Training-mode BN (batch stats, biased var) folded to scale/bias (1,C)."""
    s = jnp.sum(psum, axis=0)
    q = jnp.sum(psq, axis=0)
    mean = s / count
    # TODO(synk): one-pass E[y^2]-E[y]^2 can lose precision for huge activations
    var = jnp.maximum(q / count - mean * mean, 0.0)
    scale = gamma.reshape(1, -1) * jax.lax.rsqrt(var + _EPS)
    bias = beta.reshape(1, -1) - mean * scale
    return scale, bias


# ----------------------------------------------------------------------------
# BasicBlock module
# ----------------------------------------------------------------------------
EXPANSION = 1


def init_basicblock_params(key, in_planes, planes, stride):
    ks = jax.random.split(key, 9)

    def conv(k, shape):
        return 0.1 * jax.random.normal(k, shape, jnp.float32)

    def bn(k1, k2, c):
        gamma = 1.0 + 0.1 * jax.random.normal(k1, (c,), jnp.float32)
        beta = 0.05 * jax.random.normal(k2, (c,), jnp.float32)
        return gamma, beta

    p = {}
    p["conv1_w"] = conv(ks[0], (planes, in_planes, 3, 3))
    p["bn1_gamma"], p["bn1_beta"] = bn(ks[1], ks[2], planes)
    p["conv2_w"] = conv(ks[3], (planes, planes, 3, 3))
    p["bn2_gamma"], p["bn2_beta"] = bn(ks[4], ks[5], planes)
    if stride != 1 or in_planes != EXPANSION * planes:
        p["sc_w"] = conv(ks[6], (EXPANSION * planes, in_planes, 1, 1))
        p["sc_gamma"], p["sc_beta"] = bn(ks[7], ks[8], EXPANSION * planes)
    return p


def basicblock_forward(params, x_nchw, stride):
    n, cin, h, w = x_nchw.shape
    planes = params["conv1_w"].shape[0]
    cin_p = _round_up(cin)
    pln_p = _round_up(planes)

    # TODO(synk): when chaining blocks, keep NHWC (lane-padded) end-to-end and
    # drop these per-block transposes.
    x = jnp.transpose(x_nchw, (0, 2, 3, 1)).astype(jnp.float32)   # NHWC
    x_p = _pad_ch(x, cin_p)                                       # f32, 128-lane
    x_b = x_p.astype(jnp.bfloat16)

    w1 = _w3x3(params["conv1_w"], cin_p, pln_p)
    w2 = _w3x3(params["conv2_w"], pln_p, pln_p)
    g1 = _pad_vec(params["bn1_gamma"], pln_p)
    be1 = _pad_vec(params["bn1_beta"], pln_p)
    g2 = _pad_vec(params["bn2_gamma"], pln_p)
    be2 = _pad_vec(params["bn2_beta"], pln_p)

    ho = (h - 1) // stride + 1
    wo = (w - 1) // stride + 1
    m = n * ho * wo

    # --- stage 1: 3x3 conv (stride) + batch stats ---------------------------
    if stride == 1:
        y1, s1, q1 = conv3x3_s1(x_b, w1, out_dtype=jnp.bfloat16)
        proj_in = x_b
    else:
        xp = jnp.pad(x_b, ((0, 0), (1, 1), (1, 1), (0, 0)))
        comps = tuple(xp[:, a::2, b::2, :] for a in (0, 1) for b in (0, 1))
        y1, s1, q1 = conv3x3_s2(comps, w1, ho, wo, out_dtype=jnp.bfloat16)
        proj_in = comps[3][:, :ho, :wo, :]      # == x[:, ::2, ::2, :] (padded ch)

    sc1, bi1 = _bn_fold(s1, q1, g1, be1, m)

    # --- stage 2: 3x3 conv (stride 1), BN1+ReLU fused onto the input load ---
    y2, s2, q2 = conv3x3_s1(y1, w2, scale_in=sc1, bias_in=bi1,
                            out_dtype=jnp.float32)
    sc2, bi2 = _bn_fold(s2, q2, g2, be2, m)
    y2f = y2.reshape(m, pln_p)

    # --- shortcut + final add/ReLU (fused) -----------------------------------
    if "sc_w" in params:
        ws = _w1x1(params["sc_w"], cin_p, pln_p)
        xs = proj_in.reshape(m, cin_p)
        ysc, ssc, qsc = matmul_with_stats(xs, ws)
        scs, bis = _bn_fold(ssc, qsc, _pad_vec(params["sc_gamma"], pln_p),
                            _pad_vec(params["sc_beta"], pln_p), m)
        out = fused_output(y2f, sc2, bi2, ysc, scs, bis)
    else:
        assert stride == 1 and cin == planes, \
            "identity shortcut requires stride=1 and matching channels"
        out = fused_output(y2f, sc2, bi2, x_p.reshape(m, pln_p))

    out = out.reshape(n, ho, wo, pln_p)[:, :, :, :planes]
    return jnp.transpose(out, (0, 3, 1, 2))    # back to NCHW


# ----------------------------------------------------------------------------
# Pure-JAX reference (f32) for a sanity check
# ----------------------------------------------------------------------------
def _reference(params, x_nchw, stride):
    x = jnp.transpose(x_nchw, (0, 2, 3, 1)).astype(jnp.float32)

    def conv(inp, w, s, pad):
        return jax.lax.conv_general_dilated(
            inp, jnp.transpose(w, (2, 3, 1, 0)), (s, s), pad,
            dimension_numbers=("NHWC", "HWIO", "NHWC"))

    def bn(y, gamma, beta):
        mean = y.mean(axis=(0, 1, 2))
        var = y.var(axis=(0, 1, 2))
        return gamma * (y - mean) * jax.lax.rsqrt(var + _EPS) + beta

    o = jax.nn.relu(bn(conv(x, params["conv1_w"], stride, [(1, 1), (1, 1)]),
                       params["bn1_gamma"], params["bn1_beta"]))
    o = bn(conv(o, params["conv2_w"], 1, [(1, 1), (1, 1)]),
           params["bn2_gamma"], params["bn2_beta"])
    if "sc_w" in params:
        sc = bn(conv(x, params["sc_w"], stride, "VALID"),
                params["sc_gamma"], params["sc_beta"])
    else:
        sc = x
    return jnp.transpose(jax.nn.relu(o + sc), (0, 3, 1, 2))


# ----------------------------------------------------------------------------
if __name__ == "__main__":
    key = jax.random.PRNGKey(0)
    fwd = jax.jit(basicblock_forward, static_argnames=("stride",))

    configs = [
        (4, 4, 1),   # identity shortcut
        (8, 4, 1),   # projection shortcut (channel change)
        (4, 8, 2),   # projection shortcut with stride 2
    ]
    for idx, (in_planes, planes, stride) in enumerate(configs):
        kp, kx, key = jax.random.split(key, 3)
        params = init_basicblock_params(kp, in_planes, planes, stride)
        x = jax.random.normal(kx, (2, in_planes, 16, 16), jnp.float32)

        out = jax.block_until_ready(fwd(params, x, stride=stride))
        ref = jax.block_until_ready(_reference(params, x, stride))

        assert out.shape == ref.shape, (out.shape, ref.shape)
        rel = float(jnp.linalg.norm(out - ref) / (jnp.linalg.norm(ref) + 1e-8))
        mae = float(jnp.max(jnp.abs(out - ref)))
        assert rel < 3e-2 and mae < 0.25, \
            f"config {idx}: rel_err={rel:.4f} max_abs_err={mae:.4f}"

    print("KERNEL_OK")
</pallas_src>

<mosaic_0001>
module attributes {stable_mosaic.version = 11 : i64} {
  func.func @_conv3x3_s1_kernel(%arg0: i32, %arg1: memref<1x16x16x128xbf16, #tpu.memory_space<vmem>>, %arg2: memref<9x128x128xbf16, #tpu.memory_space<vmem>>, %arg3: memref<1x16x16x128xbf16, #tpu.memory_space<vmem>>, %arg4: memref<1x1x128xf32, #tpu.memory_space<vmem>>, %arg5: memref<1x1x128xf32, #tpu.memory_space<vmem>>, %arg6: memref<18x18x128xf32, #tpu.memory_space<vmem>>) attributes {dimension_semantics = [#tpu.dimension_semantics<parallel>], iteration_bounds = array<i64: 2>, scalar_prefetch = 0 : i64, scratch_operands = 1 : i64, tpu.core_type = #tpu.core_type<tc>, window_params = [{transform_indices = @transform_0, window_bounds = array<i64: 1, 16, 16, 128>}, {pipeline_mode = #tpu.pipeline_mode<synchronous>, transform_indices = @transform_1, window_bounds = array<i64: 9, 128, 128>}, {transform_indices = @transform_2, window_bounds = array<i64: 1, 16, 16, 128>}, {transform_indices = @transform_3, window_bounds = array<i64: 1, 1, 128>}, {transform_indices = @transform_4, window_bounds = array<i64: 1, 1, 128>}]} {
    %c0 = arith.constant 0 : index
    %c0_0 = arith.constant 0 : index
    %c0_1 = arith.constant 0 : index
    %c0_2 = arith.constant 0 : index
    %0 = vector.load %arg1[%c0, %c0_0, %c0_1, %c0_2] : memref<1x16x16x128xbf16, #tpu.memory_space<vmem>>, vector<1x16x16x128xbf16>
    %1 = vector.shape_cast %0 : vector<1x16x16x128xbf16> to vector<16x16x128xbf16>
    %2 = arith.extf %1 : vector<16x16x128xbf16> to vector<16x16x128xf32>
    %cst = arith.constant 0.000000e+00 : f32
    %3 = vector.broadcast %cst : f32 to vector<18x18x128xf32>
    %c0_3 = arith.constant 0 : index
    %c0_4 = arith.constant 0 : index
    %c0_5 = arith.constant 0 : index
    %4 = vector.load %arg6[%c0_3, %c0_4, %c0_5] : memref<18x18x128xf32, #tpu.memory_space<vmem>>, vector<18x18x128xf32>
    tpu.vector_store %arg6[%c0_3, %c0_4, %c0_5], %3 {strides = array<i32>} : memref<18x18x128xf32, #tpu.memory_space<vmem>>, vector<18x18x128xf32>,
    %c1 = arith.constant 1 : index
    %c1_6 = arith.constant 1 : index
    %c0_7 = arith.constant 0 : index
    %5 = vector.load %arg6[%c1, %c1_6, %c0_7] : memref<18x18x128xf32, #tpu.memory_space<vmem>>, vector<16x16x128xf32>
    tpu.vector_store %arg6[%c1, %c1_6, %c0_7], %2 {strides = array<i32>} : memref<18x18x128xf32, #tpu.memory_space<vmem>>, vector<16x16x128xf32>,
    %c0_8 = arith.constant 0 : index
    %c0_9 = arith.constant 0 : index
    %c0_10 = arith.constant 0 : index
    %6 = vector.load %arg6[%c0_8, %c0_9, %c0_10] : memref<18x18x128xf32, #tpu.memory_space<vmem>>, vector<18x18x128xf32>
    %cst_11 = arith.constant 0.000000e+00 : f32
    %7 = vector.broadcast %cst_11 : f32 to vector<256x128xf32>
    %8 = vector.extract_strided_slice %6 {offsets = [0, 0, 0], sizes = [16, 16, 128], strides = [1, 1, 1]} : vector<18x18x128xf32> to vector<16x16x128xf32>
    %9 = vector.shape_cast %8 : vector<16x16x128xf32> to vector<256x128xf32>
    %10 = arith.truncf %9 : vector<256x128xf32> to vector<256x128xbf16>
    %c0_12 = arith.constant 0 : index
    %c0_13 = arith.constant 0 : index
    %c0_14 = arith.constant 0 : index
    %11 = vector.load %arg2[%c0_12, %c0_13, %c0_14] : memref<9x128x128xbf16, #tpu.memory_space<vmem>>, vector<1x128x128xbf16>
    %12 = vector.shape_cast %11 : vector<1x128x128xbf16> to vector<128x128xbf16>
    %cst_15 = arith.constant dense<0.000000e+00> : vector<256x128xf32>
    %13 = tpu.matmul %10, %12, %cst_15 {dimension_numbers = #tpu.dot_dimension_numbers<[1], [0], [0], [1], [0, 0, 1, 1], [], []>} : vector<256x128xbf16>, vector<128x128xbf16>, vector<256x128xf32> -> vector<256x128xf32>
    %14 = arith.addf %7, %13 : vector<256x128xf32>
    %15 = vector.extract_strided_slice %6 {offsets = [0, 1, 0], sizes = [16, 16, 128], strides = [1, 1, 1]} : vector<18x18x128xf32> to vector<16x16x128xf32>
    %16 = vector.shape_cast %15 : vector<16x16x128xf32> to vector<256x128xf32>
    %17 = arith.truncf %16 : vector<256x128xf32> to vector<256x128xbf16>
    %c1_16 = arith.constant 1 : index
    %c0_17 = arith.constant 0 : index
    %c0_18 = arith.constant 0 : index
    %18 = vector.load %arg2[%c1_16, %c0_17, %c0_18] : memref<9x128x128xbf16, #tpu.memory_space<vmem>>, vector<1x128x128xbf16>
    %19 = vector.shape_cast %18 : vector<1x128x128xbf16> to vector<128x128xbf16>
    %cst_19 = arith.constant dense<0.000000e+00> : vector<256x128xf32>
    %20 = tpu.matmul %17, %19, %cst_19 {dimension_numbers = #tpu.dot_dimension_numbers<[1], [0], [0], [1], [0, 0, 1, 1], [], []>} : vector<256x128xbf16>, vector<128x128xbf16>, vector<256x128xf32> -> vector<256x128xf32>
    %21 = arith.addf %14, %20 : vector<256x128xf32>
    %22 = vector.extract_strided_slice %6 {offsets = [0, 2, 0], sizes = [16, 16, 128], strides = [1, 1, 1]} : vector<18x18x128xf32> to vector<16x16x128xf32>
    %23 = vector.shape_cast %22 : vector<16x16x128xf32> to vector<256x128xf32>
    %24 = arith.truncf %23 : vector<256x128xf32> to vector<256x128xbf16>
    %c2 = arith.constant 2 : index
    %c0_20 = arith.constant 0 : index
    %c0_21 = arith.constant 0 : index
    %25 = vector.load %arg2[%c2, %c0_20, %c0_21] : memref<9x128x128xbf16, #tpu.memory_space<vmem>>, vector<1x128x128xbf16>
    %26 = vector.shape_cast %25 : vector<1x128x128xbf16> to vector<128x128xbf16>
    %cst_22 = arith.constant dense<0.000000e+00> : vector<256x128xf32>
    %27 = tpu.matmul %24, %26, %cst_22 {dimension_numbers = #tpu.dot_dimension_numbers<[1], [0], [0], [1], [0, 0, 1, 1], [], []>} : vector<256x128xbf16>, vector<128x128xbf16>, vector<256x128xf32> -> vector<256x128xf32>
    %28 = arith.addf %21, %27 : vector<256x128xf32>
    %29 = vector.extract_strided_slice %6 {offsets = [1, 0, 0], sizes = [16, 16, 128], strides = [1, 1, 1]} : vector<18x18x128xf32> to vector<16x16x128xf32>
    %30 = vector.shape_cast %29 : vector<16x16x128xf32> to vector<256x128xf32>
    %31 = arith.truncf %30 : vector<256x128xf32> to vector<256x128xbf16>
    %c3 = arith.constant 3 : index
    %c0_23 = arith.constant 0 : index
    %c0_24 = arith.constant 0 : index
    %32 = vector.load %arg2[%c3, %c0_23, %c0_24] : memref<9x128x128xbf16, #tpu.memory_space<vmem>>, vector<1x128x128xbf16>
    %33 = vector.shape_cast %32 : vector<1x128x128xbf16> to vector<128x128xbf16>
    %cst_25 = arith.constant dense<0.000000e+00> : vector<256x128xf32>
    %34 = tpu.matmul %31, %33, %cst_25 {dimension_numbers = #tpu.dot_dimension_numbers<[1], [0], [0], [1], [0, 0, 1, 1], [], []>} : vector<256x128xbf16>, vector<128x128xbf16>, vector<256x128xf32> -> vector<256x128xf32>
    %35 = arith.addf %28, %34 : vector<256x128xf32>
    %36 = vector.extract_strided_slice %6 {offsets = [1, 1, 0], sizes = [16, 16, 128], strides = [1, 1, 1]} : vector<18x18x128xf32> to vector<16x16x128xf32>
    %37 = vector.shape_cast %36 : vector<16x16x128xf32> to vector<256x128xf32>
    %38 = arith.truncf %37 : vector<256x128xf32> to vector<256x128xbf16>
    %c4 = arith.constant 4 : index
    %c0_26 = arith.constant 0 : index
    %c0_27 = arith.constant 0 : index
    %39 = vector.load %arg2[%c4, %c0_26, %c0_27] : memref<9x128x128xbf16, #tpu.memory_space<vmem>>, vector<1x128x128xbf16>
    %40 = vector.shape_cast %39 : vector<1x128x128xbf16> to vector<128x128xbf16>
    %cst_28 = arith.constant dense<0.000000e+00> : vector<256x128xf32>
    %41 = tpu.matmul %38, %40, %cst_28 {dimension_numbers = #tpu.dot_dimension_numbers<[1], [0], [0], [1], [0, 0, 1, 1], [], []>} : vector<256x128xbf16>, vector<128x128xbf16>, vector<256x128xf32> -> vector<256x128xf32>
    %42 = arith.addf %35, %41 : vector<256x128xf32>
    %43 = vector.extract_strided_slice %6 {offsets = [1, 2, 0], sizes = [16, 16, 128], strides = [1, 1, 1]} : vector<18x18x128xf32> to vector<16x16x128xf32>
    %44 = vector.shape_cast %43 : vector<16x16x128xf32> to vector<256x128xf32>
    %45 = arith.truncf %44 : vector<256x128xf32> to vector<256x128xbf16>
    %c5 = arith.constant 5 : index
    %c0_29 = arith.constant 0 : index
    %c0_30 = arith.constant 0 : index
    %46 = vector.load %arg2[%c5, %c0_29, %c0_30] : memref<9x128x128xbf16, #tpu.memory_space<vmem>>, vector<1x128x128xbf16>
    %47 = vector.shape_cast %46 : vector<1x128x128xbf16> to vector<128x128xbf16>
    %cst_31 = arith.constant dense<0.000000e+00> : vector<256x128xf32>
    %48 = tpu.matmul %45, %47, %cst_31 {dimension_numbers = #tpu.dot_dimension_numbers<[1], [0], [0], [1], [0, 0, 1, 1], [], []>} : vector<256x128xbf16>, vector<128x128xbf16>, vector<256x128xf32> -> vector<256x128xf32>
    %49 = arith.addf %42, %48 : vector<256x128xf32>
    %50 = vector.extract_strided_slice %6 {offsets = [2, 0, 0], sizes = [16, 16, 128], strides = [1, 1, 1]} : vector<18x18x128xf32> to vector<16x16x128xf32>
    %51 = vector.shape_cast %50 : vector<16x16x128xf32> to vector<256x128xf32>
    %52 = arith.truncf %51 : vector<256x128xf32> to vector<256x128xbf16>
    %c6 = arith.constant 6 : index
    %c0_32 = arith.constant 0 : index
    %c0_33 = arith.constant 0 : index
    %53 = vector.load %arg2[%c6, %c0_32, %c0_33] : memref<9x128x128xbf16, #tpu.memory_space<vmem>>, vector<1x128x128xbf16>
    %54 = vector.shape_cast %53 : vector<1x128x128xbf16> to vector<128x128xbf16>
    %cst_34 = arith.constant dense<0.000000e+00> : vector<256x128xf32>
    %55 = tpu.matmul %52, %54, %cst_34 {dimension_numbers = #tpu.dot_dimension_numbers<[1], [0], [0], [1], [0, 0, 1, 1], [], []>} : vector<256x128xbf16>, vector<128x128xbf16>, vector<256x128xf32> -> vector<256x128xf32>
    %56 = arith.addf %49, %55 : vector<256x128xf32>
    %57 = vector.extract_strided_slice %6 {offsets = [2, 1, 0], sizes = [16, 16, 128], strides = [1, 1, 1]} : vector<18x18x128xf32> to vector<16x16x128xf32>
    %58 = vector.shape_cast %57 : vector<16x16x128xf32> to vector<256x128xf32>
    %59 = arith.truncf %58 : vector<256x128xf32> to vector<256x128xbf16>
    %c7 = arith.constant 7 : index
    %c0_35 = arith.constant 0 : index
    %c0_36 = arith.constant 0 : index
    %60 = vector.load %arg2[%c7, %c0_35, %c0_36] : memref<9x128x128xbf16, #tpu.memory_space<vmem>>, vector<1x128x128xbf16>
    %61 = vector.shape_cast %60 : vector<1x128x128xbf16> to vector<128x128xbf16>
    %cst_37 = arith.constant dense<0.000000e+00> : vector<256x128xf32>
    %62 = tpu.matmul %59, %61, %cst_37 {dimension_numbers = #tpu.dot_dimension_numbers<[1], [0], [0], [1], [0, 0, 1, 1], [], []>} : vector<256x128xbf16>, vector<128x128xbf16>, vector<256x128xf32> -> vector<256x128xf32>
    %63 = arith.addf %56, %62 : vector<256x128xf32>
    %64 = vector.extract_strided_slice %6 {offsets = [2, 2, 0], sizes = [16, 16, 128], strides = [1, 1, 1]} : vector<18x18x128xf32> to vector<16x16x128xf32>
    %65 = vector.shape_cast %64 : vector<16x16x128xf32> to vector<256x128xf32>
    %66 = arith.truncf %65 : vector<256x128xf32> to vector<256x128xbf16>
    %c8 = arith.constant 8 : index
    %c0_38 = arith.constant 0 : index
    %c0_39 = arith.constant 0 : index
    %67 = vector.load %arg2[%c8, %c0_38, %c0_39] : memref<9x128x128xbf16, #tpu.memory_space<vmem>>, vector<1x128x128xbf16>
    %68 = vector.shape_cast %67 : vector<1x128x128xbf16> to vector<128x128xbf16>
    %cst_40 = arith.constant dense<0.000000e+00> : vector<256x128xf32>
    %69 = tpu.matmul %66, %68, %cst_40 {dimension_numbers = #tpu.dot_dimension_numbers<[1], [0], [0], [1], [0, 0, 1, 1], [], []>} : vector<256x128xbf16>, vector<128x128xbf16>, vector<256x128xf32> -> vector<256x128xf32>
    %70 = arith.addf %63, %69 : vector<256x128xf32>
    %71 = vector.shape_cast %70 : vector<256x128xf32> to vector<1x16x16x128xf32>
    %72 = arith.truncf %71 : vector<1x16x16x128xf32> to vector<1x16x16x128xbf16>
    %c0_41 = arith.constant 0 : index
    %c0_42 = arith.constant 0 : index
    %c0_43 = arith.constant 0 : index
    %c0_44 = arith.constant 0 : index
    %73 = vector.load %arg3[%c0_41, %c0_42, %c0_43, %c0_44] : memref<1x16x16x128xbf16, #tpu.memory_space<vmem>>, vector<1x16x16x128xbf16>
    tpu.vector_store %arg3[%c0_41, %c0_42, %c0_43, %c0_44], %72 {strides = array<i32>} : memref<1x16x16x128xbf16, #tpu.memory_space<vmem>>, vector<1x16x16x128xbf16>,
    %cst_45 = arith.constant dense<0.000000e+00> : vector<128xf32>
    %74 = vector.multi_reduction <add>, %70, %cst_45 [0] : vector<256x128xf32> to vector<128xf32>
    %75 = vector.shape_cast %74 : vector<128xf32> to vector<1x1x128xf32>
    %c0_46 = arith.constant 0 : index
    %c0_47 = arith.constant 0 : index
    %c0_48 = arith.constant 0 : index
    %76 = vector.load %arg4[%c0_46, %c0_47, %c0_48] : memref<1x1x128xf32, #tpu.memory_space<vmem>>, vector<1x1x128xf32>
    tpu.vector_store %arg4[%c0_46, %c0_47, %c0_48], %75 {strides = array<i32>} : memref<1x1x128xf32, #tpu.memory_space<vmem>>, vector<1x1x128xf32>,
    %77 = arith.mulf %70, %70 : vector<256x128xf32>
    %cst_49 = arith.constant dense<0.000000e+00> : vector<128xf32>
    %78 = vector.multi_reduction <add>, %77, %cst_49 [0] : vector<256x128xf32> to vector<128xf32>
    %79 = vector.shape_cast %78 : vector<128xf32> to vector<1x1x128xf32>
    %c0_50 = arith.constant 0 : index
    %c0_51 = arith.constant 0 : index
    %c0_52 = arith.constant 0 : index
    %80 = vector.load %arg5[%c0_50, %c0_51, %c0_52] : memref<1x1x128xf32, #tpu.memory_space<vmem>>, vector<1x1x128xf32>
    tpu.vector_store %arg5[%c0_50, %c0_51, %c0_52], %79 {strides = array<i32>} : memref<1x1x128xf32, #tpu.memory_space<vmem>>, vector<1x1x128xf32>,
    return
  }
  func.func @transform_0(%arg0: i32) -> (i32, i32, i32, i32) {
    %c0_i32 = arith.constant 0 : i32
    %c0_i32_0 = arith.constant 0 : i32
    %c0_i32_1 = arith.constant 0 : i32
    %c0_i32_2 = arith.constant 0 : i32
    return %arg0, %c0_i32, %c0_i32_0, %c0_i32_1 : i32, i32, i32, i32
  }
  func.func @transform_1(%arg0: i32) -> (i32, i32, i32) {
    %c0_i32 = arith.constant 0 : i32
    %c0_i32_0 = arith.constant 0 : i32
    %c0_i32_1 = arith.constant 0 : i32
    %c0_i32_2 = arith.constant 0 : i32
    return %c0_i32, %c0_i32_0, %c0_i32_1 : i32, i32, i32
  }
  func.func @transform_2(%arg0: i32) -> (i32, i32, i32, i32) {
    %c0_i32 = arith.constant 0 : i32
    %c0_i32_0 = arith.constant 0 : i32
    %c0_i32_1 = arith.constant 0 : i32
    %c0_i32_2 = arith.constant 0 : i32
    return %arg0, %c0_i32, %c0_i32_0, %c0_i32_1 : i32, i32, i32, i32
  }
  func.func @transform_3(%arg0: i32) -> (i32, i32, i32) {
    %c0_i32 = arith.constant 0 : i32
    %c0_i32_0 = arith.constant 0 : i32
    %c0_i32_1 = arith.constant 0 : i32
    return %arg0, %c0_i32, %c0_i32_0 : i32, i32, i32
  }
  func.func @transform_4(%arg0: i32) -> (i32, i32, i32) {
    %c0_i32 = arith.constant 0 : i32
    %c0_i32_0 = arith.constant 0 : i32
    %c0_i32_1 = arith.constant 0 : i32
    return %arg0, %c0_i32, %c0_i32_0 : i32, i32, i32
  }
}

module attributes {stable_mosaic.version = 11 : i64} {
  func.func @_conv3x3_s1_kernel(%arg0: i32, %arg1: memref<1x16x16x128xbf16, #tpu.memory_space<vmem>>, %arg2: memref<1x128xf32, #tpu.memory_space<vmem>>, %arg3: memref<1x128xf32, #tpu.memory_space<vmem>>, %arg4: memref<9x128x128xbf16, #tpu.memory_space<vmem>>, %arg5: memref<1x16x16x128xf32, #tpu.memory_space<vmem>>, %arg6: memref<1x1x128xf32, #tpu.memory_space<vmem>>, %arg7: memref<1x1x128xf32, #tpu.memory_space<vmem>>, %arg8: memref<18x18x128xf32, #tpu.memory_space<vmem>>) attributes {dimension_semantics = [#tpu.dimension_semantics<parallel>], iteration_bounds = array<i64: 2>, scalar_prefetch = 0 : i64, scratch_operands = 1 : i64, tpu.core_type = #tpu.core_type<tc>, window_params = [{transform_indices = @transform_0, window_bounds = array<i64: 1, 16, 16, 128>}, {pipeline_mode = #tpu.pipeline_mode<synchronous>, transform_indices = @transform_1, window_bounds = array<i64: 1, 128>}, {pipeline_mode = #tpu.pipeline_mode<synchronous>, transform_indices = @transform_2, window_bounds = array<i64: 1, 128>}, {pipeline_mode = #tpu.pipeline_mode<synchronous>, transform_indices = @transform_3, window_bounds = array<i64: 9, 128, 128>}, {transform_indices = @transform_4, window_bounds = array<i64: 1, 16, 16, 128>}, {transform_indices = @transform_5, window_bounds = array<i64: 1, 1, 128>}, {transform_indices = @transform_6, window_bounds = array<i64: 1, 1, 128>}]} {
    %c0 = arith.constant 0 : index
    %c0_0 = arith.constant 0 : index
    %c0_1 = arith.constant 0 : index
    %c0_2 = arith.constant 0 : index
    %0 = vector.load %arg1[%c0, %c0_0, %c0_1, %c0_2] : memref<1x16x16x128xbf16, #tpu.memory_space<vmem>>, vector<1x16x16x128xbf16>
    %1 = vector.shape_cast %0 : vector<1x16x16x128xbf16> to vector<16x16x128xbf16>
    %2 = arith.extf %1 : vector<16x16x128xbf16> to vector<16x16x128xf32>
    %c0_3 = arith.constant 0 : index
    %c0_4 = arith.constant 0 : index
    %3 = vector.load %arg2[%c0_3, %c0_4] : memref<1x128xf32, #tpu.memory_space<vmem>>, vector<1x128xf32>
    %4 = vector.shape_cast %3 : vector<1x128xf32> to vector<128xf32>
    %5 = vector.shape_cast %4 : vector<128xf32> to vector<1x1x128xf32>
    %6 = vector.broadcast %5 : vector<1x1x128xf32> to vector<16x16x128xf32>
    %7 = arith.mulf %2, %6 : vector<16x16x128xf32>
    %c0_5 = arith.constant 0 : index
    %c0_6 = arith.constant 0 : index
    %8 = vector.load %arg3[%c0_5, %c0_6] : memref<1x128xf32, #tpu.memory_space<vmem>>, vector<1x128xf32>
    %9 = vector.shape_cast %8 : vector<1x128xf32> to vector<128xf32>
    %10 = vector.shape_cast %9 : vector<128xf32> to vector<1x1x128xf32>
    %11 = vector.broadcast %10 : vector<1x1x128xf32> to vector<16x16x128xf32>
    %12 = arith.addf %7, %11 : vector<16x16x128xf32>
    %cst = arith.constant 0.000000e+00 : f32
    %13 = vector.broadcast %cst : f32 to vector<16x16x128xf32>
    %14 = arith.maximumf %12, %13 : vector<16x16x128xf32>
    %cst_7 = arith.constant 0.000000e+00 : f32
    %15 = vector.broadcast %cst_7 : f32 to vector<18x18x128xf32>
    %c0_8 = arith.constant 0 : index
    %c0_9 = arith.constant 0 : index
    %c0_10 = arith.constant 0 : index
    %16 = vector.load %arg8[%c0_8, %c0_9, %c0_10] : memref<18x18x128xf32, #tpu.memory_space<vmem>>, vector<18x18x128xf32>
    tpu.vector_store %arg8[%c0_8, %c0_9, %c0_10], %15 {strides = array<i32>} : memref<18x18x128xf32, #tpu.memory_space<vmem>>, vector<18x18x128xf32>,
    %c1 = arith.constant 1 : index
    %c1_11 = arith.constant 1 : index
    %c0_12 = arith.constant 0 : index
    %17 = vector.load %arg8[%c1, %c1_11, %c0_12] : memref<18x18x128xf32, #tpu.memory_space<vmem>>, vector<16x16x128xf32>
    tpu.vector_store %arg8[%c1, %c1_11, %c0_12], %14 {strides = array<i32>} : memref<18x18x128xf32, #tpu.memory_space<vmem>>, vector<16x16x128xf32>,
    %c0_13 = arith.constant 0 : index
    %c0_14 = arith.constant 0 : index
    %c0_15 = arith.constant 0 : index
    %18 = vector.load %arg8[%c0_13, %c0_14, %c0_15] : memref<18x18x128xf32, #tpu.memory_space<vmem>>, vector<18x18x128xf32>
    %cst_16 = arith.constant 0.000000e+00 : f32
    %19 = vector.broadcast %cst_16 : f32 to vector<256x128xf32>
    %20 = vector.extract_strided_slice %18 {offsets = [0, 0, 0], sizes = [16, 16, 128], strides = [1, 1, 1]} : vector<18x18x128xf32> to vector<16x16x128xf32>
    %21 = vector.shape_cast %20 : vector<16x16x128xf32> to vector<256x128xf32>
    %22 = arith.truncf %21 : vector<256x128xf32> to vector<256x128xbf16>
    %c0_17 = arith.constant 0 : index
    %c0_18 = arith.constant 0 : index
    %c0_19 = arith.constant 0 : index
    %23 = vector.load %arg4[%c0_17, %c0_18, %c0_19] : memref<9x128x128xbf16, #tpu.memory_space<vmem>>, vector<1x128x128xbf16>
    %24 = vector.shape_cast %23 : vector<1x128x128xbf16> to vector<128x128xbf16>
    %cst_20 = arith.constant dense<0.000000e+00> : vector<256x128xf32>
    %25 = tpu.matmul %22, %24, %cst_20 {dimension_numbers = #tpu.dot_dimension_numbers<[1], [0], [0], [1], [0, 0, 1, 1], [], []>} : vector<256x128xbf16>, vector<128x128xbf16>, vector<256x128xf32> -> vector<256x128xf32>
    %26 = arith.addf %19, %25 : vector<256x128xf32>
    %27 = vector.extract_strided_slice %18 {offsets = [0, 1, 0], sizes = [16, 16, 128], strides = [1, 1, 1]} : vector<18x18x128xf32> to vector<16x16x128xf32>
    %28 = vector.shape_cast %27 : vector<16x16x128xf32> to vector<256x128xf32>
    %29 = arith.truncf %28 : vector<256x128xf32> to vector<256x128xbf16>
    %c1_21 = arith.constant 1 : index
    %c0_22 = arith.constant 0 : index
    %c0_23 = arith.constant 0 : index
    %30 = vector.load %arg4[%c1_21, %c0_22, %c0_23] : memref<9x128x128xbf16, #tpu.memory_space<vmem>>, vector<1x128x128xbf16>
    %31 = vector.shape_cast %30 : vector<1x128x128xbf16> to vector<128x128xbf16>
    %cst_24 = arith.constant dense<0.000000e+00> : vector<256x128xf32>
    %32 = tpu.matmul %29, %31, %cst_24 {dimension_numbers = #tpu.dot_dimension_numbers<[1], [0], [0], [1], [0, 0, 1, 1], [], []>} : vector<256x128xbf16>, vector<128x128xbf16>, vector<256x128xf32> -> vector<256x128xf32>
    %33 = arith.addf %26, %32 : vector<256x128xf32>
    %34 = vector.extract_strided_slice %18 {offsets = [0, 2, 0], sizes = [16, 16, 128], strides = [1, 1, 1]} : vector<18x18x128xf32> to vector<16x16x128xf32>
    %35 = vector.shape_cast %34 : vector<16x16x128xf32> to vector<256x128xf32>
    %36 = arith.truncf %35 : vector<256x128xf32> to vector<256x128xbf16>
    %c2 = arith.constant 2 : index
    %c0_25 = arith.constant 0 : index
    %c0_26 = arith.constant 0 : index
    %37 = vector.load %arg4[%c2, %c0_25, %c0_26] : memref<9x128x128xbf16, #tpu.memory_space<vmem>>, vector<1x128x128xbf16>
    %38 = vector.shape_cast %37 : vector<1x128x128xbf16> to vector<128x128xbf16>
    %cst_27 = arith.constant dense<0.000000e+00> : vector<256x128xf32>
    %39 = tpu.matmul %36, %38, %cst_27 {dimension_numbers = #tpu.dot_dimension_numbers<[1], [0], [0], [1], [0, 0, 1, 1], [], []>} : vector<256x128xbf16>, vector<128x128xbf16>, vector<256x128xf32> -> vector<256x128xf32>
    %40 = arith.addf %33, %39 : vector<256x128xf32>
    %41 = vector.extract_strided_slice %18 {offsets = [1, 0, 0], sizes = [16, 16, 128], strides = [1, 1, 1]} : vector<18x18x128xf32> to vector<16x16x128xf32>
    %42 = vector.shape_cast %41 : vector<16x16x128xf32> to vector<256x128xf32>
    %43 = arith.truncf %42 : vector<256x128xf32> to vector<256x128xbf16>
    %c3 = arith.constant 3 : index
    %c0_28 = arith.constant 0 : index
    %c0_29 = arith.constant 0 : index
    %44 = vector.load %arg4[%c3, %c0_28, %c0_29] : memref<9x128x128xbf16, #tpu.memory_space<vmem>>, vector<1x128x128xbf16>
    %45 = vector.shape_cast %44 : vector<1x128x128xbf16> to vector<128x128xbf16>
    %cst_30 = arith.constant dense<0.000000e+00> : vector<256x128xf32>
    %46 = tpu.matmul %43, %45, %cst_30 {dimension_numbers = #tpu.dot_dimension_numbers<[1], [0], [0], [1], [0, 0, 1, 1], [], []>} : vector<256x128xbf16>, vector<128x128xbf16>, vector<256x128xf32> -> vector<256x128xf32>
    %47 = arith.addf %40, %46 : vector<256x128xf32>
    %48 = vector.extract_strided_slice %18 {offsets = [1, 1, 0], sizes = [16, 16, 128], strides = [1, 1, 1]} : vector<18x18x128xf32> to vector<16x16x128xf32>
    %49 = vector.shape_cast %48 : vector<16x16x128xf32> to vector<256x128xf32>
    %50 = arith.truncf %49 : vector<256x128xf32> to vector<256x128xbf16>
    %c4 = arith.constant 4 : index
    %c0_31 = arith.constant 0 : index
    %c0_32 = arith.constant 0 : index
    %51 = vector.load %arg4[%c4, %c0_31, %c0_32] : memref<9x128x128xbf16, #tpu.memory_space<vmem>>, vector<1x128x128xbf16>
    %52 = vector.shape_cast %51 : vector<1x128x128xbf16> to vector<128x128xbf16>
    %cst_33 = arith.constant dense<0.000000e+00> : vector<256x128xf32>
    %53 = tpu.matmul %50, %52, %cst_33 {dimension_numbers = #tpu.dot_dimension_numbers<[1], [0], [0], [1], [0, 0, 1, 1], [], []>} : vector<256x128xbf16>, vector<128x128xbf16>, vector<256x128xf32> -> vector<256x128xf32>
    %54 = arith.addf %47, %53 : vector<256x128xf32>
    %55 = vector.extract_strided_slice %18 {offsets = [1, 2, 0], sizes = [16, 16, 128], strides = [1, 1, 1]} : vector<18x18x128xf32> to vector<16x16x128xf32>
    %56 = vector.shape_cast %55 : vector<16x16x128xf32> to vector<256x128xf32>
    %57 = arith.truncf %56 : vector<256x128xf32> to vector<256x128xbf16>
    %c5 = arith.constant 5 : index
    %c0_34 = arith.constant 0 : index
    %c0_35 = arith.constant 0 : index
    %58 = vector.load %arg4[%c5, %c0_34, %c0_35] : memref<9x128x128xbf16, #tpu.memory_space<vmem>>, vector<1x128x128xbf16>
    %59 = vector.shape_cast %58 : vector<1x128x128xbf16> to vector<128x128xbf16>
    %cst_36 = arith.constant dense<0.000000e+00> : vector<256x128xf32>
    %60 = tpu.matmul %57, %59, %cst_36 {dimension_numbers = #tpu.dot_dimension_numbers<[1], [0], [0], [1], [0, 0, 1, 1], [], []>} : vector<256x128xbf16>, vector<128x128xbf16>, vector<256x128xf32> -> vector<256x128xf32>
    %61 = arith.addf %54, %60 : vector<256x128xf32>
    %62 = vector.extract_strided_slice %18 {offsets = [2, 0, 0], sizes = [16, 16, 128], strides = [1, 1, 1]} : vector<18x18x128xf32> to vector<16x16x128xf32>
    %63 = vector.shape_cast %62 : vector<16x16x128xf32> to vector<256x128xf32>
    %64 = arith.truncf %63 : vector<256x128xf32> to vector<256x128xbf16>
    %c6 = arith.constant 6 : index
    %c0_37 = arith.constant 0 : index
    %c0_38 = arith.constant 0 : index
    %65 = vector.load %arg4[%c6, %c0_37, %c0_38] : memref<9x128x128xbf16, #tpu.memory_space<vmem>>, vector<1x128x128xbf16>
    %66 = vector.shape_cast %65 : vector<1x128x128xbf16> to vector<128x128xbf16>
    %cst_39 = arith.constant dense<0.000000e+00> : vector<256x128xf32>
    %67 = tpu.matmul %64, %66, %cst_39 {dimension_numbers = #tpu.dot_dimension_numbers<[1], [0], [0], [1], [0, 0, 1, 1], [], []>} : vector<256x128xbf16>, vector<128x128xbf16>, vector<256x128xf32> -> vector<256x128xf32>
    %68 = arith.addf %61, %67 : vector<256x128xf32>
    %69 = vector.extract_strided_slice %18 {offsets = [2, 1, 0], sizes = [16, 16, 128], strides = [1, 1, 1]} : vector<18x18x128xf32> to vector<16x16x128xf32>
    %70 = vector.shape_cast %69 : vector<16x16x128xf32> to vector<256x128xf32>
    %71 = arith.truncf %70 : vector<256x128xf32> to vector<256x128xbf16>
    %c7 = arith.constant 7 : index
    %c0_40 = arith.constant 0 : index
    %c0_41 = arith.constant 0 : index
    %72 = vector.load %arg4[%c7, %c0_40, %c0_41] : memref<9x128x128xbf16, #tpu.memory_space<vmem>>, vector<1x128x128xbf16>
    %73 = vector.shape_cast %72 : vector<1x128x128xbf16> to vector<128x128xbf16>
    %cst_42 = arith.constant dense<0.000000e+00> : vector<256x128xf32>
    %74 = tpu.matmul %71, %73, %cst_42 {dimension_numbers = #tpu.dot_dimension_numbers<[1], [0], [0], [1], [0, 0, 1, 1], [], []>} : vector<256x128xbf16>, vector<128x128xbf16>, vector<256x128xf32> -> vector<256x128xf32>
    %75 = arith.addf %68, %74 : vector<256x128xf32>
    %76 = vector.extract_strided_slice %18 {offsets = [2, 2, 0], sizes = [16, 16, 128], strides = [1, 1, 1]} : vector<18x18x128xf32> to vector<16x16x128xf32>
    %77 = vector.shape_cast %76 : vector<16x16x128xf32> to vector<256x128xf32>
    %78 = arith.truncf %77 : vector<256x128xf32> to vector<256x128xbf16>
    %c8 = arith.constant 8 : index
    %c0_43 = arith.constant 0 : index
    %c0_44 = arith.constant 0 : index
    %79 = vector.load %arg4[%c8, %c0_43, %c0_44] : memref<9x128x128xbf16, #tpu.memory_space<vmem>>, vector<1x128x128xbf16>
    %80 = vector.shape_cast %79 : vector<1x128x128xbf16> to vector<128x128xbf16>
    %cst_45 = arith.constant dense<0.000000e+00> : vector<256x128xf32>
    %81 = tpu.matmul %78, %80, %cst_45 {dimension_numbers = #tpu.dot_dimension_numbers<[1], [0], [0], [1], [0, 0, 1, 1], [], []>} : vector<256x128xbf16>, vector<128x128xbf16>, vector<256x128xf32> -> vector<256x128xf32>
    %82 = arith.addf %75, %81 : vector<256x128xf32>
    %83 = vector.shape_cast %82 : vector<256x128xf32> to vector<1x16x16x128xf32>
    %c0_46 = arith.constant 0 : index
    %c0_47 = arith.constant 0 : index
    %c0_48 = arith.constant 0 : index
    %c0_49 = arith.constant 0 : index
    %84 = vector.load %arg5[%c0_46, %c0_47, %c0_48, %c0_49] : memref<1x16x16x128xf32, #tpu.memory_space<vmem>>, vector<1x16x16x128xf32>
    tpu.vector_store %arg5[%c0_46, %c0_47, %c0_48, %c0_49], %83 {strides = array<i32>} : memref<1x16x16x128xf32, #tpu.memory_space<vmem>>, vector<1x16x16x128xf32>,
    %cst_50 = arith.constant dense<0.000000e+00> : vector<128xf32>
    %85 = vector.multi_reduction <add>, %82, %cst_50 [0] : vector<256x128xf32> to vector<128xf32>
    %86 = vector.shape_cast %85 : vector<128xf32> to vector<1x1x128xf32>
    %c0_51 = arith.constant 0 : index
    %c0_52 = arith.constant 0 : index
    %c0_53 = arith.constant 0 : index
    %87 = vector.load %arg6[%c0_51, %c0_52, %c0_53] : memref<1x1x128xf32, #tpu.memory_space<vmem>>, vector<1x1x128xf32>
    tpu.vector_store %arg6[%c0_51, %c0_52, %c0_53], %86 {strides = array<i32>} : memref<1x1x128xf32, #tpu.memory_space<vmem>>, vector<1x1x128xf32>,
    %88 = arith.mulf %82, %82 : vector<256x128xf32>
    %cst_54 = arith.constant dense<0.000000e+00> : vector<128xf32>
    %89 = vector.multi_reduction <add>, %88, %cst_54 [0] : vector<256x128xf32> to vector<128xf32>
    %90 = vector.shape_cast %89 : vector<128xf32> to vector<1x1x128xf32>
    %c0_55 = arith.constant 0 : index
    %c0_56 = arith.constant 0 : index
    %c0_57 = arith.constant 0 : index
    %91 = vector.load %arg7[%c0_55, %c0_56, %c0_57] : memref<1x1x128xf32, #tpu.memory_space<vmem>>, vector<1x1x128xf32>
    tpu.vector_store %arg7[%c0_55, %c0_56, %c0_57], %90 {strides = array<i32>} : memref<1x1x128xf32, #tpu.memory_space<vmem>>, vector<1x1x128xf32>,
    return
  }
  func.func @transform_0(%arg0: i32) -> (i32, i32, i32, i32) {
    %c0_i32 = arith.constant 0 : i32
    %c0_i32_0 = arith.constant 0 : i32
    %c0_i32_1 = arith.constant 0 : i32
    %c0_i32_2 = arith.constant 0 : i32
    return %arg0, %c0_i32, %c0_i32_0, %c0_i32_1 : i32, i32, i32, i32
  }
  func.func @transform_1(%arg0: i32) -> (i32, i32) {
    %c0_i32 = arith.constant 0 : i32
    %c0_i32_0 = arith.constant 0 : i32
    %c0_i32_1 = arith.constant 0 : i32
    return %c0_i32, %c0_i32_0 : i32, i32
  }
  func.func @transform_2(%arg0: i32) -> (i32, i32) {
    %c0_i32 = arith.constant 0 : i32
    %c0_i32_0 = arith.constant 0 : i32
    %c0_i32_1 = arith.constant 0 : i32
    return %c0_i32, %c0_i32_0 : i32, i32
  }
  func.func @transform_3(%arg0: i32) -> (i32, i32, i32) {
    %c0_i32 = arith.constant 0 : i32
    %c0_i32_0 = arith.constant 0 : i32
    %c0_i32_1 = arith.constant 0 : i32
    %c0_i32_2 = arith.constant 0 : i32
    return %c0_i32, %c0_i32_0, %c0_i32_1 : i32, i32, i32
  }
  func.func @transform_4(%arg0: i32) -> (i32, i32, i32, i32) {
    %c0_i32 = arith.constant 0 : i32
    %c0_i32_0 = arith.constant 0 : i32
    %c0_i32_1 = arith.constant 0 : i32
    %c0_i32_2 = arith.constant 0 : i32
    return %arg0, %c0_i32, %c0_i32_0, %c0_i32_1 : i32, i32, i32, i32
  }
  func.func @transform_5(%arg0: i32) -> (i32, i32, i32) {
    %c0_i32 = arith.constant 0 : i32
    %c0_i32_0 = arith.constant 0 : i32
    %c0_i32_1 = arith.constant 0 : i32
    return %arg0, %c0_i32, %c0_i32_0 : i32, i32, i32
  }
  func.func @transform_6(%arg0: i32) -> (i32, i32, i32) {
    %c0_i32 = arith.constant 0 : i32
    %c0_i32_0 = arith.constant 0 : i32
    %c0_i32_1 = arith.constant 0 : i32
    return %arg0, %c0_i32, %c0_i32_0 : i32, i32, i32
  }
}

module attributes {stable_mosaic.version = 11 : i64} {
  func.func @_fused_out_kernel(%arg0: i32, %arg1: memref<512x128xf32, #tpu.memory_space<vmem>>, %arg2: memref<1x128xf32, #tpu.memory_space<vmem>>, %arg3: memref<1x128xf32, #tpu.memory_space<vmem>>, %arg4: memref<512x128xf32, #tpu.memory_space<vmem>>, %arg5: memref<512x128xf32, #tpu.memory_space<vmem>>) attributes {dimension_semantics = [#tpu.dimension_semantics<parallel>], iteration_bounds = array<i64: 1>, scalar_prefetch = 0 : i64, scratch_operands = 0 : i64, tpu.core_type = #tpu.core_type<tc>, window_params = [{transform_indices = @transform_0, window_bounds = array<i64: 512, 128>}, {pipeline_mode = #tpu.pipeline_mode<synchronous>, transform_indices = @transform_1, window_bounds = array<i64: 1, 128>}, {pipeline_mode = #tpu.pipeline_mode<synchronous>, transform_indices = @transform_2, window_bounds = array<i64: 1, 128>}, {transform_indices = @transform_3, window_bounds = array<i64: 512, 128>}, {transform_indices = @transform_4, window_bounds = array<i64: 512, 128>}]} {
    %c0 = arith.constant 0 : index
    %c0_0 = arith.constant 0 : index
    %0 = vector.load %arg1[%c0, %c0_0] : memref<512x128xf32, #tpu.memory_space<vmem>>, vector<512x128xf32>
    %c0_1 = arith.constant 0 : index
    %c0_2 = arith.constant 0 : index
    %1 = vector.load %arg2[%c0_1, %c0_2] : memref<1x128xf32, #tpu.memory_space<vmem>>, vector<1x128xf32>
    %2 = vector.broadcast %1 : vector<1x128xf32> to vector<512x128xf32>
    %3 = arith.mulf %0, %2 : vector<512x128xf32>
    %c0_3 = arith.constant 0 : index
    %c0_4 = arith.constant 0 : index
    %4 = vector.load %arg3[%c0_3, %c0_4] : memref<1x128xf32, #tpu.memory_space<vmem>>, vector<1x128xf32>
    %5 = vector.broadcast %4 : vector<1x128xf32> to vector<512x128xf32>
    %6 = arith.addf %3, %5 : vector<512x128xf32>
    %c0_5 = arith.constant 0 : index
    %c0_6 = arith.constant 0 : index
    %7 = vector.load %arg4[%c0_5, %c0_6] : memref<512x128xf32, #tpu.memory_space<vmem>>, vector<512x128xf32>
    %8 = arith.addf %6, %7 : vector<512x128xf32>
    %cst = arith.constant 0.000000e+00 : f32
    %9 = vector.broadcast %cst : f32 to vector<512x128xf32>
    %10 = arith.maximumf %8, %9 : vector<512x128xf32>
    %c0_7 = arith.constant 0 : index
    %c0_8 = arith.constant 0 : index
    %11 = vector.load %arg5[%c0_7, %c0_8] : memref<512x128xf32, #tpu.memory_space<vmem>>, vector<512x128xf32>
    tpu.vector_store %arg5[%c0_7, %c0_8], %10 {strides = array<i32>} : memref<512x128xf32, #tpu.memory_space<vmem>>, vector<512x128xf32>,
    return
  }
  func.func @transform_0(%arg0: i32) -> (i32, i32) {
    %c0_i32 = arith.constant 0 : i32
    %c0_i32_0 = arith.constant 0 : i32
    return %arg0, %c0_i32 : i32, i32
  }
  func.func @transform_1(%arg0: i32) -> (i32, i32) {
    %c0_i32 = arith.constant 0 : i32
    %c0_i32_0 = arith.constant 0 : i32
    %c0_i32_1 = arith.constant 0 : i32
    return %c0_i32, %c0_i32_0 : i32, i32
  }
  func.func @transform_2(%arg0: i32) -> (i32, i32) {
    %c0_i32 = arith.constant 0 : i32
    %c0_i32_0 = arith.constant 0 : i32
    %c0_i32_1 = arith.constant 0 : i32
    return %c0_i32, %c0_i32_0 : i32, i32
  }
  func.func @transform_3(%arg0: i32) -> (i32, i32) {
    %c0_i32 = arith.constant 0 : i32
    %c0_i32_0 = arith.constant 0 : i32
    return %arg0, %c0_i32 : i32, i32
  }
  func.func @transform_4(%arg0: i32) -> (i32, i32) {
    %c0_i32 = arith.constant 0 : i32
    %c0_i32_0 = arith.constant 0 : i32
    return %arg0, %c0_i32 : i32, i32
  }
}

</mosaic_0001>

<llo_original>
// kernel: basicblock_forward.5
$region0: #{basicblock_forward.5}
  #allocation0 [shape = 'u32[]', space=smem, size = 0x4, offset = 0x4, fixed_abs, tag = 'smem constant byte address 0x4 - core index']
  #allocation1 [shape = 'u32[72,128]{1,0:T(1,128)}', space=vmem, size = 0x9000, scoped, tag = 'internal scratch']
  %s0 = inlined_call_operand.vmem [shape: f32[512,128], index: 0, kind: input, shape index: {}, may-alias: {0,4}]
  %s1 = inlined_call_operand.vmem [shape: f32[1,128], index: 1, kind: input, shape index: {}]
  %s2 = inlined_call_operand.vmem [shape: f32[1,128], index: 2, kind: input, shape index: {}]
  %s3 = inlined_call_operand.vmem [shape: f32[512,128], index: 3, kind: input, shape index: {}]
  %s4 = inlined_call_operand.vmem [shape: f32[512,128], index: 4, kind: output, shape index: {}, may-alias: {0,4}]
  %s5 = sld [smem:[#allocation0]]
  $region26: #{basicblock_forward.5} parent=0
    _
  %s7 = ssub.s32 1, %s5
  %s8 = scalar_select 0, %s7, %s5
  // Predicated region
  $region2: #{basicblock_forward.5} parent=0 // pred_check
    _
  $region3: #{basicblock_forward.5} parent=0 // pred_check_branch
    %10 = sbr.rel (0) target = $region5
  $region4: #{basicblock_forward.5} parent=0 // pred_region
    _
  $region5: #{basicblock_forward.5} parent=0 // pred_fallthru
    _
  // Predicated region
  $region6: #{basicblock_forward.5} parent=0 // pred_check
    _
  $region7: #{basicblock_forward.5} parent=0 // pred_check_branch
    %12 = sbr.rel (0) target = $region9
  $region8: #{basicblock_forward.5} parent=0 // pred_region
    _
  $region9: #{basicblock_forward.5} parent=0 // pred_fallthru
    _
  // Predicated region
  $region10: #{basicblock_forward.5} parent=0 // pred_check
    _
  $region11: #{basicblock_forward.5} parent=0 // pred_check_branch
    %14 = sbr.rel (0) target = $region13
  $region12: #{basicblock_forward.5} parent=0 // pred_region
    _
  $region13: #{basicblock_forward.5} parent=0 // pred_fallthru
    _
  // Predicated region
  $region14: #{basicblock_forward.5} parent=0 // pred_check
    _
  $region15: #{basicblock_forward.5} parent=0 // pred_check_branch
    %16 = sbr.rel (0) target = $region17
  $region16: #{basicblock_forward.5} parent=0 // pred_region
    _
  $region17: #{basicblock_forward.5} parent=0 // pred_fallthru
    _
  %v17 = vld [vmem:[%s0] sm:$0xff]
  %v18 = vld [vmem:[%s0 + $0x8] sm:$0xff]
  %v19 = vld [vmem:[%s0 + $0x10] sm:$0xff]
  %v20 = vld [vmem:[%s0 + $0x18] sm:$0xff]
  %v21 = vld [vmem:[%s0 + $0x20] sm:$0xff]
  %v22 = vld [vmem:[%s0 + $0x28] sm:$0xff]
  %v23 = vld [vmem:[%s0 + $0x30] sm:$0xff]
  %v24 = vld [vmem:[%s0 + $0x38] sm:$0xff]
  %v25 = vld [vmem:[%s0 + $0x40] sm:$0xff]
  %v26 = vld [vmem:[%s0 + $0x48] sm:$0xff]
  %v27 = vld [vmem:[%s0 + $0x50] sm:$0xff]
  %v28 = vld [vmem:[%s0 + $0x58] sm:$0xff]
  %v29 = vld [vmem:[%s0 + $0x60] sm:$0xff]
  %v30 = vld [vmem:[%s0 + $0x68] sm:$0xff]
  %v31 = vld [vmem:[%s0 + $0x70] sm:$0xff]
  %v32 = vld [vmem:[%s0 + $0x78] sm:$0xff]
  %v33 = vld [vmem:[%s0 + $0x80] sm:$0xff]
  %v34 = vld [vmem:[%s0 + $0x88] sm:$0xff]
  %v35 = vld [vmem:[%s0 + $0x90] sm:$0xff]
  %v36 = vld [vmem:[%s0 + $0x98] sm:$0xff]
  %v37 = vld [vmem:[%s0 + $0xa0] sm:$0xff]
  %v38 = vld [vmem:[%s0 + $0xa8] sm:$0xff]
  %v39 = vld [vmem:[%s0 + $0xb0] sm:$0xff]
  %v40 = vld [vmem:[%s0 + $0xb8] sm:$0xff]
  %v41 = vld [vmem:[%s0 + $0xc0] sm:$0xff]
  %v42 = vld [vmem:[%s0 + $0xc8] sm:$0xff]
  %v43 = vld [vmem:[%s0 + $0xd0] sm:$0xff]
  %v44 = vld [vmem:[%s0 + $0xd8] sm:$0xff]
  %v45 = vld [vmem:[%s0 + $0xe0] sm:$0xff]
  %v46 = vld [vmem:[%s0 + $0xe8] sm:$0xff]
  %v47 = vld [vmem:[%s0 + $0xf0] sm:$0xff]
  %v48 = vld [vmem:[%s0 + $0xf8] sm:$0xff]
  %v49 = vld [vmem:[%s0 + $0x100] sm:$0xff]
  %v50 = vld [vmem:[%s0 + $0x108] sm:$0xff]
  %v51 = vld [vmem:[%s0 + $0x110] sm:$0xff]
  %v52 = vld [vmem:[%s0 + $0x118] sm:$0xff]
  %v53 = vld [vmem:[%s0 + $0x120] sm:$0xff]
  %v54 = vld [vmem:[%s0 + $0x128] sm:$0xff]
  %v55 = vld [vmem:[%s0 + $0x130] sm:$0xff]
  %v56 = vld [vmem:[%s0 + $0x138] sm:$0xff]
  %v57 = vld [vmem:[%s0 + $0x140] sm:$0xff]
  %v58 = vld [vmem:[%s0 + $0x148] sm:$0xff]
  %v59 = vld [vmem:[%s0 + $0x150] sm:$0xff]
  %v60 = vld [vmem:[%s0 + $0x158] sm:$0xff]
  %v61 = vld [vmem:[%s0 + $0x160] sm:$0xff]
  %v62 = vld [vmem:[%s0 + $0x168] sm:$0xff]
  %v63 = vld [vmem:[%s0 + $0x170] sm:$0xff]
  %v64 = vld [vmem:[%s0 + $0x178] sm:$0xff]
  %v65 = vld [vmem:[%s0 + $0x180] sm:$0xff]
  %v66 = vld [vmem:[%s0 + $0x188] sm:$0xff]
  %v67 = vld [vmem:[%s0 + $0x190] sm:$0xff]
  %v68 = vld [vmem:[%s0 + $0x198] sm:$0xff]
  %v69 = vld [vmem:[%s0 + $0x1a0] sm:$0xff]
  %v70 = vld [vmem:[%s0 + $0x1a8] sm:$0xff]
  %v71 = vld [vmem:[%s0 + $0x1b0] sm:$0xff]
  %v72 = vld [vmem:[%s0 + $0x1b8] sm:$0xff]
  %v73 = vld [vmem:[%s0 + $0x1c0] sm:$0xff]
  %v74 = vld [vmem:[%s0 + $0x1c8] sm:$0xff]
  %v75 = vld [vmem:[%s0 + $0x1d0] sm:$0xff]
  %v76 = vld [vmem:[%s0 + $0x1d8] sm:$0xff]
  %v77 = vld [vmem:[%s0 + $0x1e0] sm:$0xff]
  %v78 = vld [vmem:[%s0 + $0x1e8] sm:$0xff]
  %v79 = vld [vmem:[%s0 + $0x1f0] sm:$0xff]
  %v80 = vld [vmem:[%s0 + $0x1f8] sm:$0xff]
  %v81 = vld [vmem:[%s1] sm:$0x1]
  %v83 = vperm.slane %v81, 0
  %v85 = vmul.f32 %v17, %v83
  %v86 = vmul.f32 %v18, %v83
  %v87 = vmul.f32 %v19, %v83
  %v88 = vmul.f32 %v20, %v83
  %v89 = vmul.f32 %v21, %v83
  %v90 = vmul.f32 %v22, %v83
  %v91 = vmul.f32 %v23, %v83
  %v92 = vmul.f32 %v24, %v83
  %v93 = vmul.f32 %v25, %v83
  %v94 = vmul.f32 %v26, %v83
  %v95 = vmul.f32 %v27, %v83
  %v96 = vmul.f32 %v28, %v83
  %v97 = vmul.f32 %v29, %v83
  %v98 = vmul.f32 %v30, %v83
  %v99 = vmul.f32 %v31, %v83
  %v100 = vmul.f32 %v32, %v83
  %v101 = vmul.f32 %v33, %v83
  %v102 = vmul.f32 %v34, %v83
  %v103 = vmul.f32 %v35, %v83
  %v104 = vmul.f32 %v36, %v83
  %v105 = vmul.f32 %v37, %v83
  %v106 = vmul.f32 %v38, %v83
  %v107 = vmul.f32 %v39, %v83
  %v108 = vmul.f32 %v40, %v83
  %v109 = vmul.f32 %v41, %v83
  %v110 = vmul.f32 %v42, %v83
  %v111 = vmul.f32 %v43, %v83
  %v112 = vmul.f32 %v44, %v83
  %v113 = vmul.f32 %v45, %v83
  %v114 = vmul.f32 %v46, %v83
  %v115 = vmul.f32 %v47, %v83
  %v116 = vmul.f32 %v48, %v83
  %v117 = vmul.f32 %v49, %v83
  %v118 = vmul.f32 %v50, %v83
  %v119 = vmul.f32 %v51, %v83
  %v120 = vmul.f32 %v52, %v83
  %v121 = vmul.f32 %v53, %v83
  %v122 = vmul.f32 %v54, %v83
  %v123 = vmul.f32 %v55, %v83
  %v124 = vmul.f32 %v56, %v83
  %v125 = vmul.f32 %v57, %v83
  %v126 = vmul.f32 %v58, %v83
  %v127 = vmul.f32 %v59, %v83
  %v128 = vmul.f32 %v60, %v83
  %v129 = vmul.f32 %v61, %v83
  %v130 = vmul.f32 %v62, %v83
  %v131 = vmul.f32 %v63, %v83
  %v132 = vmul.f32 %v64, %v83
  %v133 = vmul.f32 %v65, %v83
  %v134 = vmul.f32 %v66, %v83
  %v135 = vmul.f32 %v67, %v83
  %v136 = vmul.f32 %v68, %v83
  %v137 = vmul.f32 %v69, %v83
  %v138 = vmul.f32 %v70, %v83
  %v139 = vmul.f32 %v71, %v83
  %v140 = vmul.f32 %v72, %v83
  %v141 = vmul.f32 %v73, %v83
  %v142 = vmul.f32 %v74, %v83
  %v143 = vmul.f32 %v75, %v83
  %v144 = vmul.f32 %v76, %v83
  %v145 = vmul.f32 %v77, %v83
  %v146 = vmul.f32 %v78, %v83
  %v147 = vmul.f32 %v79, %v83
  %v148 = vmul.f32 %v80, %v83
  %v149 = vld [vmem:[%s2] sm:$0x1]
  %v151 = vperm.slane %v149, 0
  %v153 = vadd.f32 %v85, %v151
  %v154 = vadd.f32 %v86, %v151
  %v155 = vadd.f32 %v87, %v151
  %v156 = vadd.f32 %v88, %v151
  %v157 = vadd.f32 %v89, %v151
  %v158 = vadd.f32 %v90, %v151
  %v159 = vadd.f32 %v91, %v151
  %v160 = vadd.f32 %v92, %v151
  %v161 = vadd.f32 %v93, %v151
  %v162 = vadd.f32 %v94, %v151
  %v163 = vadd.f32 %v95, %v151
  %v164 = vadd.f32 %v96, %v151
  %v165 = vadd.f32 %v97, %v151
  %v166 = vadd.f32 %v98, %v151
  %v167 = vadd.f32 %v99, %v151
  %v168 = vadd.f32 %v100, %v151
  %v169 = vadd.f32 %v101, %v151
  %v170 = vadd.f32 %v102, %v151
  %v171 = vadd.f32 %v103, %v151
  %v172 = vadd.f32 %v104, %v151
  %v173 = vadd.f32 %v105, %v151
  %v174 = vadd.f32 %v106, %v151
  %v175 = vadd.f32 %v107, %v151
  %v176 = vadd.f32 %v108, %v151
  %v177 = vadd.f32 %v109, %v151
  %v178 = vadd.f32 %v110, %v151
  %v179 = vadd.f32 %v111, %v151
  %v180 = vadd.f32 %v112, %v151
  %v181 = vadd.f32 %v113, %v151
  %v182 = vadd.f32 %v114, %v151
  %v183 = vadd.f32 %v115, %v151
  %v184 = vadd.f32 %v116, %v151
  %v185 = vadd.f32 %v117, %v151
  %v186 = vadd.f32 %v118, %v151
  %v187 = vadd.f32 %v119, %v151
  %v188 = vadd.f32 %v120, %v151
  %v189 = vadd.f32 %v121, %v151
  %v190 = vadd.f32 %v122, %v151
  %v191 = vadd.f32 %v123, %v151
  %v192 = vadd.f32 %v124, %v151
  %v193 = vadd.f32 %v125, %v151
  %v194 = vadd.f32 %v126, %v151
  %v195 = vadd.f32 %v127, %v151
  %v196 = vadd.f32 %v128, %v151
  %v197 = vadd.f32 %v129, %v151
  %v198 = vadd.f32 %v130, %v151
  %v199 = vadd.f32 %v131, %v151
  %v200 = vadd.f32 %v132, %v151
  %v201 = vadd.f32 %v133, %v151
  %v202 = vadd.f32 %v134, %v151
  %v203 = vadd.f32 %v135, %v151
  %v204 = vadd.f32 %v136, %v151
  %v205 = vadd.f32 %v137, %v151
  %v206 = vadd.f32 %v138, %v151
  %v207 = vadd.f32 %v139, %v151
  %v208 = vadd.f32 %v140, %v151
  %v209 = vadd.f32 %v141, %v151
  %v210 = vadd.f32 %v142, %v151
  %v211 = vadd.f32 %v143, %v151
  %v212 = vadd.f32 %v144, %v151
  %v213 = vadd.f32 %v145, %v151
  %v214 = vadd.f32 %v146, %v151
  %v215 = vadd.f32 %v147, %v151
  %v216 = vadd.f32 %v148, %v151
  %v217 = vld [vmem:[%s3] sm:$0xff]
  %v218 = vld [vmem:[%s3 + $0x8] sm:$0xff]
  %v219 = vld [vmem:[%s3 + $0x10] sm:$0xff]
  %v220 = vld [vmem:[%s3 + $0x18] sm:$0xff]
  %v221 = vld [vmem:[%s3 + $0x20] sm:$0xff]
  %v222 = vld [vmem:[%s3 + $0x28] sm:$0xff]
  %v223 = vld [vmem:[%s3 + $0x30] sm:$0xff]
  %v224 = vld [vmem:[%s3 + $0x38] sm:$0xff]
  %v225 = vld [vmem:[%s3 + $0x40] sm:$0xff]
  %v226 = vld [vmem:[%s3 + $0x48] sm:$0xff]
  %v227 = vld [vmem:[%s3 + $0x50] sm:$0xff]
  %v228 = vld [vmem:[%s3 + $0x58] sm:$0xff]
  %v229 = vld [vmem:[%s3 + $0x60] sm:$0xff]
  %v230 = vld [vmem:[%s3 + $0x68] sm:$0xff]
  %v231 = vld [vmem:[%s3 + $0x70] sm:$0xff]
  %v232 = vld [vmem:[%s3 + $0x78] sm:$0xff]
  %v233 = vld [vmem:[%s3 + $0x80] sm:$0xff]
  %v234 = vld [vmem:[%s3 + $0x88] sm:$0xff]
  %v235 = vld [vmem:[%s3 + $0x90] sm:$0xff]
  %v236 = vld [vmem:[%s3 + $0x98] sm:$0xff]
  %v237 = vld [vmem:[%s3 + $0xa0] sm:$0xff]
  %v238 = vld [vmem:[%s3 + $0xa8] sm:$0xff]
  %v239 = vld [vmem:[%s3 + $0xb0] sm:$0xff]
  %v240 = vld [vmem:[%s3 + $0xb8] sm:$0xff]
  %v241 = vld [vmem:[%s3 + $0xc0] sm:$0xff]
  %v242 = vld [vmem:[%s3 + $0xc8] sm:$0xff]
  %v243 = vld [vmem:[%s3 + $0xd0] sm:$0xff]
  %v244 = vld [vmem:[%s3 + $0xd8] sm:$0xff]
  %v245 = vld [vmem:[%s3 + $0xe0] sm:$0xff]
  %v246 = vld [vmem:[%s3 + $0xe8] sm:$0xff]
  %v247 = vld [vmem:[%s3 + $0xf0] sm:$0xff]
  %v248 = vld [vmem:[%s3 + $0xf8] sm:$0xff]
  %v249 = vld [vmem:[%s3 + $0x100] sm:$0xff]
  %v250 = vld [vmem:[%s3 + $0x108] sm:$0xff]
  %v251 = vld [vmem:[%s3 + $0x110] sm:$0xff]
  %v252 = vld [vmem:[%s3 + $0x118] sm:$0xff]
  %v253 = vld [vmem:[%s3 + $0x120] sm:$0xff]
  %v254 = vld [vmem:[%s3 + $0x128] sm:$0xff]
  %v255 = vld [vmem:[%s3 + $0x130] sm:$0xff]
  %v256 = vld [vmem:[%s3 + $0x138] sm:$0xff]
  %v257 = vld [vmem:[%s3 + $0x140] sm:$0xff]
  %v258 = vld [vmem:[%s3 + $0x148] sm:$0xff]
  %v259 = vld [vmem:[%s3 + $0x150] sm:$0xff]
  %v260 = vld [vmem:[%s3 + $0x158] sm:$0xff]
  %v261 = vld [vmem:[%s3 + $0x160] sm:$0xff]
  %v262 = vld [vmem:[%s3 + $0x168] sm:$0xff]
  %v263 = vld [vmem:[%s3 + $0x170] sm:$0xff]
  %v264 = vld [vmem:[%s3 + $0x178] sm:$0xff]
  %v265 = vld [vmem:[%s3 + $0x180] sm:$0xff]
  %v266 = vld [vmem:[%s3 + $0x188] sm:$0xff]
  %v267 = vld [vmem:[%s3 + $0x190] sm:$0xff]
  %v268 = vld [vmem:[%s3 + $0x198] sm:$0xff]
  %v269 = vld [vmem:[%s3 + $0x1a0] sm:$0xff]
  %v270 = vld [vmem:[%s3 + $0x1a8] sm:$0xff]
  %v271 = vld [vmem:[%s3 + $0x1b0] sm:$0xff]
  %v272 = vld [vmem:[%s3 + $0x1b8] sm:$0xff]
  %v273 = vld [vmem:[%s3 + $0x1c0] sm:$0xff]
  %v274 = vld [vmem:[%s3 + $0x1c8] sm:$0xff]
  %v275 = vld [vmem:[%s3 + $0x1d0] sm:$0xff]
  %v276 = vld [vmem:[%s3 + $0x1d8] sm:$0xff]
  %v277 = vld [vmem:[%s3 + $0x1e0] sm:$0xff]
  %v278 = vld [vmem:[%s3 + $0x1e8] sm:$0xff]
  %v279 = vld [vmem:[%s3 + $0x1f0] sm:$0xff]
  %v280 = vld [vmem:[%s3 + $0x1f8] sm:$0xff]
  %v281 = vadd.f32 %v153, %v217
  %v282 = vadd.f32 %v154, %v218
  %v283 = vadd.f32 %v155, %v219
  %v284 = vadd.f32 %v156, %v220
  %v285 = vadd.f32 %v157, %v221
  %v286 = vadd.f32 %v158, %v222
  %v287 = vadd.f32 %v159, %v223
  %v288 = vadd.f32 %v160, %v224
  %v289 = vadd.f32 %v161, %v225
  %v290 = vadd.f32 %v162, %v226
  %v291 = vadd.f32 %v163, %v227
  %v292 = vadd.f32 %v164, %v228
  %v293 = vadd.f32 %v165, %v229
  %v294 = vadd.f32 %v166, %v230
  %v295 = vadd.f32 %v167, %v231
  %v296 = vadd.f32 %v168, %v232
  %v297 = vadd.f32 %v169, %v233
  %v298 = vadd.f32 %v170, %v234
  %v299 = vadd.f32 %v171, %v235
  %v300 = vadd.f32 %v172, %v236
  %v301 = vadd.f32 %v173, %v237
  %v302 = vadd.f32 %v174, %v238
  %v303 = vadd.f32 %v175, %v239
  %v304 = vadd.f32 %v176, %v240
  %v305 = vadd.f32 %v177, %v241
  %v306 = vadd.f32 %v178, %v242
  %v307 = vadd.f32 %v179, %v243
  %v308 = vadd.f32 %v180, %v244
  %v309 = vadd.f32 %v181, %v245
  %v310 = vadd.f32 %v182, %v246
  %v311 = vadd.f32 %v183, %v247
  %v312 = vadd.f32 %v184, %v248
  %v313 = vadd.f32 %v185, %v249
  %v314 = vadd.f32 %v186, %v250
  %v315 = vadd.f32 %v187, %v251
  %v316 = vadd.f32 %v188, %v252
  %v317 = vadd.f32 %v189, %v253
  %v318 = vadd.f32 %v190, %v254
  %v319 = vadd.f32 %v191, %v255
  %v320 = vadd.f32 %v192, %v256
  %v321 = vadd.f32 %v193, %v257
  %v322 = vadd.f32 %v194, %v258
  %v323 = vadd.f32 %v195, %v259
  %v324 = vadd.f32 %v196, %v260
  %v325 = vadd.f32 %v197, %v261
  %v326 = vadd.f32 %v198, %v262
  %v327 = vadd.f32 %v199, %v263
  %v328 = vadd.f32 %v200, %v264
  %v329 = vadd.f32 %v201, %v265
  %v330 = vadd.f32 %v202, %v266
  %v331 = vadd.f32 %v203, %v267
  %v332 = vadd.f32 %v204, %v268
  %v333 = vadd.f32 %v205, %v269
  %v334 = vadd.f32 %v206, %v270
  %v335 = vadd.f32 %v207, %v271
  %v336 = vadd.f32 %v208, %v272
  %v337 = vadd.f32 %v209, %v273
  %v338 = vadd.f32 %v210, %v274
  %v339 = vadd.f32 %v211, %v275
  %v340 = vadd.f32 %v212, %v276
  %v341 = vadd.f32 %v213, %v277
  %v342 = vadd.f32 %v214, %v278
  %v343 = vadd.f32 %v215, %v279
  %v344 = vadd.f32 %v216, %v280
  %v345 = vmax.f32 %v281, 0.0
  %v346 = vmax.f32 %v282, 0.0
  %v347 = vmax.f32 %v283, 0.0
  %v348 = vmax.f32 %v284, 0.0
  %v349 = vmax.f32 %v285, 0.0
  %v350 = vmax.f32 %v286, 0.0
  %v351 = vmax.f32 %v287, 0.0
  %v352 = vmax.f32 %v288, 0.0
  %v353 = vmax.f32 %v289, 0.0
  %v354 = vmax.f32 %v290, 0.0
  %v355 = vmax.f32 %v291, 0.0
  %v356 = vmax.f32 %v292, 0.0
  %v357 = vmax.f32 %v293, 0.0
  %v358 = vmax.f32 %v294, 0.0
  %v359 = vmax.f32 %v295, 0.0
  %v360 = vmax.f32 %v296, 0.0
  %v361 = vmax.f32 %v297, 0.0
  %v362 = vmax.f32 %v298, 0.0
  %v363 = vmax.f32 %v299, 0.0
  %v364 = vmax.f32 %v300, 0.0
  %v365 = vmax.f32 %v301, 0.0
  %v366 = vmax.f32 %v302, 0.0
  %v367 = vmax.f32 %v303, 0.0
  %v368 = vmax.f32 %v304, 0.0
  %v369 = vmax.f32 %v305, 0.0
  %v370 = vmax.f32 %v306, 0.0
  %v371 = vmax.f32 %v307, 0.0
  %v372 = vmax.f32 %v308, 0.0
  %v373 = vmax.f32 %v309, 0.0
  %v374 = vmax.f32 %v310, 0.0
  %v375 = vmax.f32 %v311, 0.0
  %v376 = vmax.f32 %v312, 0.0
  %v377 = vmax.f32 %v313, 0.0
  %v378 = vmax.f32 %v314, 0.0
  %v379 = vmax.f32 %v315, 0.0
  %v380 = vmax.f32 %v316, 0.0
  %v381 = vmax.f32 %v317, 0.0
  %v382 = vmax.f32 %v318, 0.0
  %v383 = vmax.f32 %v319, 0.0
  %v384 = vmax.f32 %v320, 0.0
  %v385 = vmax.f32 %v321, 0.0
  %v386 = vmax.f32 %v322, 0.0
  %v387 = vmax.f32 %v323, 0.0
  %v388 = vmax.f32 %v324, 0.0
  %v389 = vmax.f32 %v325, 0.0
  %v390 = vmax.f32 %v326, 0.0
  %v391 = vmax.f32 %v327, 0.0
  %v392 = vmax.f32 %v328, 0.0
  %v393 = vmax.f32 %v329, 0.0
  %v394 = vmax.f32 %v330, 0.0
  %v395 = vmax.f32 %v331, 0.0
  %v396 = vmax.f32 %v332, 0.0
  %v397 = vmax.f32 %v333, 0.0
  %v398 = vmax.f32 %v334, 0.0
  %v399 = vmax.f32 %v335, 0.0
  %v400 = vmax.f32 %v336, 0.0
  %v401 = vmax.f32 %v337, 0.0
  %v402 = vmax.f32 %v338, 0.0
  %v403 = vmax.f32 %v339, 0.0
  %v404 = vmax.f32 %v340, 0.0
  %v405 = vmax.f32 %v341, 0.0
  %v406 = vmax.f32 %v342, 0.0
  %v407 = vmax.f32 %v343, 0.0
  %v408 = vmax.f32 %v344, 0.0
  %409 = vst [vmem:[%s4] sm:$0xff] %v345
  %410 = vst [vmem:[%s4 + $0x8] sm:$0xff] %v346
  %411 = vst [vmem:[%s4 + $0x10] sm:$0xff] %v347
  %412 = vst [vmem:[%s4 + $0x18] sm:$0xff] %v348
  %413 = vst [vmem:[%s4 + $0x20] sm:$0xff] %v349
  %414 = vst [vmem:[%s4 + $0x28] sm:$0xff] %v350
  %415 = vst [vmem:[%s4 + $0x30] sm:$0xff] %v351
  %416 = vst [vmem:[%s4 + $0x38] sm:$0xff] %v352
  %417 = vst [vmem:[%s4 + $0x40] sm:$0xff] %v353
  %418 = vst [vmem:[%s4 + $0x48] sm:$0xff] %v354
  %419 = vst [vmem:[%s4 + $0x50] sm:$0xff] %v355
  %420 = vst [vmem:[%s4 + $0x58] sm:$0xff] %v356
  %421 = vst [vmem:[%s4 + $0x60] sm:$0xff] %v357
  %422 = vst [vmem:[%s4 + $0x68] sm:$0xff] %v358
  %423 = vst [vmem:[%s4 + $0x70] sm:$0xff] %v359
  %424 = vst [vmem:[%s4 + $0x78] sm:$0xff] %v360
  %425 = vst [vmem:[%s4 + $0x80] sm:$0xff] %v361
  %426 = vst [vmem:[%s4 + $0x88] sm:$0xff] %v362
  %427 = vst [vmem:[%s4 + $0x90] sm:$0xff] %v363
  %428 = vst [vmem:[%s4 + $0x98] sm:$0xff] %v364
  %429 = vst [vmem:[%s4 + $0xa0] sm:$0xff] %v365
  %430 = vst [vmem:[%s4 + $0xa8] sm:$0xff] %v366
  %431 = vst [vmem:[%s4 + $0xb0] sm:$0xff] %v367
  %432 = vst [vmem:[%s4 + $0xb8] sm:$0xff] %v368
  %433 = vst [vmem:[%s4 + $0xc0] sm:$0xff] %v369
  %434 = vst [vmem:[%s4 + $0xc8] sm:$0xff] %v370
  %435 = vst [vmem:[%s4 + $0xd0] sm:$0xff] %v371
  %436 = vst [vmem:[%s4 + $0xd8] sm:$0xff] %v372
  %437 = vst [vmem:[%s4 + $0xe0] sm:$0xff] %v373
  %438 = vst [vmem:[%s4 + $0xe8] sm:$0xff] %v374
  %439 = vst [vmem:[%s4 + $0xf0] sm:$0xff] %v375
  %440 = vst [vmem:[%s4 + $0xf8] sm:$0xff] %v376
  %441 = vst [vmem:[%s4 + $0x100] sm:$0xff] %v377
  %442 = vst [vmem:[%s4 + $0x108] sm:$0xff] %v378
  %443 = vst [vmem:[%s4 + $0x110] sm:$0xff] %v379
  %444 = vst [vmem:[%s4 + $0x118] sm:$0xff] %v380
  %445 = vst [vmem:[%s4 + $0x120] sm:$0xff] %v381
  %446 = vst [vmem:[%s4 + $0x128] sm:$0xff] %v382
  %447 = vst [vmem:[%s4 + $0x130] sm:$0xff] %v383
  %448 = vst [vmem:[%s4 + $0x138] sm:$0xff] %v384
  %449 = vst [vmem:[%s4 + $0x140] sm:$0xff] %v385
  %450 = vst [vmem:[%s4 + $0x148] sm:$0xff] %v386
  %451 = vst [vmem:[%s4 + $0x150] sm:$0xff] %v387
  %452 = vst [vmem:[%s4 + $0x158] sm:$0xff] %v388
  %453 = vst [vmem:[%s4 + $0x160] sm:$0xff] %v389
  %454 = vst [vmem:[%s4 + $0x168] sm:$0xff] %v390
  %455 = vst [vmem:[%s4 + $0x170] sm:$0xff] %v391
  %456 = vst [vmem:[%s4 + $0x178] sm:$0xff] %v392
  %457 = vst [vmem:[%s4 + $0x180] sm:$0xff] %v393
  %458 = vst [vmem:[%s4 + $0x188] sm:$0xff] %v394
  %459 = vst [vmem:[%s4 + $0x190] sm:$0xff] %v395
  %460 = vst [vmem:[%s4 + $0x198] sm:$0xff] %v396
  %461 = vst [vmem:[%s4 + $0x1a0] sm:$0xff] %v397
  %462 = vst [vmem:[%s4 + $0x1a8] sm:$0xff] %v398
  %463 = vst [vmem:[%s4 + $0x1b0] sm:$0xff] %v399
  %464 = vst [vmem:[%s4 + $0x1b8] sm:$0xff] %v400
  %465 = vst [vmem:[%s4 + $0x1c0] sm:$0xff] %v401
  %466 = vst [vmem:[%s4 + $0x1c8] sm:$0xff] %v402
  %467 = vst [vmem:[%s4 + $0x1d0] sm:$0xff] %v403
  %468 = vst [vmem:[%s4 + $0x1d8] sm:$0xff] %v404
  %469 = vst [vmem:[%s4 + $0x1e0] sm:$0xff] %v405
  %470 = vst [vmem:[%s4 + $0x1e8] sm:$0xff] %v406
  %471 = vst [vmem:[%s4 + $0x1f0] sm:$0xff] %v407
  %472 = vst [vmem:[%s4 + $0x1f8] sm:$0xff] %v408
  // Predicated region
  $region18: #{basicblock_forward.5} parent=0 // pred_check
    _
  $region19: #{basicblock_forward.5} parent=0 // pred_check_branch
    %474 = sbr.rel (0) target = $region21
  $region20: #{basicblock_forward.5} parent=0 // pred_region
    _
  $region21: #{basicblock_forward.5} parent=0 // pred_fallthru
    _
  // Predicated region
  $region22: #{basicblock_forward.5} parent=0 // pred_check
    _
  $region23: #{basicblock_forward.5} parent=0 // pred_check_branch
    %476 = sbr.rel (0) target = $region25
  $region24: #{basicblock_forward.5} parent=0 // pred_region
    _
  $region25: #{basicblock_forward.5} parent=0 // pred_fallthru
    _

// kernel: basicblock_forward.3
$region0: #{basicblock_forward.3}
  #allocation0 [shape = 'u32[]', space=smem, size = 0x4, offset = 0x4, fixed_abs, tag = 'smem constant byte address 0x4 - core index']
  #allocation1 [shape = 'u32[72,128]{1,0:T(1,128)}', space=vmem, size = 0x9000, scoped, tag = 'internal scratch']
  #allocation2 [shape = 'f32[18,18,128]{2,1,0:T(8,128)}', space=vmem, size = 0x36000, scoped, tag = 'scratch operand']
  %s0 = inlined_call_operand.vmem [shape: bf16[2,16,16,128], index: 0, kind: input, shape index: {}]
  %s1 = inlined_call_operand.vmem [shape: bf16[9,128,128], index: 1, kind: input, shape index: {}]
  %s2 = inlined_call_operand.vmem [shape: bf16[2,16,16,128], index: 2, kind: output, shape index: {0}]
  %s3 = inlined_call_operand.vmem [shape: f32[2,1,128], index: 3, kind: output, shape index: {1}]
  %s4 = inlined_call_operand.vmem [shape: f32[2,1,128], index: 4, kind: output, shape index: {2}]
  %5 = xla_tuple %s2, %s3, %s4
  %s6 = sld [smem:[#allocation0]]
  $region57: #{basicblock_forward.3} parent=0
    _
  %s8 = ssub.s32 1, %s6
  %s9 = scalar_select 0, %s8, %s6
  loop: start=0, step=1, limit=4
  $region2: #{basicblock_forward.3} parent=0 // loop_pre_header
    _
  $region3: #{basicblock_forward.3} parent=0 // loop_header
    %s11 = sphi 0, %s15
    %p12 = scmp.ge.s32.totalorder %s11, 4
    %s21 = sphi 0, %s23
    %s24 = sphi 0, %s21
    %s25 = sphi 0, %s24
    %s41 = sphi 0, %s25
    %s45 = sphi 0, %s45
    %s47 = sphi 0, %s45
    %s48 = sphi 0, %s47
    %s62 = sphi 0, %s48
    %s68 = sphi 0, %s70
    %s71 = sphi 0, %s68
    %s72 = sphi 0, %s71
    %s88 = sphi 0, %s72
    %s94 = sphi 0, %s96
    %s97 = sphi 0, %s94
    %s98 = sphi 0, %s97
    %s114 = sphi 0, %s98
    %s120 = sphi 0, %s122
    %s123 = sphi 0, %s120
    %s124 = sphi 0, %s123
    %s140 = sphi 0, %s124
  $region4: #{basicblock_forward.3} parent=0 // loop_header_branch
    %14 = sbr.rel (%p12) target = $region8
  $region5: #{basicblock_forward.3} parent=0 // loop_body
    %s16 = ssub.s32 %s11, 1
    %s17 = ssub.s32 %s11, 2
    %s18 = sadd.s32 %s11, 1
    %s19 = ssub.s32 %s11, %s18
    %p20 = scmp.eq.s32.totalorder %s19, 0
    %s22 = sadd.s32 %s21, 1
    %s23 = scalar_select %p20, %s21, %s22
    %p26 = pneg %p20
    %p27 = scmp.eq.s32.totalorder %s11, 1
    %p28 = por %p26, %p27
    %p29 = scmp.ne.s32.totalorder %s21, %s24
    %p30 = scmp.eq.s32.totalorder %s11, 0
    %p31 = por %p29, %p30
    %p32 = scmp.ne.s32.totalorder %s21, %s24
    %p33 = scmp.eq.s32.totalorder %s16, 1
    %p34 = por %p32, %p33
    %p35 = scmp.ne.s32.totalorder %s24, %s25
    %p36 = scmp.eq.s32.totalorder %s16, 0
    %p37 = por %p35, %p36
    %p38 = scmp.ne.s32.totalorder %s24, %s25
    %p39 = scmp.eq.s32.totalorder %s17, 1
    %p40 = por %p38, %p39
    %p42 = scmp.ne.s32.totalorder %s25, %s41
    %p43 = scmp.eq.s32.totalorder %s17, 0
    %p44 = por %p42, %p43
    %s46 = sadd.s32 %s45, 1
    %p49 = scmp.eq.s32.totalorder %s11, 1
    %p50 = scmp.ne.s32.totalorder %s45, %s47
    %p51 = scmp.eq.s32.totalorder %s11, 0
    %p52 = por %p50, %p51
    %p53 = scmp.ne.s32.totalorder %s45, %s47
    %p54 = scmp.eq.s32.totalorder %s16, 1
    %p55 = por %p53, %p54
    %p56 = scmp.ne.s32.totalorder %s47, %s48
    %p57 = scmp.eq.s32.totalorder %s16, 0
    %p58 = por %p56, %p57
    %p59 = scmp.ne.s32.totalorder %s47, %s48
    %p60 = scmp.eq.s32.totalorder %s17, 1
    %p61 = por %p59, %p60
    %p63 = scmp.ne.s32.totalorder %s48, %s62
    %p64 = scmp.eq.s32.totalorder %s17, 0
    %p65 = por %p63, %p64
    %s66 = ssub.s32 %s11, %s18
    %p67 = scmp.eq.s32.totalorder %s66, 0
    %s69 = sadd.s32 %s68, 1
    %s70 = scalar_select %p67, %s68, %s69
    %p73 = pneg %p67
    %p74 = scmp.eq.s32.totalorder %s11, 1
    %p75 = por %p73, %p74
    %p76 = scmp.ne.s32.totalorder %s68, %s71
    %p77 = scmp.eq.s32.totalorder %s11, 0
    %p78 = por %p76, %p77
    %p79 = scmp.ne.s32.totalorder %s68, %s71
    %p80 = scmp.eq.s32.totalorder %s16, 1
    %p81 = por %p79, %p80
    %p82 = scmp.ne.s32.totalorder %s71, %s72
    %p83 = scmp.eq.s32.totalorder %s16, 0
    %p84 = por %p82, %p83
    %p85 = scmp.ne.s32.totalorder %s71, %s72
    %p86 = scmp.eq.s32.totalorder %s17, 1
    %p87 = por %p85, %p86
    %p89 = scmp.ne.s32.totalorder %s72, %s88
    %p90 = scmp.eq.s32.totalorder %s17, 0
    %p91 = por %p89, %p90
    %s92 = ssub.s32 %s11, %s18
    %p93 = scmp.eq.s32.totalorder %s92, 0
    %s95 = sadd.s32 %s94, 1
    %s96 = scalar_select %p93, %s94, %s95
    %p99 = pneg %p93
    %p100 = scmp.eq.s32.totalorder %s11, 1
    %p101 = por %p99, %p100
    %p102 = scmp.ne.s32.totalorder %s94, %s97
    %p103 = scmp.eq.s32.totalorder %s11, 0
    %p104 = por %p102, %p103
    %p105 = scmp.ne.s32.totalorder %s94, %s97
    %p106 = scmp.eq.s32.totalorder %s16, 1
    %p107 = por %p105, %p106
    %p108 = scmp.ne.s32.totalorder %s97, %s98
    %p109 = scmp.eq.s32.totalorder %s16, 0
    %p110 = por %p108, %p109
    %p111 = scmp.ne.s32.totalorder %s97, %s98
    %p112 = scmp.eq.s32.totalorder %s17, 1
    %p113 = por %p111, %p112
    %p115 = scmp.ne.s32.totalorder %s98, %s114
    %p116 = scmp.eq.s32.totalorder %s17, 0
    %p117 = por %p115, %p116
    %s118 = ssub.s32 %s11, %s18
    %p119 = scmp.eq.s32.totalorder %s118, 0
    %s121 = sadd.s32 %s120, 1
    %s122 = scalar_select %p119, %s120, %s121
    %p125 = pneg %p119
    %p126 = scmp.eq.s32.totalorder %s11, 1
    %p127 = por %p125, %p126
    %p128 = scmp.ne.s32.totalorder %s120, %s123
    %p129 = scmp.eq.s32.totalorder %s11, 0
    %p130 = por %p128, %p129
    %p131 = scmp.ne.s32.totalorder %s120, %s123
    %p132 = scmp.eq.s32.totalorder %s16, 1
    %p133 = por %p131, %p132
    %p134 = scmp.ne.s32.totalorder %s123, %s124
    %p135 = scmp.eq.s32.totalorder %s16, 0
    %p136 = por %p134, %p135
    %p137 = scmp.ne.s32.totalorder %s123, %s124
    %p138 = scmp.eq.s32.totalorder %s17, 1
    %p139 = por %p137, %p138
    %p141 = scmp.ne.s32.totalorder %s124, %s140
    %p142 = scmp.eq.s32.totalorder %s17, 0
    %p143 = por %p141, %p142
    %p144 = scmp.le.s32.totalorder 1, %s11
    %p145 = scmp.lt.s32.totalorder %s11, 3
    %p146 = pnand %p144, %p145
    %p147 = pneg %p146
    // Predicated region
    $region9: #{basicblock_forward.3} parent=5 // pred_check
      _
    $region10: #{basicblock_forward.3} parent=5 // pred_check_branch
      %149 = sbr.rel (%p146) target = $region12
    $region11: #{basicblock_forward.3} parent=5 // pred_region
      %s150 = ssub.s32 %s11, 1
      // Predicated region
      $region13: #{basicblock_forward.3} parent=11 // pred_check
        %p151 = pneg %p58
      $region14: #{basicblock_forward.3} parent=11 // pred_check_branch
        %153 = sbr.rel (%p151) target = $region16
      $region15: #{basicblock_forward.3} parent=11 // pred_region
        _
      $region16: #{basicblock_forward.3} parent=11 // pred_fallthru
        _
    $region12: #{basicblock_forward.3} parent=5 // pred_fallthru
      _
    %p154 = scmp.lt.s32.totalorder %s11, 2
    // Predicated region
    $region17: #{basicblock_forward.3} parent=5 // pred_check
      %p155 = pneg %p154
    $region18: #{basicblock_forward.3} parent=5 // pred_check_branch
      %157 = sbr.rel (%p155) target = $region20
    $region19: #{basicblock_forward.3} parent=5 // pred_region
      // Predicated region
      $region21: #{basicblock_forward.3} parent=19 // pred_check
        %p158 = pneg %p31
      $region22: #{basicblock_forward.3} parent=19 // pred_check_branch
        %160 = sbr.rel (%p158) target = $region24
      $region23: #{basicblock_forward.3} parent=19 // pred_region
        %p161 = scmp.lt.s32.totalorder %s11, 1
        %s162 = scalar_select %p161, %s11, 1
        %s163 = smul.addr %s162, 32
        %s164 = smul.addr %s163, 4
        %s165 = scalar_lea.vmem %s0, %s164
      $region24: #{basicblock_forward.3} parent=19 // pred_fallthru
        _
    $region20: #{basicblock_forward.3} parent=5 // pred_fallthru
      _
    %p166 = scmp.le.s32.totalorder 1, %s11
    %p167 = scmp.lt.s32.totalorder %s11, 3
    %p168 = pnand %p166, %p167
    %p169 = pneg %p168
    // Predicated region
    $region25: #{basicblock_forward.3} parent=5 // pred_check
      _
    $region26: #{basicblock_forward.3} parent=5 // pred_check_branch
      %171 = sbr.rel (%p168) target = $region28
    $region27: #{basicblock_forward.3} parent=5 // pred_region
      %s172 = ssub.s32 %s11, 1
      %p173 = scmp.lt.s32.totalorder %s16, 1
      %s174 = scalar_select %p173, %s16, 1
      %s175 = smul.addr %s174, 32
      %s176 = smul.addr %s175, 4
      %s177 = scalar_lea.vmem %s0, %s176
      %p178 = pneg %p37
      %p179 = pneg %p34
      %p180 = pneg %p58
      %p181 = pneg %p55
      %p182 = pneg %p84
      %p183 = pneg %p81
      %p184 = scmp.lt.s32.totalorder %s16, 1
      %s185 = scalar_select %p184, %s16, 1
      %s186 = smul.addr %s185, 32
      %s187 = smul.addr %s186, 4
      %s188 = scalar_lea.vmem %s2, %s187
      %p189 = pneg %p110
      %p190 = pneg %p107
      %p191 = scmp.lt.s32.totalorder %s16, 1
      %s192 = scalar_select %p191, %s16, 1
      %s193 = scalar_lea.vmem %s3, %s192
      %p194 = pneg %p136
      %p195 = pneg %p133
      %p196 = scmp.lt.s32.totalorder %s16, 1
      %s197 = scalar_select %p196, %s16, 1
      %s198 = scalar_lea.vmem %s4, %s197
      %p199 = scmp.lt.s32.totalorder %s16, 1
      %s200 = scalar_select %p199, %s16, 1
      %s201 = smul.addr %s200, 32
      %s202 = smul.addr %s201, 4
      %s203 = scalar_lea.vmem %s0, %s202
      %p204 = scmp.lt.s32.totalorder %s16, 1
      %s205 = scalar_select %p204, %s16, 1
      %s206 = smul.addr %s205, 32
      %s207 = smul.addr %s206, 4
      %s208 = scalar_lea.vmem %s2, %s207
      %p209 = scmp.lt.s32.totalorder %s16, 1
      %s210 = scalar_select %p209, %s16, 1
      %s211 = scalar_lea.vmem %s3, %s210
      %p212 = scmp.lt.s32.totalorder %s16, 1
      %s213 = scalar_select %p212, %s16, 1
      %s214 = scalar_lea.vmem %s4, %s213
      %v215 = vld [vmem:[%s203] sm:$0xf]
      %v216 = vld [vmem:[%s203 + $0x4] sm:$0xf]
      %v217 = vld [vmem:[%s203 + $0x8] sm:$0xf]
      %v218 = vld [vmem:[%s203 + $0xc] sm:$0xf]
      %v219 = vld [vmem:[%s203 + $0x10] sm:$0xf]
      %v220 = vld [vmem:[%s203 + $0x14] sm:$0xf]
      %v221 = vld [vmem:[%s203 + $0x18] sm:$0xf]
      %v222 = vld [vmem:[%s203 + $0x1c] sm:$0xf]
      %v223 = vld [vmem:[%s203 + $0x20] sm:$0xf]
      %v224 = vld [vmem:[%s203 + $0x24] sm:$0xf]
      %v225 = vld [vmem:[%s203 + $0x28] sm:$0xf]
      %v226 = vld [vmem:[%s203 + $0x2c] sm:$0xf]
      %v227 = vld [vmem:[%s203 + $0x30] sm:$0xf]
      %v228 = vld [vmem:[%s203 + $0x34] sm:$0xf]
      %v229 = vld [vmem:[%s203 + $0x38] sm:$0xf]
      %v230 = vld [vmem:[%s203 + $0x3c] sm:$0xf]
      %v231 = vld [vmem:[%s203 + $0x40] sm:$0xf]
      %v232 = vld [vmem:[%s203 + $0x44] sm:$0xf]
      %v233 = vld [vmem:[%s203 + $0x48] sm:$0xf]
      %v234 = vld [vmem:[%s203 + $0x4c] sm:$0xf]
      %v235 = vld [vmem:[%s203 + $0x50] sm:$0xf]
      %v236 = vld [vmem:[%s203 + $0x54] sm:$0xf]
      %v237 = vld [vmem:[%s203 + $0x58] sm:$0xf]
      %v238 = vld [vmem:[%s203 + $0x5c] sm:$0xf]
      %v239 = vld [vmem:[%s203 + $0x60] sm:$0xf]
      %v240 = vld [vmem:[%s203 + $0x64] sm:$0xf]
      %v241 = vld [vmem:[%s203 + $0x68] sm:$0xf]
      %v242 = vld [vmem:[%s203 + $0x6c] sm:$0xf]
      %v243 = vld [vmem:[%s203 + $0x70] sm:$0xf]
      %v244 = vld [vmem:[%s203 + $0x74] sm:$0xf]
      %v245 = vld [vmem:[%s203 + $0x78] sm:$0xf]
      %v246 = vld [vmem:[%s203 + $0x7c] sm:$0xf]
      %v247 = vunpack.c.l.bf16 %v215
      %v248 = vunpack.c.l.bf16 %v216
      %v249 = vunpack.c.l.bf16 %v217
      %v250 = vunpack.c.l.bf16 %v218
      %v251 = vunpack.c.l.bf16 %v219
      %v252 = vunpack.c.l.bf16 %v220
      %v253 = vunpack.c.l.bf16 %v221
      %v254 = vunpack.c.l.bf16 %v222
      %v255 = vunpack.c.l.bf16 %v223
      %v256 = vunpack.c.l.bf16 %v224
      %v257 = vunpack.c.l.bf16 %v225
      %v258 = vunpack.c.l.bf16 %v226
      %v259 = vunpack.c.l.bf16 %v227
      %v260 = vunpack.c.l.bf16 %v228
      %v261 = vunpack.c.l.bf16 %v229
      %v262 = vunpack.c.l.bf16 %v230
      %v263 = vunpack.c.l.bf16 %v231
      %v264 = vunpack.c.l.bf16 %v232
      %v265 = vunpack.c.l.bf16 %v233
      %v266 = vunpack.c.l.bf16 %v234
      %v267 = vunpack.c.l.bf16 %v235
      %v268 = vunpack.c.l.bf16 %v236
      %v269 = vunpack.c.l.bf16 %v237
      %v270 = vunpack.c.l.bf16 %v238
      %v271 = vunpack.c.l.bf16 %v239
      %v272 = vunpack.c.l.bf16 %v240
      %v273 = vunpack.c.l.bf16 %v241
      %v274 = vunpack.c.l.bf16 %v242
      %v275 = vunpack.c.l.bf16 %v243
      %v276 = vunpack.c.l.bf16 %v244
      %v277 = vunpack.c.l.bf16 %v245
      %v278 = vunpack.c.l.bf16 %v246
      %279 = vst [vmem:[#allocation2] sm:$0xff] 0.0
      %280 = vst [vmem:[#allocation2 + $0x8] sm:$0xff] 0.0
      %281 = vst [vmem:[#allocation2 + $0x10] sm:$0x3] 0.0
      %282 = vst [vmem:[#allocation2 + $0x18] sm:$0xff] 0.0
      %283 = vst [vmem:[#allocation2 + $0x20] sm:$0xff] 0.0
      %284 = vst [vmem:[#allocation2 + $0x28] sm:$0x3] 0.0
      %285 = vst [vmem:[#allocation2 + $0x30] sm:$0xff] 0.0
      %286 = vst [vmem:[#allocation2 + $0x38] sm:$0xff] 0.0
      %287 = vst [vmem:[#allocation2 + $0x40] sm:$0x3] 0.0
      %288 = vst [vmem:[#allocation2 + $0x48] sm:$0xff] 0.0
      %289 = vst [vmem:[#allocation2 + $0x50] sm:$0xff] 0.0
      %290 = vst [vmem:[#allocation2 + $0x58] sm:$0x3] 0.0
      %291 = vst [vmem:[#allocation2 + $0x60] sm:$0xff] 0.0
      %292 = vst [vmem:[#allocation2 + $0x68] sm:$0xff] 0.0
      %293 = vst [vmem:[#allocation2 + $0x70] sm:$0x3] 0.0
      %294 = vst [vmem:[#allocation2 + $0x78] sm:$0xff] 0.0
      %295 = vst [vmem:[#allocation2 + $0x80] sm:$0xff] 0.0
      %296 = vst [vmem:[#allocation2 + $0x88] sm:$0x3] 0.0
      %297 = vst [vmem:[#allocation2 + $0x90] sm:$0xff] 0.0
      %298 = vst [vmem:[#allocation2 + $0x98] sm:$0xff] 0.0
      %299 = vst [vmem:[#allocation2 + $0xa0] sm:$0x3] 0.0
      %300 = vst [vmem:[#allocation2 + $0xa8] sm:$0xff] 0.0
      %301 = vst [vmem:[#allocation2 + $0xb0] sm:$0xff] 0.0
      %302 = vst [vmem:[#allocation2 + $0xb8] sm:$0x3] 0.0
      %303 = vst [vmem:[#allocation2 + $0xc0] sm:$0xff] 0.0
      %304 = vst [vmem:[#allocation2 + $0xc8] sm:$0xff] 0.0
      %305 = vst [vmem:[#allocation2 + $0xd0] sm:$0x3] 0.0
      %306 = vst [vmem:[#allocation2 + $0xd8] sm:$0xff] 0.0
      %307 = vst [vmem:[#allocation2 + $0xe0] sm:$0xff] 0.0
      %308 = vst [vmem:[#allocation2 + $0xe8] sm:$0x3] 0.0
      %309 = vst [vmem:[#allocation2 + $0xf0] sm:$0xff] 0.0
      %310 = vst [vmem:[#allocation2 + $0xf8] sm:$0xff] 0.0
      %311 = vst [vmem:[#allocation2 + $0x100] sm:$0x3] 0.0
      %312 = vst [vmem:[#allocation2 + $0x108] sm:$0xff] 0.0
      %313 = vst [vmem:[#allocation2 + $0x110] sm:$0xff] 0.0
      %314 = vst [vmem:[#allocation2 + $0x118] sm:$0x3] 0.0
      %315 = vst [vmem:[#allocation2 + $0x120] sm:$0xff] 0.0
      %316 = vst [vmem:[#allocation2 + $0x128] sm:$0xff] 0.0
      %317 = vst [vmem:[#allocation2 + $0x130] sm:$0x3] 0.0
      %318 = vst [vmem:[#allocation2 + $0x138] sm:$0xff] 0.0
      %319 = vst [vmem:[#allocation2 + $0x140] sm:$0xff] 0.0
      %320 = vst [vmem:[#allocation2 + $0x148] sm:$0x3] 0.0
      %321 = vst [vmem:[#allocation2 + $0x150] sm:$0xff] 0.0
      %322 = vst [vmem:[#allocation2 + $0x158] sm:$0xff] 0.0
      %323 = vst [vmem:[#allocation2 + $0x160] sm:$0x3] 0.0
      %324 = vst [vmem:[#allocation2 + $0x168] sm:$0xff] 0.0
      %325 = vst [vmem:[#allocation2 + $0x170] sm:$0xff] 0.0
      %326 = vst [vmem:[#allocation2 + $0x178] sm:$0x3] 0.0
      %327 = vst [vmem:[#allocation2 + $0x180] sm:$0xff] 0.0
      %328 = vst [vmem:[#allocation2 + $0x188] sm:$0xff] 0.0
      %329 = vst [vmem:[#allocation2 + $0x190] sm:$0x3] 0.0
      %330 = vst [vmem:[#allocation2 + $0x198] sm:$0xff] 0.0
      %331 = vst [vmem:[#allocation2 + $0x1a0] sm:$0xff] 0.0
      %332 = vst [vmem:[#allocation2 + $0x1a8] sm:$0x3] 0.0
      %s333 = scalar_lea.vmem [#allocation2], 24
      %334 = vst [vmem:[%s333 + $0x1] sm:$0xff] %v247
      %335 = vst [vmem:[%s333 + $0x9] sm:$0xff] %v248
      %336 = vst [vmem:[%s333 + $0x19] sm:$0xff] %v249
      %337 = vst [vmem:[%s333 + $0x21] sm:$0xff] %v250
      %338 = vst [vmem:[%s333 + $0x31] sm:$0xff] %v251
      %339 = vst [vmem:[%s333 + $0x39] sm:$0xff] %v252
      %340 = vst [vmem:[%s333 + $0x49] sm:$0xff] %v253
      %341 = vst [vmem:[%s333 + $0x51] sm:$0xff] %v254
      %342 = vst [vmem:[%s333 + $0x61] sm:$0xff] %v255
      %343 = vst [vmem:[%s333 + $0x69] sm:$0xff] %v256
      %344 = vst [vmem:[%s333 + $0x79] sm:$0xff] %v257
      %345 = vst [vmem:[%s333 + $0x81] sm:$0xff] %v258
      %346 = vst [vmem:[%s333 + $0x91] sm:$0xff] %v259
      %347 = vst [vmem:[%s333 + $0x99] sm:$0xff] %v260
      %348 = vst [vmem:[%s333 + $0xa9] sm:$0xff] %v261
      %349 = vst [vmem:[%s333 + $0xb1] sm:$0xff] %v262
      %350 = vst [vmem:[%s333 + $0xc1] sm:$0xff] %v263
      %351 = vst [vmem:[%s333 + $0xc9] sm:$0xff] %v264
      %352 = vst [vmem:[%s333 + $0xd9] sm:$0xff] %v265
      %353 = vst [vmem:[%s333 + $0xe1] sm:$0xff] %v266
      %354 = vst [vmem:[%s333 + $0xf1] sm:$0xff] %v267
      %355 = vst [vmem:[%s333 + $0xf9] sm:$0xff] %v268
      %356 = vst [vmem:[%s333 + $0x109] sm:$0xff] %v269
      %357 = vst [vmem:[%s333 + $0x111] sm:$0xff] %v270
      %358 = vst [vmem:[%s333 + $0x121] sm:$0xff] %v271
      %359 = vst [vmem:[%s333 + $0x129] sm:$0xff] %v272
      %360 = vst [vmem:[%s333 + $0x139] sm:$0xff] %v273
      %361 = vst [vmem:[%s333 + $0x141] sm:$0xff] %v274
      %362 = vst [vmem:[%s333 + $0x151] sm:$0xff] %v275
      %363 = vst [vmem:[%s333 + $0x159] sm:$0xff] %v276
      %364 = vst [vmem:[%s333 + $0x169] sm:$0xff] %v277
      %365 = vst [vmem:[%s333 + $0x171] sm:$0xff] %v278
      %v366 = vld [vmem:[#allocation2] sm:$0xff]
      %v367 = vld [vmem:[#allocation2 + $0x8] sm:$0xff]
      %v368 = vld [vmem:[#allocation2 + $0x10] sm:$0x3]
      %v369 = vld [vmem:[#allocation2 + $0x18] sm:$0xff]
      %v370 = vld [vmem:[#allocation2 + $0x20] sm:$0xff]
      %v371 = vld [vmem:[#allocation2 + $0x28] sm:$0x3]
      %v372 = vld [vmem:[#allocation2 + $0x30] sm:$0xff]
      %v373 = vld [vmem:[#allocation2 + $0x38] sm:$0xff]
      %v374 = vld [vmem:[#allocation2 + $0x40] sm:$0x3]
      %v375 = vld [vmem:[#allocation2 + $0x48] sm:$0xff]
      %v376 = vld [vmem:[#allocation2 + $0x50] sm:$0xff]
      %v377 = vld [vmem:[#allocation2 + $0x58] sm:$0x3]
      %v378 = vld [vmem:[#allocation2 + $0x60] sm:$0xff]
      %v379 = vld [vmem:[#allocation2 + $0x68] sm:$0xff]
      %v380 = vld [vmem:[#allocation2 + $0x70] sm:$0x3]
      %v381 = vld [vmem:[#allocation2 + $0x78] sm:$0xff]
      %v382 = vld [vmem:[#allocation2 + $0x80] sm:$0xff]
      %v383 = vld [vmem:[#allocation2 + $0x88] sm:$0x3]
      %v384 = vld [vmem:[#allocation2 + $0x90] sm:$0xff]
      %v385 = vld [vmem:[#allocation2 + $0x98] sm:$0xff]
      %v386 = vld [vmem:[#allocation2 + $0xa0] sm:$0x3]
      %v387 = vld [vmem:[#allocation2 + $0xa8] sm:$0xff]
      %v388 = vld [vmem:[#allocation2 + $0xb0] sm:$0xff]
      %v389 = vld [vmem:[#allocation2 + $0xb8] sm:$0x3]
      %v390 = vld [vmem:[#allocation2 + $0xc0] sm:$0xff]
      %v391 = vld [vmem:[#allocation2 + $0xc8] sm:$0xff]
      %v392 = vld [vmem:[#allocation2 + $0xd0] sm:$0x3]
      %v393 = vld [vmem:[#allocation2 + $0xd8] sm:$0xff]
      %v394 = vld [vmem:[#allocation2 + $0xe0] sm:$0xff]
      %v395 = vld [vmem:[#allocation2 + $0xe8] sm:$0x3]
      %v396 = vld [vmem:[#allocation2 + $0xf0] sm:$0xff]
      %v397 = vld [vmem:[#allocation2 + $0xf8] sm:$0xff]
      %v398 = vld [vmem:[#allocation2 + $0x100] sm:$0x3]
      %v399 = vld [vmem:[#allocation2 + $0x108] sm:$0xff]
      %v400 = vld [vmem:[#allocation2 + $0x110] sm:$0xff]
      %v401 = vld [vmem:[#allocation2 + $0x118] sm:$0x3]
      %v402 = vld [vmem:[#allocation2 + $0x120] sm:$0xff]
      %v403 = vld [vmem:[#allocation2 + $0x128] sm:$0xff]
      %v404 = vld [vmem:[#allocation2 + $0x130] sm:$0x3]
      %v405 = vld [vmem:[#allocation2 + $0x138] sm:$0xff]
      %v406 = vld [vmem:[#allocation2 + $0x140] sm:$0xff]
      %v407 = vld [vmem:[#allocation2 + $0x148] sm:$0x3]
      %v408 = vld [vmem:[#allocation2 + $0x150] sm:$0xff]
      %v409 = vld [vmem:[#allocation2 + $0x158] sm:$0xff]
      %v410 = vld [vmem:[#allocation2 + $0x160] sm:$0x3]
      %v411 = vld [vmem:[#allocation2 + $0x168] sm:$0xff]
      %v412 = vld [vmem:[#allocation2 + $0x170] sm:$0xff]
      %v413 = vld [vmem:[#allocation2 + $0x178] sm:$0x3]
      %v414 = vld [vmem:[#allocation2 + $0x180] sm:$0xff]
      %v415 = vld [vmem:[#allocation2 + $0x188] sm:$0xff]
      %v416 = vld [vmem:[#allocation2 + $0x190] sm:$0x3]
      %v417 = vld [vmem:[#allocation2 + $0x198] sm:$0xff]
      %v418 = vld [vmem:[#allocation2 + $0x1a0] sm:$0xff]
      %v419 = vld [vmem:[#allocation2 + $0x1a8] sm:$0x3]
      %v420 = vpack.c.bf16 %v367, %v366
      %v421 = vpack.c.bf16 %v370, %v369
      %v422 = vpack.c.bf16 %v373, %v372
      %v423 = vpack.c.bf16 %v376, %v375
      %v424 = vpack.c.bf16 %v379, %v378
      %v425 = vpack.c.bf16 %v382, %v381
      %v426 = vpack.c.bf16 %v385, %v384
      %v427 = vpack.c.bf16 %v388, %v387
      %v428 = vpack.c.bf16 %v391, %v390
      %v429 = vpack.c.bf16 %v394, %v393
      %v430 = vpack.c.bf16 %v397, %v396
      %v431 = vpack.c.bf16 %v400, %v399
      %v432 = vpack.c.bf16 %v403, %v402
      %v433 = vpack.c.bf16 %v406, %v405
      %v434 = vpack.c.bf16 %v409, %v408
      %v435 = vpack.c.bf16 %v412, %v411
      %v436 = vld [vmem:[%s1] sm:$0xf]
      %v437 = vld [vmem:[%s1 + $0x4] sm:$0xf]
      %v438 = vld [vmem:[%s1 + $0x8] sm:$0xf]
      %v439 = vld [vmem:[%s1 + $0xc] sm:$0xf]
      %v440 = vld [vmem:[%s1 + $0x10] sm:$0xf]
      %v441 = vld [vmem:[%s1 + $0x14] sm:$0xf]
      %v442 = vld [vmem:[%s1 + $0x18] sm:$0xf]
      %v443 = vld [vmem:[%s1 + $0x1c] sm:$0xf]
      %v444 = vld [vmem:[%s1 + $0x20] sm:$0xf]
      %v445 = vld [vmem:[%s1 + $0x24] sm:$0xf]
      %v446 = vld [vmem:[%s1 + $0x28] sm:$0xf]
      %v447 = vld [vmem:[%s1 + $0x2c] sm:$0xf]
      %v448 = vld [vmem:[%s1 + $0x30] sm:$0xf]
      %v449 = vld [vmem:[%s1 + $0x34] sm:$0xf]
      %v450 = vld [vmem:[%s1 + $0x38] sm:$0xf]
      %v451 = vld [vmem:[%s1 + $0x3c] sm:$0xf]
      %vm500 = vcmask 1046528
      %v501 = vrot.slane %v366, 1
      %v502 = vrot.slane %v367, 1
      %v503 = vsel %vm500, %v501, %v502
      %v504 = vrot.slane %v368, 1
      %v505 = vsel %vm500, %v502, %v504
      %v506 = vrot.slane %v369, 1
      %v507 = vrot.slane %v370, 1
      %v508 = vsel %vm500, %v506, %v507
      %v509 = vrot.slane %v371, 1
      %v510 = vsel %vm500, %v507, %v509
      %v511 = vrot.slane %v372, 1
      %v512 = vrot.slane %v373, 1
      %v513 = vsel %vm500, %v511, %v512
      %v514 = vrot.slane %v374, 1
      %v515 = vsel %vm500, %v512, %v514
      %v516 = vrot.slane %v375, 1
      %v517 = vrot.slane %v376, 1
      %v518 = vsel %vm500, %v516, %v517
      %v519 = vrot.slane %v377, 1
      %v520 = vsel %vm500, %v517, %v519
      %v521 = vrot.slane %v378, 1
      %v522 = vrot.slane %v379, 1
      %v523 = vsel %vm500, %v521, %v522
      %v524 = vrot.slane %v380, 1
      %v525 = vsel %vm500, %v522, %v524
      %v526 = vrot.slane %v381, 1
      %v527 = vrot.slane %v382, 1
      %v528 = vsel %vm500, %v526, %v527
      %v529 = vrot.slane %v383, 1
      %v530 = vsel %vm500, %v527, %v529
      %v531 = vrot.slane %v384, 1
      %v532 = vrot.slane %v385, 1
      %v533 = vsel %vm500, %v531, %v532
      %v534 = vrot.slane %v386, 1
      %v535 = vsel %vm500, %v532, %v534
      %v536 = vrot.slane %v387, 1
      %v537 = vrot.slane %v388, 1
      %v538 = vsel %vm500, %v536, %v537
      %v539 = vrot.slane %v389, 1
      %v540 = vsel %vm500, %v537, %v539
      %v541 = vrot.slane %v390, 1
      %v542 = vrot.slane %v391, 1
      %v543 = vsel %vm500, %v541, %v542
      %v544 = vrot.slane %v392, 1
      %v545 = vsel %vm500, %v542, %v544
      %v546 = vrot.slane %v393, 1
      %v547 = vrot.slane %v394, 1
      %v548 = vsel %vm500, %v546, %v547
      %v549 = vrot.slane %v395, 1
      %v550 = vsel %vm500, %v547, %v549
      %v551 = vrot.slane %v396, 1
      %v552 = vrot.slane %v397, 1
      %v553 = vsel %vm500, %v551, %v552
      %v554 = vrot.slane %v398, 1
      %v555 = vsel %vm500, %v552, %v554
      %v556 = vrot.slane %v399, 1
      %v557 = vrot.slane %v400, 1
      %v558 = vsel %vm500, %v556, %v557
      %v559 = vrot.slane %v401, 1
      %v560 = vsel %vm500, %v557, %v559
      %v561 = vrot.slane %v402, 1
      %v562 = vrot.slane %v403, 1
      %v563 = vsel %vm500, %v561, %v562
      %v564 = vrot.slane %v404, 1
      %v565 = vsel %vm500, %v562, %v564
      %v566 = vrot.slane %v405, 1
      %v567 = vrot.slane %v406, 1
      %v568 = vsel %vm500, %v566, %v567
      %v569 = vrot.slane %v407, 1
      %v570 = vsel %vm500, %v567, %v569
      %v571 = vrot.slane %v408, 1
      %v572 = vrot.slane %v409, 1
      %v573 = vsel %vm500, %v571, %v572
      %v574 = vrot.slane %v410, 1
      %v575 = vsel %vm500, %v572, %v574
      %v576 = vrot.slane %v411, 1
      %v577 = vrot.slane %v412, 1
      %v578 = vsel %vm500, %v576, %v577
      %v579 = vrot.slane %v413, 1
      %v580 = vsel %vm500, %v577, %v579
      %v613 = vpack.c.bf16 %v505, %v503
      %v614 = vpack.c.bf16 %v510, %v508
      %v615 = vpack.c.bf16 %v515, %v513
      %v616 = vpack.c.bf16 %v520, %v518
      %v617 = vpack.c.bf16 %v525, %v523
      %v618 = vpack.c.bf16 %v530, %v528
      %v619 = vpack.c.bf16 %v535, %v533
      %v620 = vpack.c.bf16 %v540, %v538
      %v621 = vpack.c.bf16 %v545, %v543
      %v622 = vpack.c.bf16 %v550, %v548
      %v623 = vpack.c.bf16 %v555, %v553
      %v624 = vpack.c.bf16 %v560, %v558
      %v625 = vpack.c.bf16 %v565, %v563
      %v626 = vpack.c.bf16 %v570, %v568
      %v627 = vpack.c.bf16 %v575, %v573
      %v628 = vpack.c.bf16 %v580, %v578
      %s629 = scalar_lea.vmem %s1, 64
      %v630 = vld [vmem:[%s629] sm:$0xf]
      %v631 = vld [vmem:[%s629 + $0x4] sm:$0xf]
      %v632 = vld [vmem:[%s629 + $0x8] sm:$0xf]
      %v633 = vld [vmem:[%s629 + $0xc] sm:$0xf]
      %v634 = vld [vmem:[%s629 + $0x10] sm:$0xf]
      %v635 = vld [vmem:[%s629 + $0x14] sm:$0xf]
      %v636 = vld [vmem:[%s629 + $0x18] sm:$0xf]
      %v637 = vld [vmem:[%s629 + $0x1c] sm:$0xf]
      %v638 = vld [vmem:[%s629 + $0x20] sm:$0xf]
      %v639 = vld [vmem:[%s629 + $0x24] sm:$0xf]
      %v640 = vld [vmem:[%s629 + $0x28] sm:$0xf]
      %v641 = vld [vmem:[%s629 + $0x2c] sm:$0xf]
      %v642 = vld [vmem:[%s629 + $0x30] sm:$0xf]
      %v643 = vld [vmem:[%s629 + $0x34] sm:$0xf]
      %v644 = vld [vmem:[%s629 + $0x38] sm:$0xf]
      %v645 = vld [vmem:[%s629 + $0x3c] sm:$0xf]
      %v662 = vunpack.c.l.b16 %v630
      %v663 = vunpack.c.l.b16 %v631
      %v664 = vunpack.c.l.b16 %v632
      %v665 = vunpack.c.l.b16 %v633
      %v666 = vunpack.c.l.b16 %v634
      %v667 = vunpack.c.l.b16 %v635
      %v668 = vunpack.c.l.b16 %v636
      %v669 = vunpack.c.l.b16 %v637
      %v670 = vunpack.c.l.b16 %v638
      %v671 = vunpack.c.l.b16 %v639
      %v672 = vunpack.c.l.b16 %v640
      %v673 = vunpack.c.l.b16 %v641
      %v674 = vunpack.c.l.b16 %v642
      %v675 = vunpack.c.l.b16 %v643
      %v676 = vunpack.c.l.b16 %v644
      %v677 = vunpack.c.l.b16 %v645
      %v678 = vpack.c.b16 %v663, %v662
      %v679 = vpack.c.b16 %v665, %v664
      %v680 = vpack.c.b16 %v667, %v666
      %v681 = vpack.c.b16 %v669, %v668
      %v682 = vpack.c.b16 %v671, %v670
      %v683 = vpack.c.b16 %v673, %v672
      %v684 = vpack.c.b16 %v675, %v674
      %v685 = vpack.c.b16 %v677, %v676
      %694 = vmatpush.bf16.msra.mxu0 %v685
      %695 = vmatpush.bf16.msra.mxu0 %v684
      %696 = vmatpush.bf16.msra.mxu0 %v683
      %697 = vmatpush.bf16.msra.mxu0 %v682
      %698 = vmatpush.bf16.msra.mxu0 %v681
      %699 = vmatpush.bf16.msra.mxu0 %v680
      %700 = vmatpush.bf16.msra.mxu0 %v679
      %701 = vmatpush.bf16.msra.mxu0 %v678
      %702 = vmatmul.bf16.gmra.mxu0 %v613
      %v703 = vpop.f32.mrf.mxu0
      %v704 = vadd.f32 0.0, %v703
      %v705 = vpop.f32.mrf.mxu0
      %v706 = vadd.f32 0.0, %v705
      %707 = vmatmul.bf16.gmra.mxu0 %v614
      %v708 = vpop.f32.mrf.mxu0
      %v709 = vadd.f32 0.0, %v708
      %v710 = vpop.f32.mrf.mxu0
      %v711 = vadd.f32 0.0, %v710
      %712 = vmatmul.bf16.gmra.mxu0 %v615
      %v713 = vpop.f32.mrf.mxu0
      %v714 = vadd.f32 0.0, %v713
      %v715 = vpop.f32.mrf.mxu0
      %v716 = vadd.f32 0.0, %v715
      %717 = vmatmul.bf16.gmra.mxu0 %v616
      %v718 = vpop.f32.mrf.mxu0
      %v719 = vadd.f32 0.0, %v718
      %v720 = vpop.f32.mrf.mxu0
      %v721 = vadd.f32 0.0, %v720
      %722 = vmatmul.bf16.gmra.mxu0 %v617
      %v723 = vpop.f32.mrf.mxu0
      %v724 = vadd.f32 0.0, %v723
      %v725 = vpop.f32.mrf.mxu0
      %v726 = vadd.f32 0.0, %v725
      %727 = vmatmul.bf16.gmra.mxu0 %v618
      %v728 = vpop.f32.mrf.mxu0
      %v729 = vadd.f32 0.0, %v728
      %v730 = vpop.f32.mrf.mxu0
      %v731 = vadd.f32 0.0, %v730
      %732 = vmatmul.bf16.gmra.mxu0 %v619
      %v733 = vpop.f32.mrf.mxu0
      %v734 = vadd.f32 0.0, %v733
      %v735 = vpop.f32.mrf.mxu0
      %v736 = vadd.f32 0.0, %v735
      %737 = vmatmul.bf16.gmra.mxu0 %v620
      %v738 = vpop.f32.mrf.mxu0
      %v739 = vadd.f32 0.0, %v738
      %v740 = vpop.f32.mrf.mxu0
      %v741 = vadd.f32 0.0, %v740
      %742 = vmatmul.bf16.gmra.mxu0 %v621
      %v743 = vpop.f32.mrf.mxu0
      %v744 = vadd.f32 0.0, %v743
      %v745 = vpop.f32.mrf.mxu0
      %v746 = vadd.f32 0.0, %v745
      %747 = vmatmul.bf16.gmra.mxu0 %v622
      %v748 = vpop.f32.mrf.mxu0
      %v749 = vadd.f32 0.0, %v748
      %v750 = vpop.f32.mrf.mxu0
      %v751 = vadd.f32 0.0, %v750
      %752 = vmatmul.bf16.gmra.mxu0 %v623
      %v753 = vpop.f32.mrf.mxu0
      %v754 = vadd.f32 0.0, %v753
      %v755 = vpop.f32.mrf.mxu0
      %v756 = vadd.f32 0.0, %v755
      %757 = vmatmul.bf16.gmra.mxu0 %v624
      %v758 = vpop.f32.mrf.mxu0
      %v759 = vadd.f32 0.0, %v758
      %v760 = vpop.f32.mrf.mxu0
      %v761 = vadd.f32 0.0, %v760
      %762 = vmatmul.bf16.gmra.mxu0 %v625
      %v763 = vpop.f32.mrf.mxu0
      %v764 = vadd.f32 0.0, %v763
      %v765 = vpop.f32.mrf.mxu0
      %v766 = vadd.f32 0.0, %v765
      %767 = vmatmul.bf16.gmra.mxu0 %v626
      %v768 = vpop.f32.mrf.mxu0
      %v769 = vadd.f32 0.0, %v768
      %v770 = vpop.f32.mrf.mxu0
      %v771 = vadd.f32 0.0, %v770
      %772 = vmatmul.bf16.gmra.mxu0 %v627
      %v773 = vpop.f32.mrf.mxu0
      %v774 = vadd.f32 0.0, %v773
      %v775 = vpop.f32.mrf.mxu0
      %v776 = vadd.f32 0.0, %v775
      %777 = vmatmul.bf16.gmra.mxu0 %v628
      %v778 = vpop.f32.mrf.mxu0
      %v779 = vadd.f32 0.0, %v778
      %v780 = vpop.f32.mrf.mxu0
      %v781 = vadd.f32 0.0, %v780
      %782 = vdwg.mxu0
      %v799 = vunpack.c.l.b16 %v436
      %v800 = vunpack.c.l.b16 %v437
      %v801 = vunpack.c.l.b16 %v438
      %v802 = vunpack.c.l.b16 %v439
      %v803 = vunpack.c.l.b16 %v440
      %v804 = vunpack.c.l.b16 %v441
      %v805 = vunpack.c.l.b16 %v442
      %v806 = vunpack.c.l.b16 %v443
      %v807 = vunpack.c.l.b16 %v444
      %v808 = vunpack.c.l.b16 %v445
      %v809 = vunpack.c.l.b16 %v446
      %v810 = vunpack.c.l.b16 %v447
      %v811 = vunpack.c.l.b16 %v448
      %v812 = vunpack.c.l.b16 %v449
      %v813 = vunpack.c.l.b16 %v450
      %v814 = vunpack.c.l.b16 %v451
      %v815 = vpack.c.b16 %v800, %v799
      %v816 = vpack.c.b16 %v802, %v801
      %v817 = vpack.c.b16 %v804, %v803
      %v818 = vpack.c.b16 %v806, %v805
      %v819 = vpack.c.b16 %v808, %v807
      %v820 = vpack.c.b16 %v810, %v809
      %v821 = vpack.c.b16 %v812, %v811
      %v822 = vpack.c.b16 %v814, %v813
      %831 = vmatpush.bf16.msra.mxu0 %v822
      %832 = vmatpush.bf16.msra.mxu0 %v821
      %833 = vmatpush.bf16.msra.mxu0 %v820
      %834 = vmatpush.bf16.msra.mxu0 %v819
      %835 = vmatpush.bf16.msra.mxu0 %v818
      %836 = vmatpush.bf16.msra.mxu0 %v817
      %837 = vmatpush.bf16.msra.mxu0 %v816
      %838 = vmatpush.bf16.msra.mxu0 %v815
      %839 = vmatmul.bf16.gmra.mxu0 %v420
      %v840 = vpop.f32.mrf.mxu0
      %v841 = vadd.f32 %v704, %v840
      %v842 = vpop.f32.mrf.mxu0
      %v843 = vadd.f32 %v706, %v842
      %844 = vmatmul.bf16.gmra.mxu0 %v421
      %v845 = vpop.f32.mrf.mxu0
      %v846 = vadd.f32 %v709, %v845
      %v847 = vpop.f32.mrf.mxu0
      %v848 = vadd.f32 %v711, %v847
      %849 = vmatmul.bf16.gmra.mxu0 %v422
      %v850 = vpop.f32.mrf.mxu0
      %v851 = vadd.f32 %v714, %v850
      %v852 = vpop.f32.mrf.mxu0
      %v853 = vadd.f32 %v716, %v852
      %854 = vmatmul.bf16.gmra.mxu0 %v423
      %v855 = vpop.f32.mrf.mxu0
      %v856 = vadd.f32 %v719, %v855
      %v857 = vpop.f32.mrf.mxu0
      %v858 = vadd.f32 %v721, %v857
      %859 = vmatmul.bf16.gmra.mxu0 %v424
      %v860 = vpop.f32.mrf.mxu0
      %v861 = vadd.f32 %v724, %v860
      %v862 = vpop.f32.mrf.mxu0
      %v863 = vadd.f32 %v726, %v862
      %864 = vmatmul.bf16.gmra.mxu0 %v425
      %v865 = vpop.f32.mrf.mxu0
      %v866 = vadd.f32 %v729, %v865
      %v867 = vpop.f32.mrf.mxu0
      %v868 = vadd.f32 %v731, %v867
      %869 = vmatmul.bf16.gmra.mxu0 %v426
      %v870 = vpop.f32.mrf.mxu0
      %v871 = vadd.f32 %v734, %v870
      %v872 = vpop.f32.mrf.mxu0
      %v873 = vadd.f32 %v736, %v872
      %874 = vmatmul.bf16.gmra.mxu0 %v427
      %v875 = vpop.f32.mrf.mxu0
      %v876 = vadd.f32 %v739, %v875
      %v877 = vpop.f32.mrf.mxu0
      %v878 = vadd.f32 %v741, %v877
      %879 = vmatmul.bf16.gmra.mxu0 %v428
      %v880 = vpop.f32.mrf.mxu0
      %v881 = vadd.f32 %v744, %v880
      %v882 = vpop.f32.mrf.mxu0
      %v883 = vadd.f32 %v746, %v882
      %884 = vmatmul.bf16.gmra.mxu0 %v429
      %v885 = vpop.f32.mrf.mxu0
      %v886 = vadd.f32 %v749, %v885
      %v887 = vpop.f32.mrf.mxu0
      %v888 = vadd.f32 %v751, %v887
      %889 = vmatmul.bf16.gmra.mxu0 %v430
      %v890 = vpop.f32.mrf.mxu0
      %v891 = vadd.f32 %v754, %v890
      %v892 = vpop.f32.mrf.mxu0
      %v893 = vadd.f32 %v756, %v892
      %894 = vmatmul.bf16.gmra.mxu0 %v431
      %v895 = vpop.f32.mrf.mxu0
      %v896 = vadd.f32 %v759, %v895
      %v897 = vpop.f32.mrf.mxu0
      %v898 = vadd.f32 %v761, %v897
      %899 = vmatmul.bf16.gmra.mxu0 %v432
      %v900 = vpop.f32.mrf.mxu0
      %v901 = vadd.f32 %v764, %v900
      %v902 = vpop.f32.mrf.mxu0
      %v903 = vadd.f32 %v766, %v902
      %904 = vmatmul.bf16.gmra.mxu0 %v433
      %v905 = vpop.f32.mrf.mxu0
      %v906 = vadd.f32 %v769, %v905
      %v907 = vpop.f32.mrf.mxu0
      %v908 = vadd.f32 %v771, %v907
      %909 = vmatmul.bf16.gmra.mxu0 %v434
      %v910 = vpop.f32.mrf.mxu0
      %v911 = vadd.f32 %v774, %v910
      %v912 = vpop.f32.mrf.mxu0
      %v913 = vadd.f32 %v776, %v912
      %914 = vmatmul.bf16.gmra.mxu0 %v435
      %v915 = vpop.f32.mrf.mxu0
      %v916 = vadd.f32 %v779, %v915
      %v917 = vpop.f32.mrf.mxu0
      %v918 = vadd.f32 %v781, %v917
      %919 = vdwg.mxu0
      %vm920 = vcmask 1045504
      %v921 = vrot.slane %v366, 2
      %v922 = vrot.slane %v367, 2
      %v923 = vsel %vm920, %v921, %v922
      %v924 = vrot.slane %v368, 2
      %v925 = vsel %vm920, %v922, %v924
      %v926 = vrot.slane %v369, 2
      %v927 = vrot.slane %v370, 2
      %v928 = vsel %vm920, %v926, %v927
      %v929 = vrot.slane %v371, 2
      %v930 = vsel %vm920, %v927, %v929
      %v931 = vrot.slane %v372, 2
      %v932 = vrot.slane %v373, 2
      %v933 = vsel %vm920, %v931, %v932
      %v934 = vrot.slane %v374, 2
      %v935 = vsel %vm920, %v932, %v934
      %v936 = vrot.slane %v375, 2
      %v937 = vrot.slane %v376, 2
      %v938 = vsel %vm920, %v936, %v937
      %v939 = vrot.slane %v377, 2
      %v940 = vsel %vm920, %v937, %v939
      %v941 = vrot.slane %v378, 2
      %v942 = vrot.slane %v379, 2
      %v943 = vsel %vm920, %v941, %v942
      %v944 = vrot.slane %v380, 2
      %v945 = vsel %vm920, %v942, %v944
      %v946 = vrot.slane %v381, 2
      %v947 = vrot.slane %v382, 2
      %v948 = vsel %vm920, %v946, %v947
      %v949 = vrot.slane %v383, 2
      %v950 = vsel %vm920, %v947, %v949
      %v951 = vrot.slane %v384, 2
      %v952 = vrot.slane %v385, 2
      %v953 = vsel %vm920, %v951, %v952
      %v954 = vrot.slane %v386, 2
      %v955 = vsel %vm920, %v952, %v954
      %v956 = vrot.slane %v387, 2
      %v957 = vrot.slane %v388, 2
      %v958 = vsel %vm920, %v956, %v957
      %v959 = vrot.slane %v389, 2
      %v960 = vsel %vm920, %v957, %v959
      %v961 = vrot.slane %v390, 2
      %v962 = vrot.slane %v391, 2
      %v963 = vsel %vm920, %v961, %v962
      %v964 = vrot.slane %v392, 2
      %v965 = vsel %vm920, %v962, %v964
      %v966 = vrot.slane %v393, 2
      %v967 = vrot.slane %v394, 2
      %v968 = vsel %vm920, %v966, %v967
      %v969 = vrot.slane %v395, 2
      %v970 = vsel %vm920, %v967, %v969
      %v971 = vrot.slane %v396, 2
      %v972 = vrot.slane %v397, 2
      %v973 = vsel %vm920, %v971, %v972
      %v974 = vrot.slane %v398, 2
      %v975 = vsel %vm920, %v972, %v974
      %v976 = vrot.slane %v399, 2
      %v977 = vrot.slane %v400, 2
      %v978 = vsel %vm920, %v976, %v977
      %v979 = vrot.slane %v401, 2
      %v980 = vsel %vm920, %v977, %v979
      %v981 = vrot.slane %v402, 2
      %v982 = vrot.slane %v403, 2
      %v983 = vsel %vm920, %v981, %v982
      %v984 = vrot.slane %v404, 2
      %v985 = vsel %vm920, %v982, %v984
      %v986 = vrot.slane %v405, 2
      %v987 = vrot.slane %v406, 2
      %v988 = vsel %vm920, %v986, %v987
      %v989 = vrot.slane %v407, 2
      %v990 = vsel %vm920, %v987, %v989
      %v991 = vrot.slane %v408, 2
      %v992 = vrot.slane %v409, 2
      %v993 = vsel %vm920, %v991, %v992
      %v994 = vrot.slane %v410, 2
      %v995 = vsel %vm920, %v992, %v994
      %v996 = vrot.slane %v411, 2
      %v997 = vrot.slane %v412, 2
      %v998 = vsel %vm920, %v996, %v997
      %v999 = vrot.slane %v413, 2
      %v1000 = vsel %vm920, %v997, %v999
      %v1033 = vpack.c.bf16 %v925, %v923
      %v1034 = vpack.c.bf16 %v930, %v928
      %v1035 = vpack.c.bf16 %v935, %v933
      %v1036 = vpack.c.bf16 %v940, %v938
      %v1037 = vpack.c.bf16 %v945, %v943
      %v1038 = vpack.c.bf16 %v950, %v948
      %v1039 = vpack.c.bf16 %v955, %v953
      %v1040 = vpack.c.bf16 %v960, %v958
      %v1041 = vpack.c.bf16 %v965, %v963
      %v1042 = vpack.c.bf16 %v970, %v968
      %v1043 = vpack.c.bf16 %v975, %v973
      %v1044 = vpack.c.bf16 %v980, %v978
      %v1045 = vpack.c.bf16 %v985, %v983
      %v1046 = vpack.c.bf16 %v990, %v988
      %v1047 = vpack.c.bf16 %v995, %v993
      %v1048 = vpack.c.bf16 %v1000, %v998
      %s1049 = scalar_lea.vmem %s1, 128
      %v1050 = vld [vmem:[%s1049] sm:$0xf]
      %v1051 = vld [vmem:[%s1049 + $0x4] sm:$0xf]
      %v1052 = vld [vmem:[%s1049 + $0x8] sm:$0xf]
      %v1053 = vld [vmem:[%s1049 + $0xc] sm:$0xf]
      %v1054 = vld [vmem:[%s1049 + $0x10] sm:$0xf]
      %v1055 = vld [vmem:[%s1049 + $0x14] sm:$0xf]
      %v1056 = vld [vmem:[%s1049 + $0x18] sm:$0xf]
      %v1057 = vld [vmem:[%s1049 + $0x1c] sm:$0xf]
      %v1058 = vld [vmem:[%s1049 + $0x20] sm:$0xf]
      %v1059 = vld [vmem:[%s1049 + $0x24] sm:$0xf]
      %v1060 = vld [vmem:[%s1049 + $0x28] sm:$0xf]
      %v1061 = vld [vmem:[%s1049 + $0x2c] sm:$0xf]
      %v1062 = vld [vmem:[%s1049 + $0x30] sm:$0xf]
      %v1063 = vld [vmem:[%s1049 + $0x34] sm:$0xf]
      %v1064 = vld [vmem:[%s1049 + $0x38] sm:$0xf]
      %v1065 = vld [vmem:[%s1049 + $0x3c] sm:$0xf]
      %v1082 = vunpack.c.l.b16 %v1050
      %v1083 = vunpack.c.l.b16 %v1051
      %v1084 = vunpack.c.l.b16 %v1052
      %v1085 = vunpack.c.l.b16 %v1053
      %v1086 = vunpack.c.l.b16 %v1054
      %v1087 = vunpack.c.l.b16 %v1055
      %v1088 = vunpack.c.l.b16 %v1056
      %v1089 = vunpack.c.l.b16 %v1057
      %v1090 = vunpack.c.l.b16 %v1058
      %v1091 = vunpack.c.l.b16 %v1059
      %v1092 = vunpack.c.l.b16 %v1060
      %v1093 = vunpack.c.l.b16 %v1061
      %v1094 = vunpack.c.l.b16 %v1062
      %v1095 = vunpack.c.l.b16 %v1063
      %v1096 = vunpack.c.l.b16 %v1064
      %v1097 = vunpack.c.l.b16 %v1065
      %v1098 = vpack.c.b16 %v1083, %v1082
      %v1099 = vpack.c.b16 %v1085, %v1084
      %v1100 = vpack.c.b16 %v1087, %v1086
      %v1101 = vpack.c.b16 %v1089, %v1088
      %v1102 = vpack.c.b16 %v1091, %v1090
      %v1103 = vpack.c.b16 %v1093, %v1092
      %v1104 = vpack.c.b16 %v1095, %v1094
      %v1105 = vpack.c.b16 %v1097, %v1096
      %1114 = vmatpush.bf16.msra.mxu0 %v1105
      %1115 = vmatpush.bf16.msra.mxu0 %v1104
      %1116 = vmatpush.bf16.msra.mxu0 %v1103
      %1117 = vmatpush.bf16.msra.mxu0 %v1102
      %1118 = vmatpush.bf16.msra.mxu0 %v1101
      %1119 = vmatpush.bf16.msra.mxu0 %v1100
      %1120 = vmatpush.bf16.msra.mxu0 %v1099
      %1121 = vmatpush.bf16.msra.mxu0 %v1098
      %1122 = vmatmul.bf16.gmra.mxu0 %v1033
      %v1123 = vpop.f32.mrf.mxu0
      %v1124 = vadd.f32 0.0, %v1123
      %v1125 = vpop.f32.mrf.mxu0
      %v1126 = vadd.f32 0.0, %v1125
      %1127 = vmatmul.bf16.gmra.mxu0 %v1034
      %v1128 = vpop.f32.mrf.mxu0
      %v1129 = vadd.f32 0.0, %v1128
      %v1130 = vpop.f32.mrf.mxu0
      %v1131 = vadd.f32 0.0, %v1130
      %1132 = vmatmul.bf16.gmra.mxu0 %v1035
      %v1133 = vpop.f32.mrf.mxu0
      %v1134 = vadd.f32 0.0, %v1133
      %v1135 = vpop.f32.mrf.mxu0
      %v1136 = vadd.f32 0.0, %v1135
      %1137 = vmatmul.bf16.gmra.mxu0 %v1036
      %v1138 = vpop.f32.mrf.mxu0
      %v1139 = vadd.f32 0.0, %v1138
      %v1140 = vpop.f32.mrf.mxu0
      %v1141 = vadd.f32 0.0, %v1140
      %1142 = vmatmul.bf16.gmra.mxu0 %v1037
      %v1143 = vpop.f32.mrf.mxu0
      %v1144 = vadd.f32 0.0, %v1143
      %v1145 = vpop.f32.mrf.mxu0
      %v1146 = vadd.f32 0.0, %v1145
      %1147 = vmatmul.bf16.gmra.mxu0 %v1038
      %v1148 = vpop.f32.mrf.mxu0
      %v1149 = vadd.f32 0.0, %v1148
      %v1150 = vpop.f32.mrf.mxu0
      %v1151 = vadd.f32 0.0, %v1150
      %1152 = vmatmul.bf16.gmra.mxu0 %v1039
      %v1153 = vpop.f32.mrf.mxu0
      %v1154 = vadd.f32 0.0, %v1153
      %v1155 = vpop.f32.mrf.mxu0
      %v1156 = vadd.f32 0.0, %v1155
      %1157 = vmatmul.bf16.gmra.mxu0 %v1040
      %v1158 = vpop.f32.mrf.mxu0
      %v1159 = vadd.f32 0.0, %v1158
      %v1160 = vpop.f32.mrf.mxu0
      %v1161 = vadd.f32 0.0, %v1160
      %1162 = vmatmul.bf16.gmra.mxu0 %v1041
      %v1163 = vpop.f32.mrf.mxu0
      %v1164 = vadd.f32 0.0, %v1163
      %v1165 = vpop.f32.mrf.mxu0
      %v1166 = vadd.f32 0.0, %v1165
      %1167 = vmatmul.bf16.gmra.mxu0 %v1042
      %v1168 = vpop.f32.mrf.mxu0
      %v1169 = vadd.f32 0.0, %v1168
      %v1170 = vpop.f32.mrf.mxu0
      %v1171 = vadd.f32 0.0, %v1170
      %1172 = vmatmul.bf16.gmra.mxu0 %v1043
      %v1173 = vpop.f32.mrf.mxu0
      %v1174 = vadd.f32 0.0, %v1173
      %v1175 = vpop.f32.mrf.mxu0
      %v1176 = vadd.f32 0.0, %v1175
      %1177 = vmatmul.bf16.gmra.mxu0 %v1044
      %v1178 = vpop.f32.mrf.mxu0
      %v1179 = vadd.f32 0.0, %v1178
      %v1180 = vpop.f32.mrf.mxu0
      %v1181 = vadd.f32 0.0, %v1180
      %1182 = vmatmul.bf16.gmra.mxu0 %v1045
      %v1183 = vpop.f32.mrf.mxu0
      %v1184 = vadd.f32 0.0, %v1183
      %v1185 = vpop.f32.mrf.mxu0
      %v1186 = vadd.f32 0.0, %v1185
      %1187 = vmatmul.bf16.gmra.mxu0 %v1046
      %v1188 = vpop.f32.mrf.mxu0
      %v1189 = vadd.f32 0.0, %v1188
      %v1190 = vpop.f32.mrf.mxu0
      %v1191 = vadd.f32 0.0, %v1190
      %1192 = vmatmul.bf16.gmra.mxu0 %v1047
      %v1193 = vpop.f32.mrf.mxu0
      %v1194 = vadd.f32 0.0, %v1193
      %v1195 = vpop.f32.mrf.mxu0
      %v1196 = vadd.f32 0.0, %v1195
      %1197 = vmatmul.bf16.gmra.mxu0 %v1048
      %v1198 = vpop.f32.mrf.mxu0
      %v1199 = vadd.f32 0.0, %v1198
      %v1200 = vpop.f32.mrf.mxu0
      %v1201 = vadd.f32 0.0, %v1200
      %1202 = vdwg.mxu0
      %v1203 = vadd.f32 %v841, %v1124
      %v1204 = vadd.f32 %v843, %v1126
      %v1205 = vadd.f32 %v846, %v1129
      %v1206 = vadd.f32 %v848, %v1131
      %v1207 = vadd.f32 %v851, %v1134
      %v1208 = vadd.f32 %v853, %v1136
      %v1209 = vadd.f32 %v856, %v1139
      %v1210 = vadd.f32 %v858, %v1141
      %v1211 = vadd.f32 %v861, %v1144
      %v1212 = vadd.f32 %v863, %v1146
      %v1213 = vadd.f32 %v866, %v1149
      %v1214 = vadd.f32 %v868, %v1151
      %v1215 = vadd.f32 %v871, %v1154
      %v1216 = vadd.f32 %v873, %v1156
      %v1217 = vadd.f32 %v876, %v1159
      %v1218 = vadd.f32 %v878, %v1161
      %v1219 = vadd.f32 %v881, %v1164
      %v1220 = vadd.f32 %v883, %v1166
      %v1221 = vadd.f32 %v886, %v1169
      %v1222 = vadd.f32 %v888, %v1171
      %v1223 = vadd.f32 %v891, %v1174
      %v1224 = vadd.f32 %v893, %v1176
      %v1225 = vadd.f32 %v896, %v1179
      %v1226 = vadd.f32 %v898, %v1181
      %v1227 = vadd.f32 %v901, %v1184
      %v1228 = vadd.f32 %v903, %v1186
      %v1229 = vadd.f32 %v906, %v1189
      %v1230 = vadd.f32 %v908, %v1191
      %v1231 = vadd.f32 %v911, %v1194
      %v1232 = vadd.f32 %v913, %v1196
      %v1233 = vadd.f32 %v916, %v1199
      %v1234 = vadd.f32 %v918, %v1201
      %v1235 = vpack.c.bf16 %v415, %v414
      %s1236 = scalar_lea.vmem %s1, 192
      %v1237 = vld [vmem:[%s1236] sm:$0xf]
      %v1238 = vld [vmem:[%s1236 + $0x4] sm:$0xf]
      %v1239 = vld [vmem:[%s1236 + $0x8] sm:$0xf]
      %v1240 = vld [vmem:[%s1236 + $0xc] sm:$0xf]
      %v1241 = vld [vmem:[%s1236 + $0x10] sm:$0xf]
      %v1242 = vld [vmem:[%s1236 + $0x14] sm:$0xf]
      %v1243 = vld [vmem:[%s1236 + $0x18] sm:$0xf]
      %v1244 = vld [vmem:[%s1236 + $0x1c] sm:$0xf]
      %v1245 = vld [vmem:[%s1236 + $0x20] sm:$0xf]
      %v1246 = vld [vmem:[%s1236 + $0x24] sm:$0xf]
      %v1247 = vld [vmem:[%s1236 + $0x28] sm:$0xf]
      %v1248 = vld [vmem:[%s1236 + $0x2c] sm:$0xf]
      %v1249 = vld [vmem:[%s1236 + $0x30] sm:$0xf]
      %v1250 = vld [vmem:[%s1236 + $0x34] sm:$0xf]
      %v1251 = vld [vmem:[%s1236 + $0x38] sm:$0xf]
      %v1252 = vld [vmem:[%s1236 + $0x3c] sm:$0xf]
      %v1269 = vunpack.c.l.b16 %v1237
      %v1270 = vunpack.c.l.b16 %v1238
      %v1271 = vunpack.c.l.b16 %v1239
      %v1272 = vunpack.c.l.b16 %v1240
      %v1273 = vunpack.c.l.b16 %v1241
      %v1274 = vunpack.c.l.b16 %v1242
      %v1275 = vunpack.c.l.b16 %v1243
      %v1276 = vunpack.c.l.b16 %v1244
      %v1277 = vunpack.c.l.b16 %v1245
      %v1278 = vunpack.c.l.b16 %v1246
      %v1279 = vunpack.c.l.b16 %v1247
      %v1280 = vunpack.c.l.b16 %v1248
      %v1281 = vunpack.c.l.b16 %v1249
      %v1282 = vunpack.c.l.b16 %v1250
      %v1283 = vunpack.c.l.b16 %v1251
      %v1284 = vunpack.c.l.b16 %v1252
      %v1285 = vpack.c.b16 %v1270, %v1269
      %v1286 = vpack.c.b16 %v1272, %v1271
      %v1287 = vpack.c.b16 %v1274, %v1273
      %v1288 = vpack.c.b16 %v1276, %v1275
      %v1289 = vpack.c.b16 %v1278, %v1277
      %v1290 = vpack.c.b16 %v1280, %v1279
      %v1291 = vpack.c.b16 %v1282, %v1281
      %v1292 = vpack.c.b16 %v1284, %v1283
      %1301 = vmatpush.bf16.msra.mxu0 %v1292
      %1302 = vmatpush.bf16.msra.mxu0 %v1291
      %1303 = vmatpush.bf16.msra.mxu0 %v1290
      %1304 = vmatpush.bf16.msra.mxu0 %v1289
      %1305 = vmatpush.bf16.msra.mxu0 %v1288
      %1306 = vmatpush.bf16.msra.mxu0 %v1287
      %1307 = vmatpush.bf16.msra.mxu0 %v1286
      %1308 = vmatpush.bf16.msra.mxu0 %v1285
      %1309 = vmatmul.bf16.gmra.mxu0 %v421
      %v1310 = vpop.f32.mrf.mxu0
      %v1311 = vadd.f32 0.0, %v1310
      %v1312 = vpop.f32.mrf.mxu0
      %v1313 = vadd.f32 0.0, %v1312
      %1314 = vmatmul.bf16.gmra.mxu0 %v422
      %v1315 = vpop.f32.mrf.mxu0
      %v1316 = vadd.f32 0.0, %v1315
      %v1317 = vpop.f32.mrf.mxu0
      %v1318 = vadd.f32 0.0, %v1317
      %1319 = vmatmul.bf16.gmra.mxu0 %v423
      %v1320 = vpop.f32.mrf.mxu0
      %v1321 = vadd.f32 0.0, %v1320
      %v1322 = vpop.f32.mrf.mxu0
      %v1323 = vadd.f32 0.0, %v1322
      %1324 = vmatmul.bf16.gmra.mxu0 %v424
      %v1325 = vpop.f32.mrf.mxu0
      %v1326 = vadd.f32 0.0, %v1325
      %v1327 = vpop.f32.mrf.mxu0
      %v1328 = vadd.f32 0.0, %v1327
      %1329 = vmatmul.bf16.gmra.mxu0 %v425
      %v1330 = vpop.f32.mrf.mxu0
      %v1331 = vadd.f32 0.0, %v1330
      %v1332 = vpop.f32.mrf.mxu0
      %v1333 = vadd.f32 0.0, %v1332
      %1334 = vmatmul.bf16.gmra.mxu0 %v426
      %v1335 = vpop.f32.mrf.mxu0
      %v1336 = vadd.f32 0.0, %v1335
      %v1337 = vpop.f32.mrf.mxu0
      %v1338 = vadd.f32 0.0, %v1337
      %1339 = vmatmul.bf16.gmra.mxu0 %v427
      %v1340 = vpop.f32.mrf.mxu0
      %v1341 = vadd.f32 0.0, %v1340
      %v1342 = vpop.f32.mrf.mxu0
      %v1343 = vadd.f32 0.0, %v1342
      %1344 = vmatmul.bf16.gmra.mxu0 %v428
      %v1345 = vpop.f32.mrf.mxu0
      %v1346 = vadd.f32 0.0, %v1345
      %v1347 = vpop.f32.mrf.mxu0
      %v1348 = vadd.f32 0.0, %v1347
      %1349 = vmatmul.bf16.gmra.mxu0 %v429
      %v1350 = vpop.f32.mrf.mxu0
      %v1351 = vadd.f32 0.0, %v1350
      %v1352 = vpop.f32.mrf.mxu0
      %v1353 = vadd.f32 0.0, %v1352
      %1354 = vmatmul.bf16.gmra.mxu0 %v430
      %v1355 = vpop.f32.mrf.mxu0
      %v1356 = vadd.f32 0.0, %v1355
      %v1357 = vpop.f32.mrf.mxu0
      %v1358 = vadd.f32 0.0, %v1357
      %1359 = vmatmul.bf16.gmra.mxu0 %v431
      %v1360 = vpop.f32.mrf.mxu0
      %v1361 = vadd.f32 0.0, %v1360
      %v1362 = vpop.f32.mrf.mxu0
      %v1363 = vadd.f32 0.0, %v1362
      %1364 = vmatmul.bf16.gmra.mxu0 %v432
      %v1365 = vpop.f32.mrf.mxu0
      %v1366 = vadd.f32 0.0, %v1365
      %v1367 = vpop.f32.mrf.mxu0
      %v1368 = vadd.f32 0.0, %v1367
      %1369 = vmatmul.bf16.gmra.mxu0 %v433
      %v1370 = vpop.f32.mrf.mxu0
      %v1371 = vadd.f32 0.0, %v1370
      %v1372 = vpop.f32.mrf.mxu0
      %v1373 = vadd.f32 0.0, %v1372
      %1374 = vmatmul.bf16.gmra.mxu0 %v434
      %v1375 = vpop.f32.mrf.mxu0
      %v1376 = vadd.f32 0.0, %v1375
      %v1377 = vpop.f32.mrf.mxu0
      %v1378 = vadd.f32 0.0, %v1377
      %1379 = vmatmul.bf16.gmra.mxu0 %v435
      %v1380 = vpop.f32.mrf.mxu0
      %v1381 = vadd.f32 0.0, %v1380
      %v1382 = vpop.f32.mrf.mxu0
      %v1383 = vadd.f32 0.0, %v1382
      %1384 = vmatmul.bf16.gmra.mxu0 %v1235
      %v1385 = vpop.f32.mrf.mxu0
      %v1386 = vadd.f32 0.0, %v1385
      %v1387 = vpop.f32.mrf.mxu0
      %v1388 = vadd.f32 0.0, %v1387
      %1389 = vdwg.mxu0
      %v1390 = vadd.f32 %v1203, %v1311
      %v1391 = vadd.f32 %v1204, %v1313
      %v1392 = vadd.f32 %v1205, %v1316
      %v1393 = vadd.f32 %v1206, %v1318
      %v1394 = vadd.f32 %v1207, %v1321
      %v1395 = vadd.f32 %v1208, %v1323
      %v1396 = vadd.f32 %v1209, %v1326
      %v1397 = vadd.f32 %v1210, %v1328
      %v1398 = vadd.f32 %v1211, %v1331
      %v1399 = vadd.f32 %v1212, %v1333
      %v1400 = vadd.f32 %v1213, %v1336
      %v1401 = vadd.f32 %v1214, %v1338
      %v1402 = vadd.f32 %v1215, %v1341
      %v1403 = vadd.f32 %v1216, %v1343
      %v1404 = vadd.f32 %v1217, %v1346
      %v1405 = vadd.f32 %v1218, %v1348
      %v1406 = vadd.f32 %v1219, %v1351
      %v1407 = vadd.f32 %v1220, %v1353
      %v1408 = vadd.f32 %v1221, %v1356
      %v1409 = vadd.f32 %v1222, %v1358
      %v1410 = vadd.f32 %v1223, %v1361
      %v1411 = vadd.f32 %v1224, %v1363
      %v1412 = vadd.f32 %v1225, %v1366
      %v1413 = vadd.f32 %v1226, %v1368
      %v1414 = vadd.f32 %v1227, %v1371
      %v1415 = vadd.f32 %v1228, %v1373
      %v1416 = vadd.f32 %v1229, %v1376
      %v1417 = vadd.f32 %v1230, %v1378
      %v1418 = vadd.f32 %v1231, %v1381
      %v1419 = vadd.f32 %v1232, %v1383
      %v1420 = vadd.f32 %v1233, %v1386
      %v1421 = vadd.f32 %v1234, %v1388
      %v1425 = vrot.slane %v414, 1
      %v1426 = vrot.slane %v415, 1
      %v1427 = vsel %vm500, %v1425, %v1426
      %v1428 = vrot.slane %v416, 1
      %v1429 = vsel %vm500, %v1426, %v1428
      %v1432 = vpack.c.bf16 %v1429, %v1427
      %s1433 = scalar_lea.vmem %s1, 256
      %v1434 = vld [vmem:[%s1433] sm:$0xf]
      %v1435 = vld [vmem:[%s1433 + $0x4] sm:$0xf]
      %v1436 = vld [vmem:[%s1433 + $0x8] sm:$0xf]
      %v1437 = vld [vmem:[%s1433 + $0xc] sm:$0xf]
      %v1438 = vld [vmem:[%s1433 + $0x10] sm:$0xf]
      %v1439 = vld [vmem:[%s1433 + $0x14] sm:$0xf]
      %v1440 = vld [vmem:[%s1433 + $0x18] sm:$0xf]
      %v1441 = vld [vmem:[%s1433 + $0x1c] sm:$0xf]
      %v1442 = vld [vmem:[%s1433 + $0x20] sm:$0xf]
      %v1443 = vld [vmem:[%s1433 + $0x24] sm:$0xf]
      %v1444 = vld [vmem:[%s1433 + $0x28] sm:$0xf]
      %v1445 = vld [vmem:[%s1433 + $0x2c] sm:$0xf]
      %v1446 = vld [vmem:[%s1433 + $0x30] sm:$0xf]
      %v1447 = vld [vmem:[%s1433 + $0x34] sm:$0xf]
      %v1448 = vld [vmem:[%s1433 + $0x38] sm:$0xf]
      %v1449 = vld [vmem:[%s1433 + $0x3c] sm:$0xf]
      %v1466 = vunpack.c.l.b16 %v1434
      %v1467 = vunpack.c.l.b16 %v1435
      %v1468 = vunpack.c.l.b16 %v1436
      %v1469 = vunpack.c.l.b16 %v1437
      %v1470 = vunpack.c.l.b16 %v1438
      %v1471 = vunpack.c.l.b16 %v1439
      %v1472 = vunpack.c.l.b16 %v1440
      %v1473 = vunpack.c.l.b16 %v1441
      %v1474 = vunpack.c.l.b16 %v1442
      %v1475 = vunpack.c.l.b16 %v1443
      %v1476 = vunpack.c.l.b16 %v1444
      %v1477 = vunpack.c.l.b16 %v1445
      %v1478 = vunpack.c.l.b16 %v1446
      %v1479 = vunpack.c.l.b16 %v1447
      %v1480 = vunpack.c.l.b16 %v1448
      %v1481 = vunpack.c.l.b16 %v1449
      %v1482 = vpack.c.b16 %v1467, %v1466
      %v1483 = vpack.c.b16 %v1469, %v1468
      %v1484 = vpack.c.b16 %v1471, %v1470
      %v1485 = vpack.c.b16 %v1473, %v1472
      %v1486 = vpack.c.b16 %v1475, %v1474
      %v1487 = vpack.c.b16 %v1477, %v1476
      %v1488 = vpack.c.b16 %v1479, %v1478
      %v1489 = vpack.c.b16 %v1481, %v1480
      %1498 = vmatpush.bf16.msra.mxu0 %v1489
      %1499 = vmatpush.bf16.msra.mxu0 %v1488
      %1500 = vmatpush.bf16.msra.mxu0 %v1487
      %1501 = vmatpush.bf16.msra.mxu0 %v1486
      %1502 = vmatpush.bf16.msra.mxu0 %v1485
      %1503 = vmatpush.bf16.msra.mxu0 %v1484
      %1504 = vmatpush.bf16.msra.mxu0 %v1483
      %1505 = vmatpush.bf16.msra.mxu0 %v1482
      %1506 = vmatmul.bf16.gmra.mxu0 %v614
      %v1507 = vpop.f32.mrf.mxu0
      %v1508 = vadd.f32 0.0, %v1507
      %v1509 = vpop.f32.mrf.mxu0
      %v1510 = vadd.f32 0.0, %v1509
      %1511 = vmatmul.bf16.gmra.mxu0 %v615
      %v1512 = vpop.f32.mrf.mxu0
      %v1513 = vadd.f32 0.0, %v1512
      %v1514 = vpop.f32.mrf.mxu0
      %v1515 = vadd.f32 0.0, %v1514
      %1516 = vmatmul.bf16.gmra.mxu0 %v616
      %v1517 = vpop.f32.mrf.mxu0
      %v1518 = vadd.f32 0.0, %v1517
      %v1519 = vpop.f32.mrf.mxu0
      %v1520 = vadd.f32 0.0, %v1519
      %1521 = vmatmul.bf16.gmra.mxu0 %v617
      %v1522 = vpop.f32.mrf.mxu0
      %v1523 = vadd.f32 0.0, %v1522
      %v1524 = vpop.f32.mrf.mxu0
      %v1525 = vadd.f32 0.0, %v1524
      %1526 = vmatmul.bf16.gmra.mxu0 %v618
      %v1527 = vpop.f32.mrf.mxu0
      %v1528 = vadd.f32 0.0, %v1527
      %v1529 = vpop.f32.mrf.mxu0
      %v1530 = vadd.f32 0.0, %v1529
      %1531 = vmatmul.bf16.gmra.mxu0 %v619
      %v1532 = vpop.f32.mrf.mxu0
      %v1533 = vadd.f32 0.0, %v1532
      %v1534 = vpop.f32.mrf.mxu0
      %v1535 = vadd.f32 0.0, %v1534
      %1536 = vmatmul.bf16.gmra.mxu0 %v620
      %v1537 = vpop.f32.mrf.mxu0
      %v1538 = vadd.f32 0.0, %v1537
      %v1539 = vpop.f32.mrf.mxu0
      %v1540 = vadd.f32 0.0, %v1539
      %1541 = vmatmul.bf16.gmra.mxu0 %v621
      %v1542 = vpop.f32.mrf.mxu0
      %v1543 = vadd.f32 0.0, %v1542
      %v1544 = vpop.f32.mrf.mxu0
      %v1545 = vadd.f32 0.0, %v1544
      %1546 = vmatmul.bf16.gmra.mxu0 %v622
      %v1547 = vpop.f32.mrf.mxu0
      %v1548 = vadd.f32 0.0, %v1547
      %v1549 = vpop.f32.mrf.mxu0
      %v1550 = vadd.f32 0.0, %v1549
      %1551 = vmatmul.bf16.gmra.mxu0 %v623
      %v1552 = vpop.f32.mrf.mxu0
      %v1553 = vadd.f32 0.0, %v1552
      %v1554 = vpop.f32.mrf.mxu0
      %v1555 = vadd.f32 0.0, %v1554
      %1556 = vmatmul.bf16.gmra.mxu0 %v624
      %v1557 = vpop.f32.mrf.mxu0
      %v1558 = vadd.f32 0.0, %v1557
      %v1559 = vpop.f32.mrf.mxu0
      %v1560 = vadd.f32 0.0, %v1559
      %1561 = vmatmul.bf16.gmra.mxu0 %v625
      %v1562 = vpop.f32.mrf.mxu0
      %v1563 = vadd.f32 0.0, %v1562
      %v1564 = vpop.f32.mrf.mxu0
      %v1565 = vadd.f32 0.0, %v1564
      %1566 = vmatmul.bf16.gmra.mxu0 %v626
      %v1567 = vpop.f32.mrf.mxu0
      %v1568 = vadd.f32 0.0, %v1567
      %v1569 = vpop.f32.mrf.mxu0
      %v1570 = vadd.f32 0.0, %v1569
      %1571 = vmatmul.bf16.gmra.mxu0 %v627
      %v1572 = vpop.f32.mrf.mxu0
      %v1573 = vadd.f32 0.0, %v1572
      %v1574 = vpop.f32.mrf.mxu0
      %v1575 = vadd.f32 0.0, %v1574
      %1576 = vmatmul.bf16.gmra.mxu0 %v628
      %v1577 = vpop.f32.mrf.mxu0
      %v1578 = vadd.f32 0.0, %v1577
      %v1579 = vpop.f32.mrf.mxu0
      %v1580 = vadd.f32 0.0, %v1579
      %1581 = vmatmul.bf16.gmra.mxu0 %v1432
      %v1582 = vpop.f32.mrf.mxu0
      %v1583 = vadd.f32 0.0, %v1582
      %v1584 = vpop.f32.mrf.mxu0
      %v1585 = vadd.f32 0.0, %v1584
      %1586 = vdwg.mxu0
      %v1587 = vadd.f32 %v1390, %v1508
      %v1588 = vadd.f32 %v1391, %v1510
      %v1589 = vadd.f32 %v1392, %v1513
      %v1590 = vadd.f32 %v1393, %v1515
      %v1591 = vadd.f32 %v1394, %v1518
      %v1592 = vadd.f32 %v1395, %v1520
      %v1593 = vadd.f32 %v1396, %v1523
      %v1594 = vadd.f32 %v1397, %v1525
      %v1595 = vadd.f32 %v1398, %v1528
      %v1596 = vadd.f32 %v1399, %v1530
      %v1597 = vadd.f32 %v1400, %v1533
      %v1598 = vadd.f32 %v1401, %v1535
      %v1599 = vadd.f32 %v1402, %v1538
      %v1600 = vadd.f32 %v1403, %v1540
      %v1601 = vadd.f32 %v1404, %v1543
      %v1602 = vadd.f32 %v1405, %v1545
      %v1603 = vadd.f32 %v1406, %v1548
      %v1604 = vadd.f32 %v1407, %v1550
      %v1605 = vadd.f32 %v1408, %v1553
      %v1606 = vadd.f32 %v1409, %v1555
      %v1607 = vadd.f32 %v1410, %v1558
      %v1608 = vadd.f32 %v1411, %v1560
      %v1609 = vadd.f32 %v1412, %v1563
      %v1610 = vadd.f32 %v1413, %v1565
      %v1611 = vadd.f32 %v1414, %v1568
      %v1612 = vadd.f32 %v1415, %v1570
      %v1613 = vadd.f32 %v1416, %v1573
      %v1614 = vadd.f32 %v1417, %v1575
      %v1615 = vadd.f32 %v1418, %v1578
      %v1616 = vadd.f32 %v1419, %v1580
      %v1617 = vadd.f32 %v1420, %v1583
      %v1618 = vadd.f32 %v1421, %v1585
      %v1619 = vrot.slane %v414, 2
      %v1620 = vrot.slane %v415, 2
      %v1621 = vsel %vm920, %v1619, %v1620
      %v1622 = vrot.slane %v416, 2
      %v1623 = vsel %vm920, %v1620, %v1622
      %v1626 = vpack.c.bf16 %v1623, %v1621
      %s1627 = scalar_lea.vmem %s1, 320
      %v1628 = vld [vmem:[%s1627] sm:$0xf]
      %v1629 = vld [vmem:[%s1627 + $0x4] sm:$0xf]
      %v1630 = vld [vmem:[%s1627 + $0x8] sm:$0xf]
      %v1631 = vld [vmem:[%s1627 + $0xc] sm:$0xf]
      %v1632 = vld [vmem:[%s1627 + $0x10] sm:$0xf]
      %v1633 = vld [vmem:[%s1627 + $0x14] sm:$0xf]
      %v1634 = vld [vmem:[%s1627 + $0x18] sm:$0xf]
      %v1635 = vld [vmem:[%s1627 + $0x1c] sm:$0xf]
      %v1636 = vld [vmem:[%s1627 + $0x20] sm:$0xf]
      %v1637 = vld [vmem:[%s1627 + $0x24] sm:$0xf]
      %v1638 = vld [vmem:[%s1627 + $0x28] sm:$0xf]
      %v1639 = vld [vmem:[%s1627 + $0x2c] sm:$0xf]
      %v1640 = vld [vmem:[%s1627 + $0x30] sm:$0xf]
      %v1641 = vld [vmem:[%s1627 + $0x34] sm:$0xf]
      %v1642 = vld [vmem:[%s1627 + $0x38] sm:$0xf]
      %v1643 = vld [vmem:[%s1627 + $0x3c] sm:$0xf]
      %v1660 = vunpack.c.l.b16 %v1628
      %v1661 = vunpack.c.l.b16 %v1629
      %v1662 = vunpack.c.l.b16 %v1630
      %v1663 = vunpack.c.l.b16 %v1631
      %v1664 = vunpack.c.l.b16 %v1632
      %v1665 = vunpack.c.l.b16 %v1633
      %v1666 = vunpack.c.l.b16 %v1634
      %v1667 = vunpack.c.l.b16 %v1635
      %v1668 = vunpack.c.l.b16 %v1636
      %v1669 = vunpack.c.l.b16 %v1637
      %v1670 = vunpack.c.l.b16 %v1638
      %v1671 = vunpack.c.l.b16 %v1639
      %v1672 = vunpack.c.l.b16 %v1640
      %v1673 = vunpack.c.l.b16 %v1641
      %v1674 = vunpack.c.l.b16 %v1642
      %v1675 = vunpack.c.l.b16 %v1643
      %v1676 = vpack.c.b16 %v1661, %v1660
      %v1677 = vpack.c.b16 %v1663, %v1662
      %v1678 = vpack.c.b16 %v1665, %v1664
      %v1679 = vpack.c.b16 %v1667, %v1666
      %v1680 = vpack.c.b16 %v1669, %v1668
      %v1681 = vpack.c.b16 %v1671, %v1670
      %v1682 = vpack.c.b16 %v1673, %v1672
      %v1683 = vpack.c.b16 %v1675, %v1674
      %1692 = vmatpush.bf16.msra.mxu0 %v1683
      %1693 = vmatpush.bf16.msra.mxu0 %v1682
      %1694 = vmatpush.bf16.msra.mxu0 %v1681
      %1695 = vmatpush.bf16.msra.mxu0 %v1680
      %1696 = vmatpush.bf16.msra.mxu0 %v1679
      %1697 = vmatpush.bf16.msra.mxu0 %v1678
      %1698 = vmatpush.bf16.msra.mxu0 %v1677
      %1699 = vmatpush.bf16.msra.mxu0 %v1676
      %1700 = vmatmul.bf16.gmra.mxu0 %v1034
      %v1701 = vpop.f32.mrf.mxu0
      %v1702 = vadd.f32 0.0, %v1701
      %v1703 = vpop.f32.mrf.mxu0
      %v1704 = vadd.f32 0.0, %v1703
      %1705 = vmatmul.bf16.gmra.mxu0 %v1035
      %v1706 = vpop.f32.mrf.mxu0
      %v1707 = vadd.f32 0.0, %v1706
      %v1708 = vpop.f32.mrf.mxu0
      %v1709 = vadd.f32 0.0, %v1708
      %1710 = vmatmul.bf16.gmra.mxu0 %v1036
      %v1711 = vpop.f32.mrf.mxu0
      %v1712 = vadd.f32 0.0, %v1711
      %v1713 = vpop.f32.mrf.mxu0
      %v1714 = vadd.f32 0.0, %v1713
      %1715 = vmatmul.bf16.gmra.mxu0 %v1037
      %v1716 = vpop.f32.mrf.mxu0
      %v1717 = vadd.f32 0.0, %v1716
      %v1718 = vpop.f32.mrf.mxu0
      %v1719 = vadd.f32 0.0, %v1718
      %1720 = vmatmul.bf16.gmra.mxu0 %v1038
      %v1721 = vpop.f32.mrf.mxu0
      %v1722 = vadd.f32 0.0, %v1721
      %v1723 = vpop.f32.mrf.mxu0
      %v1724 = vadd.f32 0.0, %v1723
      %1725 = vmatmul.bf16.gmra.mxu0 %v1039
      %v1726 = vpop.f32.mrf.mxu0
      %v1727 = vadd.f32 0.0, %v1726
      %v1728 = vpop.f32.mrf.mxu0
      %v1729 = vadd.f32 0.0, %v1728
      %1730 = vmatmul.bf16.gmra.mxu0 %v1040
      %v1731 = vpop.f32.mrf.mxu0
      %v1732 = vadd.f32 0.0, %v1731
      %v1733 = vpop.f32.mrf.mxu0
      %v1734 = vadd.f32 0.0, %v1733
      %1735 = vmatmul.bf16.gmra.mxu0 %v1041
      %v1736 = vpop.f32.mrf.mxu0
      %v1737 = vadd.f32 0.0, %v1736
      %v1738 = vpop.f32.mrf.mxu0
      %v1739 = vadd.f32 0.0, %v1738
      %1740 = vmatmul.bf16.gmra.mxu0 %v1042
      %v1741 = vpop.f32.mrf.mxu0
      %v1742 = vadd.f32 0.0, %v1741
      %v1743 = vpop.f32.mrf.mxu0
      %v1744 = vadd.f32 0.0, %v1743
      %1745 = vmatmul.bf16.gmra.mxu0 %v1043
      %v1746 = vpop.f32.mrf.mxu0
      %v1747 = vadd.f32 0.0, %v1746
      %v1748 = vpop.f32.mrf.mxu0
      %v1749 = vadd.f32 0.0, %v1748
      %1750 = vmatmul.bf16.gmra.mxu0 %v1044
      %v1751 = vpop.f32.mrf.mxu0
      %v1752 = vadd.f32 0.0, %v1751
      %v1753 = vpop.f32.mrf.mxu0
      %v1754 = vadd.f32 0.0, %v1753
      %1755 = vmatmul.bf16.gmra.mxu0 %v1045
      %v1756 = vpop.f32.mrf.mxu0
      %v1757 = vadd.f32 0.0, %v1756
      %v1758 = vpop.f32.mrf.mxu0
      %v1759 = vadd.f32 0.0, %v1758
      %1760 = vmatmul.bf16.gmra.mxu0 %v1046
      %v1761 = vpop.f32.mrf.mxu0
      %v1762 = vadd.f32 0.0, %v1761
      %v1763 = vpop.f32.mrf.mxu0
      %v1764 = vadd.f32 0.0, %v1763
      %1765 = vmatmul.bf16.gmra.mxu0 %v1047
      %v1766 = vpop.f32.mrf.mxu0
      %v1767 = vadd.f32 0.0, %v1766
      %v1768 = vpop.f32.mrf.mxu0
      %v1769 = vadd.f32 0.0, %v1768
      %1770 = vmatmul.bf16.gmra.mxu0 %v1048
      %v1771 = vpop.f32.mrf.mxu0
      %v1772 = vadd.f32 0.0, %v1771
      %v1773 = vpop.f32.mrf.mxu0
      %v1774 = vadd.f32 0.0, %v1773
      %1775 = vmatmul.bf16.gmra.mxu0 %v1626
      %v1776 = vpop.f32.mrf.mxu0
      %v1777 = vadd.f32 0.0, %v1776
      %v1778 = vpop.f32.mrf.mxu0
      %v1779 = vadd.f32 0.0, %v1778
      %1780 = vdwg.mxu0
      %v1781 = vadd.f32 %v1587, %v1702
      %v1782 = vadd.f32 %v1588, %v1704
      %v1783 = vadd.f32 %v1589, %v1707
      %v1784 = vadd.f32 %v1590, %v1709
      %v1785 = vadd.f32 %v1591, %v1712
      %v1786 = vadd.f32 %v1592, %v1714
      %v1787 = vadd.f32 %v1593, %v1717
      %v1788 = vadd.f32 %v1594, %v1719
      %v1789 = vadd.f32 %v1595, %v1722
      %v1790 = vadd.f32 %v1596, %v1724
      %v1791 = vadd.f32 %v1597, %v1727
      %v1792 = vadd.f32 %v1598, %v1729
      %v1793 = vadd.f32 %v1599, %v1732
      %v1794 = vadd.f32 %v1600, %v1734
      %v1795 = vadd.f32 %v1601, %v1737
      %v1796 = vadd.f32 %v1602, %v1739
      %v1797 = vadd.f32 %v1603, %v1742
      %v1798 = vadd.f32 %v1604, %v1744
      %v1799 = vadd.f32 %v1605, %v1747
      %v1800 = vadd.f32 %v1606, %v1749
      %v1801 = vadd.f32 %v1607, %v1752
      %v1802 = vadd.f32 %v1608, %v1754
      %v1803 = vadd.f32 %v1609, %v1757
      %v1804 = vadd.f32 %v1610, %v1759
      %v1805 = vadd.f32 %v1611, %v1762
      %v1806 = vadd.f32 %v1612, %v1764
      %v1807 = vadd.f32 %v1613, %v1767
      %v1808 = vadd.f32 %v1614, %v1769
      %v1809 = vadd.f32 %v1615, %v1772
      %v1810 = vadd.f32 %v1616, %v1774
      %v1811 = vadd.f32 %v1617, %v1777
      %v1812 = vadd.f32 %v1618, %v1779
      %v1813 = vpack.c.bf16 %v418, %v417
      %s1814 = scalar_lea.vmem %s1, 384
      %v1815 = vld [vmem:[%s1814] sm:$0xf]
      %v1816 = vld [vmem:[%s1814 + $0x4] sm:$0xf]
      %v1817 = vld [vmem:[%s1814 + $0x8] sm:$0xf]
      %v1818 = vld [vmem:[%s1814 + $0xc] sm:$0xf]
      %v1819 = vld [vmem:[%s1814 + $0x10] sm:$0xf]
      %v1820 = vld [vmem:[%s1814 + $0x14] sm:$0xf]
      %v1821 = vld [vmem:[%s1814 + $0x18] sm:$0xf]
      %v1822 = vld [vmem:[%s1814 + $0x1c] sm:$0xf]
      %v1823 = vld [vmem:[%s1814 + $0x20] sm:$0xf]
      %v1824 = vld [vmem:[%s1814 + $0x24] sm:$0xf]
      %v1825 = vld [vmem:[%s1814 + $0x28] sm:$0xf]
      %v1826 = vld [vmem:[%s1814 + $0x2c] sm:$0xf]
      %v1827 = vld [vmem:[%s1814 + $0x30] sm:$0xf]
      %v1828 = vld [vmem:[%s1814 + $0x34] sm:$0xf]
      %v1829 = vld [vmem:[%s1814 + $0x38] sm:$0xf]
      %v1830 = vld [vmem:[%s1814 + $0x3c] sm:$0xf]
      %v1847 = vunpack.c.l.b16 %v1815
      %v1848 = vunpack.c.l.b16 %v1816
      %v1849 = vunpack.c.l.b16 %v1817
      %v1850 = vunpack.c.l.b16 %v1818
      %v1851 = vunpack.c.l.b16 %v1819
      %v1852 = vunpack.c.l.b16 %v1820
      %v1853 = vunpack.c.l.b16 %v1821
      %v1854 = vunpack.c.l.b16 %v1822
      %v1855 = vunpack.c.l.b16 %v1823
      %v1856 = vunpack.c.l.b16 %v1824
      %v1857 = vunpack.c.l.b16 %v1825
      %v1858 = vunpack.c.l.b16 %v1826
      %v1859 = vunpack.c.l.b16 %v1827
      %v1860 = vunpack.c.l.b16 %v1828
      %v1861 = vunpack.c.l.b16 %v1829
      %v1862 = vunpack.c.l.b16 %v1830
      %v1863 = vpack.c.b16 %v1848, %v1847
      %v1864 = vpack.c.b16 %v1850, %v1849
      %v1865 = vpack.c.b16 %v1852, %v1851
      %v1866 = vpack.c.b16 %v1854, %v1853
      %v1867 = vpack.c.b16 %v1856, %v1855
      %v1868 = vpack.c.b16 %v1858, %v1857
      %v1869 = vpack.c.b16 %v1860, %v1859
      %v1870 = vpack.c.b16 %v1862, %v1861
      %1879 = vmatpush.bf16.msra.mxu0 %v1870
      %1880 = vmatpush.bf16.msra.mxu0 %v1869
      %1881 = vmatpush.bf16.msra.mxu0 %v1868
      %1882 = vmatpush.bf16.msra.mxu0 %v1867
      %1883 = vmatpush.bf16.msra.mxu0 %v1866
      %1884 = vmatpush.bf16.msra.mxu0 %v1865
      %1885 = vmatpush.bf16.msra.mxu0 %v1864
      %1886 = vmatpush.bf16.msra.mxu0 %v1863
      %1887 = vmatmul.bf16.gmra.mxu0 %v422
      %v1888 = vpop.f32.mrf.mxu0
      %v1889 = vadd.f32 0.0, %v1888
      %v1890 = vpop.f32.mrf.mxu0
      %v1891 = vadd.f32 0.0, %v1890
      %1892 = vmatmul.bf16.gmra.mxu0 %v423
      %v1893 = vpop.f32.mrf.mxu0
      %v1894 = vadd.f32 0.0, %v1893
      %v1895 = vpop.f32.mrf.mxu0
      %v1896 = vadd.f32 0.0, %v1895
      %1897 = vmatmul.bf16.gmra.mxu0 %v424
      %v1898 = vpop.f32.mrf.mxu0
      %v1899 = vadd.f32 0.0, %v1898
      %v1900 = vpop.f32.mrf.mxu0
      %v1901 = vadd.f32 0.0, %v1900
      %1902 = vmatmul.bf16.gmra.mxu0 %v425
      %v1903 = vpop.f32.mrf.mxu0
      %v1904 = vadd.f32 0.0, %v1903
      %v1905 = vpop.f32.mrf.mxu0
      %v1906 = vadd.f32 0.0, %v1905
      %1907 = vmatmul.bf16.gmra.mxu0 %v426
      %v1908 = vpop.f32.mrf.mxu0
      %v1909 = vadd.f32 0.0, %v1908
      %v1910 = vpop.f32.mrf.mxu0
      %v1911 = vadd.f32 0.0, %v1910
      %1912 = vmatmul.bf16.gmra.mxu0 %v427
      %v1913 = vpop.f32.mrf.mxu0
      %v1914 = vadd.f32 0.0, %v1913
      %v1915 = vpop.f32.mrf.mxu0
      %v1916 = vadd.f32 0.0, %v1915
      %1917 = vmatmul.bf16.gmra.mxu0 %v428
      %v1918 = vpop.f32.mrf.mxu0
      %v1919 = vadd.f32 0.0, %v1918
      %v1920 = vpop.f32.mrf.mxu0
      %v1921 = vadd.f32 0.0, %v1920
      %1922 = vmatmul.bf16.gmra.mxu0 %v429
      %v1923 = vpop.f32.mrf.mxu0
      %v1924 = vadd.f32 0.0, %v1923
      %v1925 = vpop.f32.mrf.mxu0
      %v1926 = vadd.f32 0.0, %v1925
      %1927 = vmatmul.bf16.gmra.mxu0 %v430
      %v1928 = vpop.f32.mrf.mxu0
      %v1929 = vadd.f32 0.0, %v1928
      %v1930 = vpop.f32.mrf.mxu0
      %v1931 = vadd.f32 0.0, %v1930
      %1932 = vmatmul.bf16.gmra.mxu0 %v431
      %v1933 = vpop.f32.mrf.mxu0
      %v1934 = vadd.f32 0.0, %v1933
      %v1935 = vpop.f32.mrf.mxu0
      %v1936 = vadd.f32 0.0, %v1935
      %1937 = vmatmul.bf16.gmra.mxu0 %v432
      %v1938 = vpop.f32.mrf.mxu0
      %v1939 = vadd.f32 0.0, %v1938
      %v1940 = vpop.f32.mrf.mxu0
      %v1941 = vadd.f32 0.0, %v1940
      %1942 = vmatmul.bf16.gmra.mxu0 %v433
      %v1943 = vpop.f32.mrf.mxu0
      %v1944 = vadd.f32 0.0, %v1943
      %v1945 = vpop.f32.mrf.mxu0
      %v1946 = vadd.f32 0.0, %v1945
      %1947 = vmatmul.bf16.gmra.mxu0 %v434
      %v1948 = vpop.f32.mrf.mxu0
      %v1949 = vadd.f32 0.0, %v1948
      %v1950 = vpop.f32.mrf.mxu0
      %v1951 = vadd.f32 0.0, %v1950
      %1952 = vmatmul.bf16.gmra.mxu0 %v435
      %v1953 = vpop.f32.mrf.mxu0
      %v1954 = vadd.f32 0.0, %v1953
      %v1955 = vpop.f32.mrf.mxu0
      %v1956 = vadd.f32 0.0, %v1955
      %1957 = vmatmul.bf16.gmra.mxu0 %v1235
      %v1958 = vpop.f32.mrf.mxu0
      %v1959 = vadd.f32 0.0, %v1958
      %v1960 = vpop.f32.mrf.mxu0
      %v1961 = vadd.f32 0.0, %v1960
      %1962 = vmatmul.bf16.gmra.mxu0 %v1813
      %v1963 = vpop.f32.mrf.mxu0
      %v1964 = vadd.f32 0.0, %v1963
      %v1965 = vpop.f32.mrf.mxu0
      %v1966 = vadd.f32 0.0, %v1965
      %1967 = vdwg.mxu0
      %v1968 = vadd.f32 %v1781, %v1889
      %v1969 = vadd.f32 %v1782, %v1891
      %v1970 = vadd.f32 %v1783, %v1894
      %v1971 = vadd.f32 %v1784, %v1896
      %v1972 = vadd.f32 %v1785, %v1899
      %v1973 = vadd.f32 %v1786, %v1901
      %v1974 = vadd.f32 %v1787, %v1904
      %v1975 = vadd.f32 %v1788, %v1906
      %v1976 = vadd.f32 %v1789, %v1909
      %v1977 = vadd.f32 %v1790, %v1911
      %v1978 = vadd.f32 %v1791, %v1914
      %v1979 = vadd.f32 %v1792, %v1916
      %v1980 = vadd.f32 %v1793, %v1919
      %v1981 = vadd.f32 %v1794, %v1921
      %v1982 = vadd.f32 %v1795, %v1924
      %v1983 = vadd.f32 %v1796, %v1926
      %v1984 = vadd.f32 %v1797, %v1929
      %v1985 = vadd.f32 %v1798, %v1931
      %v1986 = vadd.f32 %v1799, %v1934
      %v1987 = vadd.f32 %v1800, %v1936
      %v1988 = vadd.f32 %v1801, %v1939
      %v1989 = vadd.f32 %v1802, %v1941
      %v1990 = vadd.f32 %v1803, %v1944
      %v1991 = vadd.f32 %v1804, %v1946
      %v1992 = vadd.f32 %v1805, %v1949
      %v1993 = vadd.f32 %v1806, %v1951
      %v1994 = vadd.f32 %v1807, %v1954
      %v1995 = vadd.f32 %v1808, %v1956
      %v1996 = vadd.f32 %v1809, %v1959
      %v1997 = vadd.f32 %v1810, %v1961
      %v1998 = vadd.f32 %v1811, %v1964
      %v1999 = vadd.f32 %v1812, %v1966
      %v2003 = vrot.slane %v417, 1
      %v2004 = vrot.slane %v418, 1
      %v2005 = vsel %vm500, %v2003, %v2004
      %v2006 = vrot.slane %v419, 1
      %v2007 = vsel %vm500, %v2004, %v2006
      %v2010 = vpack.c.bf16 %v2007, %v2005
      %s2011 = scalar_lea.vmem %s1, 448
      %v2012 = vld [vmem:[%s2011] sm:$0xf]
      %v2013 = vld [vmem:[%s2011 + $0x4] sm:$0xf]
      %v2014 = vld [vmem:[%s2011 + $0x8] sm:$0xf]
      %v2015 = vld [vmem:[%s2011 + $0xc] sm:$0xf]
      %v2016 = vld [vmem:[%s2011 + $0x10] sm:$0xf]
      %v2017 = vld [vmem:[%s2011 + $0x14] sm:$0xf]
      %v2018 = vld [vmem:[%s2011 + $0x18] sm:$0xf]
      %v2019 = vld [vmem:[%s2011 + $0x1c] sm:$0xf]
      %v2020 = vld [vmem:[%s2011 + $0x20] sm:$0xf]
      %v2021 = vld [vmem:[%s2011 + $0x24] sm:$0xf]
      %v2022 = vld [vmem:[%s2011 + $0x28] sm:$0xf]
      %v2023 = vld [vmem:[%s2011 + $0x2c] sm:$0xf]
      %v2024 = vld [vmem:[%s2011 + $0x30] sm:$0xf]
      %v2025 = vld [vmem:[%s2011 + $0x34] sm:$0xf]
      %v2026 = vld [vmem:[%s2011 + $0x38] sm:$0xf]
      %v2027 = vld [vmem:[%s2011 + $0x3c] sm:$0xf]
      %v2044 = vunpack.c.l.b16 %v2012
      %v2045 = vunpack.c.l.b16 %v2013
      %v2046 = vunpack.c.l.b16 %v2014
      %v2047 = vunpack.c.l.b16 %v2015
      %v2048 = vunpack.c.l.b16 %v2016
      %v2049 = vunpack.c.l.b16 %v2017
      %v2050 = vunpack.c.l.b16 %v2018
      %v2051 = vunpack.c.l.b16 %v2019
      %v2052 = vunpack.c.l.b16 %v2020
      %v2053 = vunpack.c.l.b16 %v2021
      %v2054 = vunpack.c.l.b16 %v2022
      %v2055 = vunpack.c.l.b16 %v2023
      %v2056 = vunpack.c.l.b16 %v2024
      %v2057 = vunpack.c.l.b16 %v2025
      %v2058 = vunpack.c.l.b16 %v2026
      %v2059 = vunpack.c.l.b16 %v2027
      %v2060 = vpack.c.b16 %v2045, %v2044
      %v2061 = vpack.c.b16 %v2047, %v2046
      %v2062 = vpack.c.b16 %v2049, %v2048
      %v2063 = vpack.c.b16 %v2051, %v2050
      %v2064 = vpack.c.b16 %v2053, %v2052
      %v2065 = vpack.c.b16 %v2055, %v2054
      %v2066 = vpack.c.b16 %v2057, %v2056
      %v2067 = vpack.c.b16 %v2059, %v2058
      %2076 = vmatpush.bf16.msra.mxu0 %v2067
      %2077 = vmatpush.bf16.msra.mxu0 %v2066
      %2078 = vmatpush.bf16.msra.mxu0 %v2065
      %2079 = vmatpush.bf16.msra.mxu0 %v2064
      %2080 = vmatpush.bf16.msra.mxu0 %v2063
      %2081 = vmatpush.bf16.msra.mxu0 %v2062
      %2082 = vmatpush.bf16.msra.mxu0 %v2061
      %2083 = vmatpush.bf16.msra.mxu0 %v2060
      %2084 = vmatmul.bf16.gmra.mxu0 %v615
      %v2085 = vpop.f32.mrf.mxu0
      %v2086 = vadd.f32 0.0, %v2085
      %v2087 = vpop.f32.mrf.mxu0
      %v2088 = vadd.f32 0.0, %v2087
      %2089 = vmatmul.bf16.gmra.mxu0 %v616
      %v2090 = vpop.f32.mrf.mxu0
      %v2091 = vadd.f32 0.0, %v2090
      %v2092 = vpop.f32.mrf.mxu0
      %v2093 = vadd.f32 0.0, %v2092
      %2094 = vmatmul.bf16.gmra.mxu0 %v617
      %v2095 = vpop.f32.mrf.mxu0
      %v2096 = vadd.f32 0.0, %v2095
      %v2097 = vpop.f32.mrf.mxu0
      %v2098 = vadd.f32 0.0, %v2097
      %2099 = vmatmul.bf16.gmra.mxu0 %v618
      %v2100 = vpop.f32.mrf.mxu0
      %v2101 = vadd.f32 0.0, %v2100
      %v2102 = vpop.f32.mrf.mxu0
      %v2103 = vadd.f32 0.0, %v2102
      %2104 = vmatmul.bf16.gmra.mxu0 %v619
      %v2105 = vpop.f32.mrf.mxu0
      %v2106 = vadd.f32 0.0, %v2105
      %v2107 = vpop.f32.mrf.mxu0
      %v2108 = vadd.f32 0.0, %v2107
      %2109 = vmatmul.bf16.gmra.mxu0 %v620
      %v2110 = vpop.f32.mrf.mxu0
      %v2111 = vadd.f32 0.0, %v2110
      %v2112 = vpop.f32.mrf.mxu0
      %v2113 = vadd.f32 0.0, %v2112
      %2114 = vmatmul.bf16.gmra.mxu0 %v621
      %v2115 = vpop.f32.mrf.mxu0
      %v2116 = vadd.f32 0.0, %v2115
      %v2117 = vpop.f32.mrf.mxu0
      %v2118 = vadd.f32 0.0, %v2117
      %2119 = vmatmul.bf16.gmra.mxu0 %v622
      %v2120 = vpop.f32.mrf.mxu0
      %v2121 = vadd.f32 0.0, %v2120
      %v2122 = vpop.f32.mrf.mxu0
      %v2123 = vadd.f32 0.0, %v2122
      %2124 = vmatmul.bf16.gmra.mxu0 %v623
      %v2125 = vpop.f32.mrf.mxu0
      %v2126 = vadd.f32 0.0, %v2125
      %v2127 = vpop.f32.mrf.mxu0
      %v2128 = vadd.f32 0.0, %v2127
      %2129 = vmatmul.bf16.gmra.mxu0 %v624
      %v2130 = vpop.f32.mrf.mxu0
      %v2131 = vadd.f32 0.0, %v2130
      %v2132 = vpop.f32.mrf.mxu0
      %v2133 = vadd.f32 0.0, %v2132
      %2134 = vmatmul.bf16.gmra.mxu0 %v625
      %v2135 = vpop.f32.mrf.mxu0
      %v2136 = vadd.f32 0.0, %v2135
      %v2137 = vpop.f32.mrf.mxu0
      %v2138 = vadd.f32 0.0, %v2137
      %2139 = vmatmul.bf16.gmra.mxu0 %v626
      %v2140 = vpop.f32.mrf.mxu0
      %v2141 = vadd.f32 0.0, %v2140
      %v2142 = vpop.f32.mrf.mxu0
      %v2143 = vadd.f32 0.0, %v2142
      %2144 = vmatmul.bf16.gmra.mxu0 %v627
      %v2145 = vpop.f32.mrf.mxu0
      %v2146 = vadd.f32 0.0, %v2145
      %v2147 = vpop.f32.mrf.mxu0
      %v2148 = vadd.f32 0.0, %v2147
      %2149 = vmatmul.bf16.gmra.mxu0 %v628
      %v2150 = vpop.f32.mrf.mxu0
      %v2151 = vadd.f32 0.0, %v2150
      %v2152 = vpop.f32.mrf.mxu0
      %v2153 = vadd.f32 0.0, %v2152
      %2154 = vmatmul.bf16.gmra.mxu0 %v1432
      %v2155 = vpop.f32.mrf.mxu0
      %v2156 = vadd.f32 0.0, %v2155
      %v2157 = vpop.f32.mrf.mxu0
      %v2158 = vadd.f32 0.0, %v2157
      %2159 = vmatmul.bf16.gmra.mxu0 %v2010
      %v2160 = vpop.f32.mrf.mxu0
      %v2161 = vadd.f32 0.0, %v2160
      %v2162 = vpop.f32.mrf.mxu0
      %v2163 = vadd.f32 0.0, %v2162
      %2164 = vdwg.mxu0
      %v2165 = vadd.f32 %v1968, %v2086
      %v2166 = vadd.f32 %v1969, %v2088
      %v2167 = vadd.f32 %v1970, %v2091
      %v2168 = vadd.f32 %v1971, %v2093
      %v2169 = vadd.f32 %v1972, %v2096
      %v2170 = vadd.f32 %v1973, %v2098
      %v2171 = vadd.f32 %v1974, %v2101
      %v2172 = vadd.f32 %v1975, %v2103
      %v2173 = vadd.f32 %v1976, %v2106
      %v2174 = vadd.f32 %v1977, %v2108
      %v2175 = vadd.f32 %v1978, %v2111
      %v2176 = vadd.f32 %v1979, %v2113
      %v2177 = vadd.f32 %v1980, %v2116
      %v2178 = vadd.f32 %v1981, %v2118
      %v2179 = vadd.f32 %v1982, %v2121
      %v2180 = vadd.f32 %v1983, %v2123
      %v2181 = vadd.f32 %v1984, %v2126
      %v2182 = vadd.f32 %v1985, %v2128
      %v2183 = vadd.f32 %v1986, %v2131
      %v2184 = vadd.f32 %v1987, %v2133
      %v2185 = vadd.f32 %v1988, %v2136
      %v2186 = vadd.f32 %v1989, %v2138
      %v2187 = vadd.f32 %v1990, %v2141
      %v2188 = vadd.f32 %v1991, %v2143
      %v2189 = vadd.f32 %v1992, %v2146
      %v2190 = vadd.f32 %v1993, %v2148
      %v2191 = vadd.f32 %v1994, %v2151
      %v2192 = vadd.f32 %v1995, %v2153
      %v2193 = vadd.f32 %v1996, %v2156
      %v2194 = vadd.f32 %v1997, %v2158
      %v2195 = vadd.f32 %v1998, %v2161
      %v2196 = vadd.f32 %v1999, %v2163
      %v2197 = vrot.slane %v417, 2
      %v2198 = vrot.slane %v418, 2
      %v2199 = vsel %vm920, %v2197, %v2198
      %v2200 = vrot.slane %v419, 2
      %v2201 = vsel %vm920, %v2198, %v2200
      %v2204 = vpack.c.bf16 %v2201, %v2199
      %s2205 = scalar_lea.vmem %s1, 512
      %v2206 = vld [vmem:[%s2205] sm:$0xf]
      %v2207 = vld [vmem:[%s2205 + $0x4] sm:$0xf]
      %v2208 = vld [vmem:[%s2205 + $0x8] sm:$0xf]
      %v2209 = vld [vmem:[%s2205 + $0xc] sm:$0xf]
      %v2210 = vld [vmem:[%s2205 + $0x10] sm:$0xf]
      %v2211 = vld [vmem:[%s2205 + $0x14] sm:$0xf]
      %v2212 = vld [vmem:[%s2205 + $0x18] sm:$0xf]
      %v2213 = vld [vmem:[%s2205 + $0x1c] sm:$0xf]
      %v2214 = vld [vmem:[%s2205 + $0x20] sm:$0xf]
      %v2215 = vld [vmem:[%s2205 + $0x24] sm:$0xf]
      %v2216 = vld [vmem:[%s2205 + $0x28] sm:$0xf]
      %v2217 = vld [vmem:[%s2205 + $0x2c] sm:$0xf]
      %v2218 = vld [vmem:[%s2205 + $0x30] sm:$0xf]
      %v2219 = vld [vmem:[%s2205 + $0x34] sm:$0xf]
      %v2220 = vld [vmem:[%s2205 + $0x38] sm:$0xf]
      %v2221 = vld [vmem:[%s2205 + $0x3c] sm:$0xf]
      %v2238 = vunpack.c.l.b16 %v2206
      %v2239 = vunpack.c.l.b16 %v2207
      %v2240 = vunpack.c.l.b16 %v2208
      %v2241 = vunpack.c.l.b16 %v2209
      %v2242 = vunpack.c.l.b16 %v2210
      %v2243 = vunpack.c.l.b16 %v2211
      %v2244 = vunpack.c.l.b16 %v2212
      %v2245 = vunpack.c.l.b16 %v2213
      %v2246 = vunpack.c.l.b16 %v2214
      %v2247 = vunpack.c.l.b16 %v2215
      %v2248 = vunpack.c.l.b16 %v2216
      %v2249 = vunpack.c.l.b16 %v2217
      %v2250 = vunpack.c.l.b16 %v2218
      %v2251 = vunpack.c.l.b16 %v2219
      %v2252 = vunpack.c.l.b16 %v2220
      %v2253 = vunpack.c.l.b16 %v2221
      %v2254 = vpack.c.b16 %v2239, %v2238
      %v2255 = vpack.c.b16 %v2241, %v2240
      %v2256 = vpack.c.b16 %v2243, %v2242
      %v2257 = vpack.c.b16 %v2245, %v2244
      %v2258 = vpack.c.b16 %v2247, %v2246
      %v2259 = vpack.c.b16 %v2249, %v2248
      %v2260 = vpack.c.b16 %v2251, %v2250
      %v2261 = vpack.c.b16 %v2253, %v2252
      %2270 = vmatpush.bf16.msra.mxu0 %v2261
      %2271 = vmatpush.bf16.msra.mxu0 %v2260
      %2272 = vmatpush.bf16.msra.mxu0 %v2259
      %2273 = vmatpush.bf16.msra.mxu0 %v2258
      %2274 = vmatpush.bf16.msra.mxu0 %v2257
      %2275 = vmatpush.bf16.msra.mxu0 %v2256
      %2276 = vmatpush.bf16.msra.mxu0 %v2255
      %2277 = vmatpush.bf16.msra.mxu0 %v2254
      %2278 = vmatmul.bf16.gmra.mxu0 %v1035
      %v2279 = vpop.f32.mrf.mxu0
      %v2280 = vadd.f32 0.0, %v2279
      %v2281 = vpop.f32.mrf.mxu0
      %v2282 = vadd.f32 0.0, %v2281
      %2283 = vmatmul.bf16.gmra.mxu0 %v1036
      %v2284 = vpop.f32.mrf.mxu0
      %v2285 = vadd.f32 0.0, %v2284
      %v2286 = vpop.f32.mrf.mxu0
      %v2287 = vadd.f32 0.0, %v2286
      %2288 = vmatmul.bf16.gmra.mxu0 %v1037
      %v2289 = vpop.f32.mrf.mxu0
      %v2290 = vadd.f32 0.0, %v2289
      %v2291 = vpop.f32.mrf.mxu0
      %v2292 = vadd.f32 0.0, %v2291
      %2293 = vmatmul.bf16.gmra.mxu0 %v1038
      %v2294 = vpop.f32.mrf.mxu0
      %v2295 = vadd.f32 0.0, %v2294
      %v2296 = vpop.f32.mrf.mxu0
      %v2297 = vadd.f32 0.0, %v2296
      %2298 = vmatmul.bf16.gmra.mxu0 %v1039
      %v2299 = vpop.f32.mrf.mxu0
      %v2300 = vadd.f32 0.0, %v2299
      %v2301 = vpop.f32.mrf.mxu0
      %v2302 = vadd.f32 0.0, %v2301
      %2303 = vmatmul.bf16.gmra.mxu0 %v1040
      %v2304 = vpop.f32.mrf.mxu0
      %v2305 = vadd.f32 0.0, %v2304
      %v2306 = vpop.f32.mrf.mxu0
      %v2307 = vadd.f32 0.0, %v2306
      %2308 = vmatmul.bf16.gmra.mxu0 %v1041
      %v2309 = vpop.f32.mrf.mxu0
      %v2310 = vadd.f32 0.0, %v2309
      %v2311 = vpop.f32.mrf.mxu0
      %v2312 = vadd.f32 0.0, %v2311
      %2313 = vmatmul.bf16.gmra.mxu0 %v1042
      %v2314 = vpop.f32.mrf.mxu0
      %v2315 = vadd.f32 0.0, %v2314
      %v2316 = vpop.f32.mrf.mxu0
      %v2317 = vadd.f32 0.0, %v2316
      %2318 = vmatmul.bf16.gmra.mxu0 %v1043
      %v2319 = vpop.f32.mrf.mxu0
      %v2320 = vadd.f32 0.0, %v2319
      %v2321 = vpop.f32.mrf.mxu0
      %v2322 = vadd.f32 0.0, %v2321
      %2323 = vmatmul.bf16.gmra.mxu0 %v1044
      %v2324 = vpop.f32.mrf.mxu0
      %v2325 = vadd.f32 0.0, %v2324
      %v2326 = vpop.f32.mrf.mxu0
      %v2327 = vadd.f32 0.0, %v2326
      %2328 = vmatmul.bf16.gmra.mxu0 %v1045
      %v2329 = vpop.f32.mrf.mxu0
      %v2330 = vadd.f32 0.0, %v2329
      %v2331 = vpop.f32.mrf.mxu0
      %v2332 = vadd.f32 0.0, %v2331
      %2333 = vmatmul.bf16.gmra.mxu0 %v1046
      %v2334 = vpop.f32.mrf.mxu0
      %v2335 = vadd.f32 0.0, %v2334
      %v2336 = vpop.f32.mrf.mxu0
      %v2337 = vadd.f32 0.0, %v2336
      %2338 = vmatmul.bf16.gmra.mxu0 %v1047
      %v2339 = vpop.f32.mrf.mxu0
      %v2340 = vadd.f32 0.0, %v2339
      %v2341 = vpop.f32.mrf.mxu0
      %v2342 = vadd.f32 0.0, %v2341
      %2343 = vmatmul.bf16.gmra.mxu0 %v1048
      %v2344 = vpop.f32.mrf.mxu0
      %v2345 = vadd.f32 0.0, %v2344
      %v2346 = vpop.f32.mrf.mxu0
      %v2347 = vadd.f32 0.0, %v2346
      %2348 = vmatmul.bf16.gmra.mxu0 %v1626
      %v2349 = vpop.f32.mrf.mxu0
      %v2350 = vadd.f32 0.0, %v2349
      %v2351 = vpop.f32.mrf.mxu0
      %v2352 = vadd.f32 0.0, %v2351
      %2353 = vmatmul.bf16.gmra.mxu0 %v2204
      %v2354 = vpop.f32.mrf.mxu0
      %v2355 = vadd.f32 0.0, %v2354
      %v2356 = vpop.f32.mrf.mxu0
      %v2357 = vadd.f32 0.0, %v2356
      %2358 = vdwg.mxu0
      %v2359 = vadd.f32 %v2165, %v2280
      %v2360 = vadd.f32 %v2166, %v2282
      %v2361 = vadd.f32 %v2167, %v2285
      %v2362 = vadd.f32 %v2168, %v2287
      %v2363 = vadd.f32 %v2169, %v2290
      %v2364 = vadd.f32 %v2170, %v2292
      %v2365 = vadd.f32 %v2171, %v2295
      %v2366 = vadd.f32 %v2172, %v2297
      %v2367 = vadd.f32 %v2173, %v2300
      %v2368 = vadd.f32 %v2174, %v2302
      %v2369 = vadd.f32 %v2175, %v2305
      %v2370 = vadd.f32 %v2176, %v2307
      %v2371 = vadd.f32 %v2177, %v2310
      %v2372 = vadd.f32 %v2178, %v2312
      %v2373 = vadd.f32 %v2179, %v2315
      %v2374 = vadd.f32 %v2180, %v2317
      %v2375 = vadd.f32 %v2181, %v2320
      %v2376 = vadd.f32 %v2182, %v2322
      %v2377 = vadd.f32 %v2183, %v2325
      %v2378 = vadd.f32 %v2184, %v2327
      %v2379 = vadd.f32 %v2185, %v2330
      %v2380 = vadd.f32 %v2186, %v2332
      %v2381 = vadd.f32 %v2187, %v2335
      %v2382 = vadd.f32 %v2188, %v2337
      %v2383 = vadd.f32 %v2189, %v2340
      %v2384 = vadd.f32 %v2190, %v2342
      %v2385 = vadd.f32 %v2191, %v2345
      %v2386 = vadd.f32 %v2192, %v2347
      %v2387 = vadd.f32 %v2193, %v2350
      %v2388 = vadd.f32 %v2194, %v2352
      %v2389 = vadd.f32 %v2195, %v2355
      %v2390 = vadd.f32 %v2196, %v2357
      %v2391 = vpack.c.bf16 %v2359, %v2359
      %v2392 = vpack.c.bf16 %v2360, %v2360
      %v2393 = vpack.c.bf16 %v2361, %v2361
      %v2394 = vpack.c.bf16 %v2362, %v2362
      %v2395 = vpack.c.bf16 %v2363, %v2363
      %v2396 = vpack.c.bf16 %v2364, %v2364
      %v2397 = vpack.c.bf16 %v2365, %v2365
      %v2398 = vpack.c.bf16 %v2366, %v2366
      %v2399 = vpack.c.bf16 %v2367, %v2367
      %v2400 = vpack.c.bf16 %v2368, %v2368
      %v2401 = vpack.c.bf16 %v2369, %v2369
      %v2402 = vpack.c.bf16 %v2370, %v2370
      %v2403 = vpack.c.bf16 %v2371, %v2371
      %v2404 = vpack.c.bf16 %v2372, %v2372
      %v2405 = vpack.c.bf16 %v2373, %v2373
      %v2406 = vpack.c.bf16 %v2374, %v2374
      %v2407 = vpack.c.bf16 %v2375, %v2375
      %v2408 = vpack.c.bf16 %v2376, %v2376
      %v2409 = vpack.c.bf16 %v2377, %v2377
      %v2410 = vpack.c.bf16 %v2378, %v2378
      %v2411 = vpack.c.bf16 %v2379, %v2379
      %v2412 = vpack.c.bf16 %v2380, %v2380
      %v2413 = vpack.c.bf16 %v2381, %v2381
      %v2414 = vpack.c.bf16 %v2382, %v2382
      %v2415 = vpack.c.bf16 %v2383, %v2383
      %v2416 = vpack.c.bf16 %v2384, %v2384
      %v2417 = vpack.c.bf16 %v2385, %v2385
      %v2418 = vpack.c.bf16 %v2386, %v2386
      %v2419 = vpack.c.bf16 %v2387, %v2387
      %v2420 = vpack.c.bf16 %v2388, %v2388
      %v2421 = vpack.c.bf16 %v2389, %v2389
      %v2422 = vpack.c.bf16 %v2390, %v2390
      %2423 = vst [vmem:[%s208] sm:$0xf] %v2391
      %2424 = vst [vmem:[%s208 + $0x4] sm:$0xf] %v2392
      %2425 = vst [vmem:[%s208 + $0x8] sm:$0xf] %v2393
      %2426 = vst [vmem:[%s208 + $0xc] sm:$0xf] %v2394
      %2427 = vst [vmem:[%s208 + $0x10] sm:$0xf] %v2395
      %2428 = vst [vmem:[%s208 + $0x14] sm:$0xf] %v2396
      %2429 = vst [vmem:[%s208 + $0x18] sm:$0xf] %v2397
      %2430 = vst [vmem:[%s208 + $0x1c] sm:$0xf] %v2398
      %2431 = vst [vmem:[%s208 + $0x20] sm:$0xf] %v2399
      %2432 = vst [vmem:[%s208 + $0x24] sm:$0xf] %v2400
      %2433 = vst [vmem:[%s208 + $0x28] sm:$0xf] %v2401
      %2434 = vst [vmem:[%s208 + $0x2c] sm:$0xf] %v2402
      %2435 = vst [vmem:[%s208 + $0x30] sm:$0xf] %v2403
      %2436 = vst [vmem:[%s208 + $0x34] sm:$0xf] %v2404
      %2437 = vst [vmem:[%s208 + $0x38] sm:$0xf] %v2405
      %2438 = vst [vmem:[%s208 + $0x3c] sm:$0xf] %v2406
      %2439 = vst [vmem:[%s208 + $0x40] sm:$0xf] %v2407
      %2440 = vst [vmem:[%s208 + $0x44] sm:$0xf] %v2408
      %2441 = vst [vmem:[%s208 + $0x48] sm:$0xf] %v2409
      %2442 = vst [vmem:[%s208 + $0x4c] sm:$0xf] %v2410
      %2443 = vst [vmem:[%s208 + $0x50] sm:$0xf] %v2411
      %2444 = vst [vmem:[%s208 + $0x54] sm:$0xf] %v2412
      %2445 = vst [vmem:[%s208 + $0x58] sm:$0xf] %v2413
      %2446 = vst [vmem:[%s208 + $0x5c] sm:$0xf] %v2414
      %2447 = vst [vmem:[%s208 + $0x60] sm:$0xf] %v2415
      %2448 = vst [vmem:[%s208 + $0x64] sm:$0xf] %v2416
      %2449 = vst [vmem:[%s208 + $0x68] sm:$0xf] %v2417
      %2450 = vst [vmem:[%s208 + $0x6c] sm:$0xf] %v2418
      %2451 = vst [vmem:[%s208 + $0x70] sm:$0xf] %v2419
      %2452 = vst [vmem:[%s208 + $0x74] sm:$0xf] %v2420
      %2453 = vst [vmem:[%s208 + $0x78] sm:$0xf] %v2421
      %2454 = vst [vmem:[%s208 + $0x7c] sm:$0xf] %v2422
      %v2455 = vadd.f32 %v2359, %v2360
      %v2456 = vadd.f32 %v2455, %v2361
      %v2457 = vadd.f32 %v2456, %v2362
      %v2458 = vadd.f32 %v2457, %v2363
      %v2459 = vadd.f32 %v2458, %v2364
      %v2460 = vadd.f32 %v2459, %v2365
      %v2461 = vadd.f32 %v2460, %v2366
      %v2462 = vadd.f32 %v2461, %v2367
      %v2463 = vadd.f32 %v2462, %v2368
      %v2464 = vadd.f32 %v2463, %v2369
      %v2465 = vadd.f32 %v2464, %v2370
      %v2466 = vadd.f32 %v2465, %v2371
      %v2467 = vadd.f32 %v2466, %v2372
      %v2468 = vadd.f32 %v2467, %v2373
      %v2469 = vadd.f32 %v2468, %v2374
      %v2470 = vadd.f32 %v2469, %v2375
      %v2471 = vadd.f32 %v2470, %v2376
      %v2472 = vadd.f32 %v2471, %v2377
      %v2473 = vadd.f32 %v2472, %v2378
      %v2474 = vadd.f32 %v2473, %v2379
      %v2475 = vadd.f32 %v2474, %v2380
      %v2476 = vadd.f32 %v2475, %v2381
      %v2477 = vadd.f32 %v2476, %v2382
      %v2478 = vadd.f32 %v2477, %v2383
      %v2479 = vadd.f32 %v2478, %v2384
      %v2480 = vadd.f32 %v2479, %v2385
      %v2481 = vadd.f32 %v2480, %v2386
      %v2482 = vadd.f32 %v2481, %v2387
      %v2483 = vadd.f32 %v2482, %v2388
      %v2484 = vadd.f32 %v2483, %v2389
      %v2485 = vadd.f32 %v2484, %v2390
      %v2486 = vrot.slane %v2485, 4
      %v2487 = vadd.f32 %v2485, %v2486
      %v2488 = vrot.slane %v2487, 2
      %v2489 = vadd.f32 %v2487, %v2488
      %v2490 = vrot.slane %v2489, 1
      %v2491 = vadd.f32 %v2489, %v2490
      %2492 = vst [vmem:[%s211] sm:$0x1] %v2491
      %v2493 = vmul.f32 %v2359, %v2359
      %v2494 = vmul.f32 %v2360, %v2360
      %v2495 = vmul.f32 %v2361, %v2361
      %v2496 = vmul.f32 %v2362, %v2362
      %v2497 = vmul.f32 %v2363, %v2363
      %v2498 = vmul.f32 %v2364, %v2364
      %v2499 = vmul.f32 %v2365, %v2365
      %v2500 = vmul.f32 %v2366, %v2366
      %v2501 = vmul.f32 %v2367, %v2367
      %v2502 = vmul.f32 %v2368, %v2368
      %v2503 = vmul.f32 %v2369, %v2369
      %v2504 = vmul.f32 %v2370, %v2370
      %v2505 = vmul.f32 %v2371, %v2371
      %v2506 = vmul.f32 %v2372, %v2372
      %v2507 = vmul.f32 %v2373, %v2373
      %v2508 = vmul.f32 %v2374, %v2374
      %v2509 = vmul.f32 %v2375, %v2375
      %v2510 = vmul.f32 %v2376, %v2376
      %v2511 = vmul.f32 %v2377, %v2377
      %v2512 = vmul.f32 %v2378, %v2378
      %v2513 = vmul.f32 %v2379, %v2379
      %v2514 = vmul.f32 %v2380, %v2380
      %v2515 = vmul.f32 %v2381, %v2381
      %v2516 = vmul.f32 %v2382, %v2382
      %v2517 = vmul.f32 %v2383, %v2383
      %v2518 = vmul.f32 %v2384, %v2384
      %v2519 = vmul.f32 %v2385, %v2385
      %v2520 = vmul.f32 %v2386, %v2386
      %v2521 = vmul.f32 %v2387, %v2387
      %v2522 = vmul.f32 %v2388, %v2388
      %v2523 = vmul.f32 %v2389, %v2389
      %v2524 = vmul.f32 %v2390, %v2390
      %v2525 = vadd.f32 %v2493, %v2494
      %v2526 = vadd.f32 %v2525, %v2495
      %v2527 = vadd.f32 %v2526, %v2496
      %v2528 = vadd.f32 %v2527, %v2497
      %v2529 = vadd.f32 %v2528, %v2498
      %v2530 = vadd.f32 %v2529, %v2499
      %v2531 = vadd.f32 %v2530, %v2500
      %v2532 = vadd.f32 %v2531, %v2501
      %v2533 = vadd.f32 %v2532, %v2502
      %v2534 = vadd.f32 %v2533, %v2503
      %v2535 = vadd.f32 %v2534, %v2504
      %v2536 = vadd.f32 %v2535, %v2505
      %v2537 = vadd.f32 %v2536, %v2506
      %v2538 = vadd.f32 %v2537, %v2507
      %v2539 = vadd.f32 %v2538, %v2508
      %v2540 = vadd.f32 %v2539, %v2509
      %v2541 = vadd.f32 %v2540, %v2510
      %v2542 = vadd.f32 %v2541, %v2511
      %v2543 = vadd.f32 %v2542, %v2512
      %v2544 = vadd.f32 %v2543, %v2513
      %v2545 = vadd.f32 %v2544, %v2514
      %v2546 = vadd.f32 %v2545, %v2515
      %v2547 = vadd.f32 %v2546, %v2516
      %v2548 = vadd.f32 %v2547, %v2517
      %v2549 = vadd.f32 %v2548, %v2518
      %v2550 = vadd.f32 %v2549, %v2519
      %v2551 = vadd.f32 %v2550, %v2520
      %v2552 = vadd.f32 %v2551, %v2521
      %v2553 = vadd.f32 %v2552, %v2522
      %v2554 = vadd.f32 %v2553, %v2523
      %v2555 = vadd.f32 %v2554, %v2524
      %v2556 = vrot.slane %v2555, 4
      %v2557 = vadd.f32 %v2555, %v2556
      %v2558 = vrot.slane %v2557, 2
      %v2559 = vadd.f32 %v2557, %v2558
      %v2560 = vrot.slane %v2559, 1
      %v2561 = vadd.f32 %v2559, %v2560
      %2562 = vst [vmem:[%s214] sm:$0x1] %v2561
      %p2563 = scmp.lt.s32.totalorder %s16, 1
      %s2564 = scalar_select %p2563, %s16, 1
      %s2565 = smul.addr %s2564, 32
      %s2566 = smul.addr %s2565, 4
      %s2567 = scalar_lea.vmem %s2, %s2566
      %p2568 = scmp.lt.s32.totalorder %s16, 1
      %s2569 = scalar_select %p2568, %s16, 1
      %s2570 = scalar_lea.vmem %s3, %s2569
      %p2571 = scmp.lt.s32.totalorder %s16, 1
      %s2572 = scalar_select %p2571, %s16, 1
      %s2573 = scalar_lea.vmem %s4, %s2572
      // Predicated region
      $region29: #{basicblock_forward.3} parent=27 // pred_check
        %p2574 = pneg %p81
      $region30: #{basicblock_forward.3} parent=27 // pred_check_branch
        %2576 = sbr.rel (%p2574) target = $region32
      $region31: #{basicblock_forward.3} parent=27 // pred_region
        _
      $region32: #{basicblock_forward.3} parent=27 // pred_fallthru
        _
      // Predicated region
      $region33: #{basicblock_forward.3} parent=27 // pred_check
        %p2577 = pneg %p107
      $region34: #{basicblock_forward.3} parent=27 // pred_check_branch
        %2579 = sbr.rel (%p2577) target = $region36
      $region35: #{basicblock_forward.3} parent=27 // pred_region
        _
      $region36: #{basicblock_forward.3} parent=27 // pred_fallthru
        _
      // Predicated region
      $region37: #{basicblock_forward.3} parent=27 // pred_check
        %p2580 = pneg %p133
      $region38: #{basicblock_forward.3} parent=27 // pred_check_branch
        %2582 = sbr.rel (%p2580) target = $region40
      $region39: #{basicblock_forward.3} parent=27 // pred_region
        _
      $region40: #{basicblock_forward.3} parent=27 // pred_fallthru
        _
    $region28: #{basicblock_forward.3} parent=5 // pred_fallthru
      _
    %p2583 = scmp.le.s32.totalorder 2, %s11
    // Predicated region
    $region41: #{basicblock_forward.3} parent=5 // pred_check
      %p2584 = pneg %p2583
    $region42: #{basicblock_forward.3} parent=5 // pred_check_branch
      %2586 = sbr.rel (%p2584) target = $region44
    $region43: #{basicblock_forward.3} parent=5 // pred_region
      %s2587 = ssub.s32 %s11, 2
      // Predicated region
      $region45: #{basicblock_forward.3} parent=43 // pred_check
        %p2588 = pneg %p87
      $region46: #{basicblock_forward.3} parent=43 // pred_check_branch
        %2590 = sbr.rel (%p2588) target = $region48
      $region47: #{basicblock_forward.3} parent=43 // pred_region
        %p2591 = scmp.lt.s32.totalorder %s17, 1
        %s2592 = scalar_select %p2591, %s17, 1
        %s2593 = smul.addr %s2592, 32
        %s2594 = smul.addr %s2593, 4
        %s2595 = scalar_lea.vmem %s2, %s2594
      $region48: #{basicblock_forward.3} parent=43 // pred_fallthru
        _
      // Predicated region
      $region49: #{basicblock_forward.3} parent=43 // pred_check
        %p2596 = pneg %p113
      $region50: #{basicblock_forward.3} parent=43 // pred_check_branch
        %2598 = sbr.rel (%p2596) target = $region52
      $region51: #{basicblock_forward.3} parent=43 // pred_region
        %p2599 = scmp.lt.s32.totalorder %s17, 1
        %s2600 = scalar_select %p2599, %s17, 1
        %s2601 = scalar_lea.vmem %s3, %s2600
      $region52: #{basicblock_forward.3} parent=43 // pred_fallthru
        _
      // Predicated region
      $region53: #{basicblock_forward.3} parent=43 // pred_check
        %p2602 = pneg %p139
      $region54: #{basicblock_forward.3} parent=43 // pred_check_branch
        %2604 = sbr.rel (%p2602) target = $region56
      $region55: #{basicblock_forward.3} parent=43 // pred_region
        %p2605 = scmp.lt.s32.totalorder %s17, 1
        %s2606 = scalar_select %p2605, %s17, 1
        %s2607 = scalar_lea.vmem %s4, %s2606
      $region56: #{basicblock_forward.3} parent=43 // pred_fallthru
        _
    $region44: #{basicblock_forward.3} parent=5 // pred_fallthru
      _
  $region6: #{basicblock_forward.3} parent=0 // loop_footer
    %s15 = sadd.s32 1, %s11
  $region7: #{basicblock_forward.3} parent=0 // loop_footer_branch
    %10 = sbr.rel target = $region3
  $region8: #{basicblock_forward.3} parent=0 // loop_exit
    _

// kernel: basicblock_forward.4
$region0: #{basicblock_forward.4}
  #allocation0 [shape = 'u32[]', space=smem, size = 0x4, offset = 0x4, fixed_abs, tag = 'smem constant byte address 0x4 - core index']
  #allocation1 [shape = 'u32[72,128]{1,0:T(1,128)}', space=vmem, size = 0x9000, scoped, tag = 'internal scratch']
  #allocation2 [shape = 'f32[18,18,128]{2,1,0:T(8,128)}', space=vmem, size = 0x36000, scoped, tag = 'scratch operand']
  %s0 = inlined_call_operand.vmem [shape: bf16[2,16,16,128], index: 0, kind: input, shape index: {}]
  %s1 = inlined_call_operand.vmem [shape: f32[1,128], index: 1, kind: input, shape index: {}]
  %s2 = inlined_call_operand.vmem [shape: f32[1,128], index: 2, kind: input, shape index: {}]
  %s3 = inlined_call_operand.vmem [shape: bf16[9,128,128], index: 3, kind: input, shape index: {}]
  %s4 = inlined_call_operand.vmem [shape: f32[2,16,16,128], index: 4, kind: output, shape index: {0}]
  %s5 = inlined_call_operand.vmem [shape: f32[2,1,128], index: 5, kind: output, shape index: {1}]
  %s6 = inlined_call_operand.vmem [shape: f32[2,1,128], index: 6, kind: output, shape index: {2}]
  %7 = xla_tuple %s4, %s5, %s6
  %s8 = sld [smem:[#allocation0]]
  $region65: #{basicblock_forward.4} parent=0
    _
  %s10 = ssub.s32 1, %s8
  %s11 = scalar_select 0, %s10, %s8
  loop: start=0, step=1, limit=4
  $region2: #{basicblock_forward.4} parent=0 // loop_pre_header
    _
  $region3: #{basicblock_forward.4} parent=0 // loop_header
    %s13 = sphi 0, %s17
    %p14 = scmp.ge.s32.totalorder %s13, 4
    %s23 = sphi 0, %s25
    %s26 = sphi 0, %s23
    %s27 = sphi 0, %s26
    %s43 = sphi 0, %s27
    %s47 = sphi 0, %s47
    %s49 = sphi 0, %s47
    %s50 = sphi 0, %s49
    %s64 = sphi 0, %s50
    %s68 = sphi 0, %s68
    %s70 = sphi 0, %s68
    %s71 = sphi 0, %s70
    %s85 = sphi 0, %s71
    %s89 = sphi 0, %s89
    %s91 = sphi 0, %s89
    %s92 = sphi 0, %s91
    %s106 = sphi 0, %s92
    %s112 = sphi 0, %s114
    %s115 = sphi 0, %s112
    %s116 = sphi 0, %s115
    %s132 = sphi 0, %s116
    %s138 = sphi 0, %s140
    %s141 = sphi 0, %s138
    %s142 = sphi 0, %s141
    %s158 = sphi 0, %s142
    %s164 = sphi 0, %s166
    %s167 = sphi 0, %s164
    %s168 = sphi 0, %s167
    %s184 = sphi 0, %s168
  $region4: #{basicblock_forward.4} parent=0 // loop_header_branch
    %16 = sbr.rel (%p14) target = $region8
  $region5: #{basicblock_forward.4} parent=0 // loop_body
    %s18 = ssub.s32 %s13, 1
    %s19 = ssub.s32 %s13, 2
    %s20 = sadd.s32 %s13, 1
    %s21 = ssub.s32 %s13, %s20
    %p22 = scmp.eq.s32.totalorder %s21, 0
    %s24 = sadd.s32 %s23, 1
    %s25 = scalar_select %p22, %s23, %s24
    %p28 = pneg %p22
    %p29 = scmp.eq.s32.totalorder %s13, 1
    %p30 = por %p28, %p29
    %p31 = scmp.ne.s32.totalorder %s23, %s26
    %p32 = scmp.eq.s32.totalorder %s13, 0
    %p33 = por %p31, %p32
    %p34 = scmp.ne.s32.totalorder %s23, %s26
    %p35 = scmp.eq.s32.totalorder %s18, 1
    %p36 = por %p34, %p35
    %p37 = scmp.ne.s32.totalorder %s26, %s27
    %p38 = scmp.eq.s32.totalorder %s18, 0
    %p39 = por %p37, %p38
    %p40 = scmp.ne.s32.totalorder %s26, %s27
    %p41 = scmp.eq.s32.totalorder %s19, 1
    %p42 = por %p40, %p41
    %p44 = scmp.ne.s32.totalorder %s27, %s43
    %p45 = scmp.eq.s32.totalorder %s19, 0
    %p46 = por %p44, %p45
    %s48 = sadd.s32 %s47, 1
    %p51 = scmp.eq.s32.totalorder %s13, 1
    %p52 = scmp.ne.s32.totalorder %s47, %s49
    %p53 = scmp.eq.s32.totalorder %s13, 0
    %p54 = por %p52, %p53
    %p55 = scmp.ne.s32.totalorder %s47, %s49
    %p56 = scmp.eq.s32.totalorder %s18, 1
    %p57 = por %p55, %p56
    %p58 = scmp.ne.s32.totalorder %s49, %s50
    %p59 = scmp.eq.s32.totalorder %s18, 0
    %p60 = por %p58, %p59
    %p61 = scmp.ne.s32.totalorder %s49, %s50
    %p62 = scmp.eq.s32.totalorder %s19, 1
    %p63 = por %p61, %p62
    %p65 = scmp.ne.s32.totalorder %s50, %s64
    %p66 = scmp.eq.s32.totalorder %s19, 0
    %p67 = por %p65, %p66
    %s69 = sadd.s32 %s68, 1
    %p72 = scmp.eq.s32.totalorder %s13, 1
    %p73 = scmp.ne.s32.totalorder %s68, %s70
    %p74 = scmp.eq.s32.totalorder %s13, 0
    %p75 = por %p73, %p74
    %p76 = scmp.ne.s32.totalorder %s68, %s70
    %p77 = scmp.eq.s32.totalorder %s18, 1
    %p78 = por %p76, %p77
    %p79 = scmp.ne.s32.totalorder %s70, %s71
    %p80 = scmp.eq.s32.totalorder %s18, 0
    %p81 = por %p79, %p80
    %p82 = scmp.ne.s32.totalorder %s70, %s71
    %p83 = scmp.eq.s32.totalorder %s19, 1
    %p84 = por %p82, %p83
    %p86 = scmp.ne.s32.totalorder %s71, %s85
    %p87 = scmp.eq.s32.totalorder %s19, 0
    %p88 = por %p86, %p87
    %s90 = sadd.s32 %s89, 1
    %p93 = scmp.eq.s32.totalorder %s13, 1
    %p94 = scmp.ne.s32.totalorder %s89, %s91
    %p95 = scmp.eq.s32.totalorder %s13, 0
    %p96 = por %p94, %p95
    %p97 = scmp.ne.s32.totalorder %s89, %s91
    %p98 = scmp.eq.s32.totalorder %s18, 1
    %p99 = por %p97, %p98
    %p100 = scmp.ne.s32.totalorder %s91, %s92
    %p101 = scmp.eq.s32.totalorder %s18, 0
    %p102 = por %p100, %p101
    %p103 = scmp.ne.s32.totalorder %s91, %s92
    %p104 = scmp.eq.s32.totalorder %s19, 1
    %p105 = por %p103, %p104
    %p107 = scmp.ne.s32.totalorder %s92, %s106
    %p108 = scmp.eq.s32.totalorder %s19, 0
    %p109 = por %p107, %p108
    %s110 = ssub.s32 %s13, %s20
    %p111 = scmp.eq.s32.totalorder %s110, 0
    %s113 = sadd.s32 %s112, 1
    %s114 = scalar_select %p111, %s112, %s113
    %p117 = pneg %p111
    %p118 = scmp.eq.s32.totalorder %s13, 1
    %p119 = por %p117, %p118
    %p120 = scmp.ne.s32.totalorder %s112, %s115
    %p121 = scmp.eq.s32.totalorder %s13, 0
    %p122 = por %p120, %p121
    %p123 = scmp.ne.s32.totalorder %s112, %s115
    %p124 = scmp.eq.s32.totalorder %s18, 1
    %p125 = por %p123, %p124
    %p126 = scmp.ne.s32.totalorder %s115, %s116
    %p127 = scmp.eq.s32.totalorder %s18, 0
    %p128 = por %p126, %p127
    %p129 = scmp.ne.s32.totalorder %s115, %s116
    %p130 = scmp.eq.s32.totalorder %s19, 1
    %p131 = por %p129, %p130
    %p133 = scmp.ne.s32.totalorder %s116, %s132
    %p134 = scmp.eq.s32.totalorder %s19, 0
    %p135 = por %p133, %p134
    %s136 = ssub.s32 %s13, %s20
    %p137 = scmp.eq.s32.totalorder %s136, 0
    %s139 = sadd.s32 %s138, 1
    %s140 = scalar_select %p137, %s138, %s139
    %p143 = pneg %p137
    %p144 = scmp.eq.s32.totalorder %s13, 1
    %p145 = por %p143, %p144
    %p146 = scmp.ne.s32.totalorder %s138, %s141
    %p147 = scmp.eq.s32.totalorder %s13, 0
    %p148 = por %p146, %p147
    %p149 = scmp.ne.s32.totalorder %s138, %s141
    %p150 = scmp.eq.s32.totalorder %s18, 1
    %p151 = por %p149, %p150
    %p152 = scmp.ne.s32.totalorder %s141, %s142
    %p153 = scmp.eq.s32.totalorder %s18, 0
    %p154 = por %p152, %p153
    %p155 = scmp.ne.s32.totalorder %s141, %s142
    %p156 = scmp.eq.s32.totalorder %s19, 1
    %p157 = por %p155, %p156
    %p159 = scmp.ne.s32.totalorder %s142, %s158
    %p160 = scmp.eq.s32.totalorder %s19, 0
    %p161 = por %p159, %p160
    %s162 = ssub.s32 %s13, %s20
    %p163 = scmp.eq.s32.totalorder %s162, 0
    %s165 = sadd.s32 %s164, 1
    %s166 = scalar_select %p163, %s164, %s165
    %p169 = pneg %p163
    %p170 = scmp.eq.s32.totalorder %s13, 1
    %p171 = por %p169, %p170
    %p172 = scmp.ne.s32.totalorder %s164, %s167
    %p173 = scmp.eq.s32.totalorder %s13, 0
    %p174 = por %p172, %p173
    %p175 = scmp.ne.s32.totalorder %s164, %s167
    %p176 = scmp.eq.s32.totalorder %s18, 1
    %p177 = por %p175, %p176
    %p178 = scmp.ne.s32.totalorder %s167, %s168
    %p179 = scmp.eq.s32.totalorder %s18, 0
    %p180 = por %p178, %p179
    %p181 = scmp.ne.s32.totalorder %s167, %s168
    %p182 = scmp.eq.s32.totalorder %s19, 1
    %p183 = por %p181, %p182
    %p185 = scmp.ne.s32.totalorder %s168, %s184
    %p186 = scmp.eq.s32.totalorder %s19, 0
    %p187 = por %p185, %p186
    %p188 = scmp.le.s32.totalorder 1, %s13
    %p189 = scmp.lt.s32.totalorder %s13, 3
    %p190 = pnand %p188, %p189
    %p191 = pneg %p190
    // Predicated region
    $region9: #{basicblock_forward.4} parent=5 // pred_check
      _
    $region10: #{basicblock_forward.4} parent=5 // pred_check_branch
      %193 = sbr.rel (%p190) target = $region12
    $region11: #{basicblock_forward.4} parent=5 // pred_region
      %s194 = ssub.s32 %s13, 1
      // Predicated region
      $region13: #{basicblock_forward.4} parent=11 // pred_check
        %p195 = pneg %p60
      $region14: #{basicblock_forward.4} parent=11 // pred_check_branch
        %197 = sbr.rel (%p195) target = $region16
      $region15: #{basicblock_forward.4} parent=11 // pred_region
        _
      $region16: #{basicblock_forward.4} parent=11 // pred_fallthru
        _
      // Predicated region
      $region17: #{basicblock_forward.4} parent=11 // pred_check
        %p198 = pneg %p81
      $region18: #{basicblock_forward.4} parent=11 // pred_check_branch
        %200 = sbr.rel (%p198) target = $region20
      $region19: #{basicblock_forward.4} parent=11 // pred_region
        _
      $region20: #{basicblock_forward.4} parent=11 // pred_fallthru
        _
      // Predicated region
      $region21: #{basicblock_forward.4} parent=11 // pred_check
        %p201 = pneg %p102
      $region22: #{basicblock_forward.4} parent=11 // pred_check_branch
        %203 = sbr.rel (%p201) target = $region24
      $region23: #{basicblock_forward.4} parent=11 // pred_region
        _
      $region24: #{basicblock_forward.4} parent=11 // pred_fallthru
        _
    $region12: #{basicblock_forward.4} parent=5 // pred_fallthru
      _
    %p204 = scmp.lt.s32.totalorder %s13, 2
    // Predicated region
    $region25: #{basicblock_forward.4} parent=5 // pred_check
      %p205 = pneg %p204
    $region26: #{basicblock_forward.4} parent=5 // pred_check_branch
      %207 = sbr.rel (%p205) target = $region28
    $region27: #{basicblock_forward.4} parent=5 // pred_region
      // Predicated region
      $region29: #{basicblock_forward.4} parent=27 // pred_check
        %p208 = pneg %p33
      $region30: #{basicblock_forward.4} parent=27 // pred_check_branch
        %210 = sbr.rel (%p208) target = $region32
      $region31: #{basicblock_forward.4} parent=27 // pred_region
        %p211 = scmp.lt.s32.totalorder %s13, 1
        %s212 = scalar_select %p211, %s13, 1
        %s213 = smul.addr %s212, 32
        %s214 = smul.addr %s213, 4
        %s215 = scalar_lea.vmem %s0, %s214
      $region32: #{basicblock_forward.4} parent=27 // pred_fallthru
        _
    $region28: #{basicblock_forward.4} parent=5 // pred_fallthru
      _
    %p216 = scmp.le.s32.totalorder 1, %s13
    %p217 = scmp.lt.s32.totalorder %s13, 3
    %p218 = pnand %p216, %p217
    %p219 = pneg %p218
    // Predicated region
    $region33: #{basicblock_forward.4} parent=5 // pred_check
      _
    $region34: #{basicblock_forward.4} parent=5 // pred_check_branch
      %221 = sbr.rel (%p218) target = $region36
    $region35: #{basicblock_forward.4} parent=5 // pred_region
      %s222 = ssub.s32 %s13, 1
      %p223 = scmp.lt.s32.totalorder %s18, 1
      %s224 = scalar_select %p223, %s18, 1
      %s225 = smul.addr %s224, 32
      %s226 = smul.addr %s225, 4
      %s227 = scalar_lea.vmem %s0, %s226
      %p228 = pneg %p39
      %p229 = pneg %p36
      %p230 = pneg %p60
      %p231 = pneg %p57
      %p232 = pneg %p81
      %p233 = pneg %p78
      %p234 = pneg %p102
      %p235 = pneg %p99
      %p236 = pneg %p128
      %p237 = pneg %p125
      %p238 = scmp.lt.s32.totalorder %s18, 1
      %s239 = scalar_select %p238, %s18, 1
      %s240 = smul.addr %s239, 32
      %s241 = smul.addr %s240, 8
      %s242 = scalar_lea.vmem %s4, %s241
      %p243 = pneg %p154
      %p244 = pneg %p151
      %p245 = scmp.lt.s32.totalorder %s18, 1
      %s246 = scalar_select %p245, %s18, 1
      %s247 = scalar_lea.vmem %s5, %s246
      %p248 = pneg %p180
      %p249 = pneg %p177
      %p250 = scmp.lt.s32.totalorder %s18, 1
      %s251 = scalar_select %p250, %s18, 1
      %s252 = scalar_lea.vmem %s6, %s251
      %p253 = scmp.lt.s32.totalorder %s18, 1
      %s254 = scalar_select %p253, %s18, 1
      %s255 = smul.addr %s254, 32
      %s256 = smul.addr %s255, 4
      %s257 = scalar_lea.vmem %s0, %s256
      %p258 = scmp.lt.s32.totalorder %s18, 1
      %s259 = scalar_select %p258, %s18, 1
      %s260 = smul.addr %s259, 32
      %s261 = smul.addr %s260, 8
      %s262 = scalar_lea.vmem %s4, %s261
      %p263 = scmp.lt.s32.totalorder %s18, 1
      %s264 = scalar_select %p263, %s18, 1
      %s265 = scalar_lea.vmem %s5, %s264
      %p266 = scmp.lt.s32.totalorder %s18, 1
      %s267 = scalar_select %p266, %s18, 1
      %s268 = scalar_lea.vmem %s6, %s267
      %v269 = vld [vmem:[%s257] sm:$0xf]
      %v270 = vld [vmem:[%s257 + $0x4] sm:$0xf]
      %v271 = vld [vmem:[%s257 + $0x8] sm:$0xf]
      %v272 = vld [vmem:[%s257 + $0xc] sm:$0xf]
      %v273 = vld [vmem:[%s257 + $0x10] sm:$0xf]
      %v274 = vld [vmem:[%s257 + $0x14] sm:$0xf]
      %v275 = vld [vmem:[%s257 + $0x18] sm:$0xf]
      %v276 = vld [vmem:[%s257 + $0x1c] sm:$0xf]
      %v277 = vld [vmem:[%s257 + $0x20] sm:$0xf]
      %v278 = vld [vmem:[%s257 + $0x24] sm:$0xf]
      %v279 = vld [vmem:[%s257 + $0x28] sm:$0xf]
      %v280 = vld [vmem:[%s257 + $0x2c] sm:$0xf]
      %v281 = vld [vmem:[%s257 + $0x30] sm:$0xf]
      %v282 = vld [vmem:[%s257 + $0x34] sm:$0xf]
      %v283 = vld [vmem:[%s257 + $0x38] sm:$0xf]
      %v284 = vld [vmem:[%s257 + $0x3c] sm:$0xf]
      %v285 = vld [vmem:[%s257 + $0x40] sm:$0xf]
      %v286 = vld [vmem:[%s257 + $0x44] sm:$0xf]
      %v287 = vld [vmem:[%s257 + $0x48] sm:$0xf]
      %v288 = vld [vmem:[%s257 + $0x4c] sm:$0xf]
      %v289 = vld [vmem:[%s257 + $0x50] sm:$0xf]
      %v290 = vld [vmem:[%s257 + $0x54] sm:$0xf]
      %v291 = vld [vmem:[%s257 + $0x58] sm:$0xf]
      %v292 = vld [vmem:[%s257 + $0x5c] sm:$0xf]
      %v293 = vld [vmem:[%s257 + $0x60] sm:$0xf]
      %v294 = vld [vmem:[%s257 + $0x64] sm:$0xf]
      %v295 = vld [vmem:[%s257 + $0x68] sm:$0xf]
      %v296 = vld [vmem:[%s257 + $0x6c] sm:$0xf]
      %v297 = vld [vmem:[%s257 + $0x70] sm:$0xf]
      %v298 = vld [vmem:[%s257 + $0x74] sm:$0xf]
      %v299 = vld [vmem:[%s257 + $0x78] sm:$0xf]
      %v300 = vld [vmem:[%s257 + $0x7c] sm:$0xf]
      %v301 = vunpack.c.l.bf16 %v269
      %v302 = vunpack.c.l.bf16 %v270
      %v303 = vunpack.c.l.bf16 %v271
      %v304 = vunpack.c.l.bf16 %v272
      %v305 = vunpack.c.l.bf16 %v273
      %v306 = vunpack.c.l.bf16 %v274
      %v307 = vunpack.c.l.bf16 %v275
      %v308 = vunpack.c.l.bf16 %v276
      %v309 = vunpack.c.l.bf16 %v277
      %v310 = vunpack.c.l.bf16 %v278
      %v311 = vunpack.c.l.bf16 %v279
      %v312 = vunpack.c.l.bf16 %v280
      %v313 = vunpack.c.l.bf16 %v281
      %v314 = vunpack.c.l.bf16 %v282
      %v315 = vunpack.c.l.bf16 %v283
      %v316 = vunpack.c.l.bf16 %v284
      %v317 = vunpack.c.l.bf16 %v285
      %v318 = vunpack.c.l.bf16 %v286
      %v319 = vunpack.c.l.bf16 %v287
      %v320 = vunpack.c.l.bf16 %v288
      %v321 = vunpack.c.l.bf16 %v289
      %v322 = vunpack.c.l.bf16 %v290
      %v323 = vunpack.c.l.bf16 %v291
      %v324 = vunpack.c.l.bf16 %v292
      %v325 = vunpack.c.l.bf16 %v293
      %v326 = vunpack.c.l.bf16 %v294
      %v327 = vunpack.c.l.bf16 %v295
      %v328 = vunpack.c.l.bf16 %v296
      %v329 = vunpack.c.l.bf16 %v297
      %v330 = vunpack.c.l.bf16 %v298
      %v331 = vunpack.c.l.bf16 %v299
      %v332 = vunpack.c.l.bf16 %v300
      %v333 = vld [vmem:[%s1] sm:$0x1]
      %v335 = vperm.slane %v333, 0
      %v337 = vmul.f32 %v301, %v335
      %v338 = vmul.f32 %v302, %v335
      %v339 = vmul.f32 %v303, %v335
      %v340 = vmul.f32 %v304, %v335
      %v341 = vmul.f32 %v305, %v335
      %v342 = vmul.f32 %v306, %v335
      %v343 = vmul.f32 %v307, %v335
      %v344 = vmul.f32 %v308, %v335
      %v345 = vmul.f32 %v309, %v335
      %v346 = vmul.f32 %v310, %v335
      %v347 = vmul.f32 %v311, %v335
      %v348 = vmul.f32 %v312, %v335
      %v349 = vmul.f32 %v313, %v335
      %v350 = vmul.f32 %v314, %v335
      %v351 = vmul.f32 %v315, %v335
      %v352 = vmul.f32 %v316, %v335
      %v353 = vmul.f32 %v317, %v335
      %v354 = vmul.f32 %v318, %v335
      %v355 = vmul.f32 %v319, %v335
      %v356 = vmul.f32 %v320, %v335
      %v357 = vmul.f32 %v321, %v335
      %v358 = vmul.f32 %v322, %v335
      %v359 = vmul.f32 %v323, %v335
      %v360 = vmul.f32 %v324, %v335
      %v361 = vmul.f32 %v325, %v335
      %v362 = vmul.f32 %v326, %v335
      %v363 = vmul.f32 %v327, %v335
      %v364 = vmul.f32 %v328, %v335
      %v365 = vmul.f32 %v329, %v335
      %v366 = vmul.f32 %v330, %v335
      %v367 = vmul.f32 %v331, %v335
      %v368 = vmul.f32 %v332, %v335
      %v369 = vld [vmem:[%s2] sm:$0x1]
      %v371 = vperm.slane %v369, 0
      %v373 = vadd.f32 %v337, %v371
      %v374 = vadd.f32 %v338, %v371
      %v375 = vadd.f32 %v339, %v371
      %v376 = vadd.f32 %v340, %v371
      %v377 = vadd.f32 %v341, %v371
      %v378 = vadd.f32 %v342, %v371
      %v379 = vadd.f32 %v343, %v371
      %v380 = vadd.f32 %v344, %v371
      %v381 = vadd.f32 %v345, %v371
      %v382 = vadd.f32 %v346, %v371
      %v383 = vadd.f32 %v347, %v371
      %v384 = vadd.f32 %v348, %v371
      %v385 = vadd.f32 %v349, %v371
      %v386 = vadd.f32 %v350, %v371
      %v387 = vadd.f32 %v351, %v371
      %v388 = vadd.f32 %v352, %v371
      %v389 = vadd.f32 %v353, %v371
      %v390 = vadd.f32 %v354, %v371
      %v391 = vadd.f32 %v355, %v371
      %v392 = vadd.f32 %v356, %v371
      %v393 = vadd.f32 %v357, %v371
      %v394 = vadd.f32 %v358, %v371
      %v395 = vadd.f32 %v359, %v371
      %v396 = vadd.f32 %v360, %v371
      %v397 = vadd.f32 %v361, %v371
      %v398 = vadd.f32 %v362, %v371
      %v399 = vadd.f32 %v363, %v371
      %v400 = vadd.f32 %v364, %v371
      %v401 = vadd.f32 %v365, %v371
      %v402 = vadd.f32 %v366, %v371
      %v403 = vadd.f32 %v367, %v371
      %v404 = vadd.f32 %v368, %v371
      %v405 = vmax.f32 %v373, 0.0
      %v406 = vmax.f32 %v374, 0.0
      %v407 = vmax.f32 %v375, 0.0
      %v408 = vmax.f32 %v376, 0.0
      %v409 = vmax.f32 %v377, 0.0
      %v410 = vmax.f32 %v378, 0.0
      %v411 = vmax.f32 %v379, 0.0
      %v412 = vmax.f32 %v380, 0.0
      %v413 = vmax.f32 %v381, 0.0
      %v414 = vmax.f32 %v382, 0.0
      %v415 = vmax.f32 %v383, 0.0
      %v416 = vmax.f32 %v384, 0.0
      %v417 = vmax.f32 %v385, 0.0
      %v418 = vmax.f32 %v386, 0.0
      %v419 = vmax.f32 %v387, 0.0
      %v420 = vmax.f32 %v388, 0.0
      %v421 = vmax.f32 %v389, 0.0
      %v422 = vmax.f32 %v390, 0.0
      %v423 = vmax.f32 %v391, 0.0
      %v424 = vmax.f32 %v392, 0.0
      %v425 = vmax.f32 %v393, 0.0
      %v426 = vmax.f32 %v394, 0.0
      %v427 = vmax.f32 %v395, 0.0
      %v428 = vmax.f32 %v396, 0.0
      %v429 = vmax.f32 %v397, 0.0
      %v430 = vmax.f32 %v398, 0.0
      %v431 = vmax.f32 %v399, 0.0
      %v432 = vmax.f32 %v400, 0.0
      %v433 = vmax.f32 %v401, 0.0
      %v434 = vmax.f32 %v402, 0.0
      %v435 = vmax.f32 %v403, 0.0
      %v436 = vmax.f32 %v404, 0.0
      %437 = vst [vmem:[#allocation2] sm:$0xff] 0.0
      %438 = vst [vmem:[#allocation2 + $0x8] sm:$0xff] 0.0
      %439 = vst [vmem:[#allocation2 + $0x10] sm:$0x3] 0.0
      %440 = vst [vmem:[#allocation2 + $0x18] sm:$0xff] 0.0
      %441 = vst [vmem:[#allocation2 + $0x20] sm:$0xff] 0.0
      %442 = vst [vmem:[#allocation2 + $0x28] sm:$0x3] 0.0
      %443 = vst [vmem:[#allocation2 + $0x30] sm:$0xff] 0.0
      %444 = vst [vmem:[#allocation2 + $0x38] sm:$0xff] 0.0
      %445 = vst [vmem:[#allocation2 + $0x40] sm:$0x3] 0.0
      %446 = vst [vmem:[#allocation2 + $0x48] sm:$0xff] 0.0
      %447 = vst [vmem:[#allocation2 + $0x50] sm:$0xff] 0.0
      %448 = vst [vmem:[#allocation2 + $0x58] sm:$0x3] 0.0
      %449 = vst [vmem:[#allocation2 + $0x60] sm:$0xff] 0.0
      %450 = vst [vmem:[#allocation2 + $0x68] sm:$0xff] 0.0
      %451 = vst [vmem:[#allocation2 + $0x70] sm:$0x3] 0.0
      %452 = vst [vmem:[#allocation2 + $0x78] sm:$0xff] 0.0
      %453 = vst [vmem:[#allocation2 + $0x80] sm:$0xff] 0.0
      %454 = vst [vmem:[#allocation2 + $0x88] sm:$0x3] 0.0
      %455 = vst [vmem:[#allocation2 + $0x90] sm:$0xff] 0.0
      %456 = vst [vmem:[#allocation2 + $0x98] sm:$0xff] 0.0
      %457 = vst [vmem:[#allocation2 + $0xa0] sm:$0x3] 0.0
      %458 = vst [vmem:[#allocation2 + $0xa8] sm:$0xff] 0.0
      %459 = vst [vmem:[#allocation2 + $0xb0] sm:$0xff] 0.0
      %460 = vst [vmem:[#allocation2 + $0xb8] sm:$0x3] 0.0
      %461 = vst [vmem:[#allocation2 + $0xc0] sm:$0xff] 0.0
      %462 = vst [vmem:[#allocation2 + $0xc8] sm:$0xff] 0.0
      %463 = vst [vmem:[#allocation2 + $0xd0] sm:$0x3] 0.0
      %464 = vst [vmem:[#allocation2 + $0xd8] sm:$0xff] 0.0
      %465 = vst [vmem:[#allocation2 + $0xe0] sm:$0xff] 0.0
      %466 = vst [vmem:[#allocation2 + $0xe8] sm:$0x3] 0.0
      %467 = vst [vmem:[#allocation2 + $0xf0] sm:$0xff] 0.0
      %468 = vst [vmem:[#allocation2 + $0xf8] sm:$0xff] 0.0
      %469 = vst [vmem:[#allocation2 + $0x100] sm:$0x3] 0.0
      %470 = vst [vmem:[#allocation2 + $0x108] sm:$0xff] 0.0
      %471 = vst [vmem:[#allocation2 + $0x110] sm:$0xff] 0.0
      %472 = vst [vmem:[#allocation2 + $0x118] sm:$0x3] 0.0
      %473 = vst [vmem:[#allocation2 + $0x120] sm:$0xff] 0.0
      %474 = vst [vmem:[#allocation2 + $0x128] sm:$0xff] 0.0
      %475 = vst [vmem:[#allocation2 + $0x130] sm:$0x3] 0.0
      %476 = vst [vmem:[#allocation2 + $0x138] sm:$0xff] 0.0
      %477 = vst [vmem:[#allocation2 + $0x140] sm:$0xff] 0.0
      %478 = vst [vmem:[#allocation2 + $0x148] sm:$0x3] 0.0
      %479 = vst [vmem:[#allocation2 + $0x150] sm:$0xff] 0.0
      %480 = vst [vmem:[#allocation2 + $0x158] sm:$0xff] 0.0
      %481 = vst [vmem:[#allocation2 + $0x160] sm:$0x3] 0.0
      %482 = vst [vmem:[#allocation2 + $0x168] sm:$0xff] 0.0
      %483 = vst [vmem:[#allocation2 + $0x170] sm:$0xff] 0.0
      %484 = vst [vmem:[#allocation2 + $0x178] sm:$0x3] 0.0
      %485 = vst [vmem:[#allocation2 + $0x180] sm:$0xff] 0.0
      %486 = vst [vmem:[#allocation2 + $0x188] sm:$0xff] 0.0
      %487 = vst [vmem:[#allocation2 + $0x190] sm:$0x3] 0.0
      %488 = vst [vmem:[#allocation2 + $0x198] sm:$0xff] 0.0
      %489 = vst [vmem:[#allocation2 + $0x1a0] sm:$0xff] 0.0
      %490 = vst [vmem:[#allocation2 + $0x1a8] sm:$0x3] 0.0
      %s491 = scalar_lea.vmem [#allocation2], 24
      %492 = vst [vmem:[%s491 + $0x1] sm:$0xff] %v405
      %493 = vst [vmem:[%s491 + $0x9] sm:$0xff] %v406
      %494 = vst [vmem:[%s491 + $0x19] sm:$0xff] %v407
      %495 = vst [vmem:[%s491 + $0x21] sm:$0xff] %v408
      %496 = vst [vmem:[%s491 + $0x31] sm:$0xff] %v409
      %497 = vst [vmem:[%s491 + $0x39] sm:$0xff] %v410
      %498 = vst [vmem:[%s491 + $0x49] sm:$0xff] %v411
      %499 = vst [vmem:[%s491 + $0x51] sm:$0xff] %v412
      %500 = vst [vmem:[%s491 + $0x61] sm:$0xff] %v413
      %501 = vst [vmem:[%s491 + $0x69] sm:$0xff] %v414
      %502 = vst [vmem:[%s491 + $0x79] sm:$0xff] %v415
      %503 = vst [vmem:[%s491 + $0x81] sm:$0xff] %v416
      %504 = vst [vmem:[%s491 + $0x91] sm:$0xff] %v417
      %505 = vst [vmem:[%s491 + $0x99] sm:$0xff] %v418
      %506 = vst [vmem:[%s491 + $0xa9] sm:$0xff] %v419
      %507 = vst [vmem:[%s491 + $0xb1] sm:$0xff] %v420
      %508 = vst [vmem:[%s491 + $0xc1] sm:$0xff] %v421
      %509 = vst [vmem:[%s491 + $0xc9] sm:$0xff] %v422
      %510 = vst [vmem:[%s491 + $0xd9] sm:$0xff] %v423
      %511 = vst [vmem:[%s491 + $0xe1] sm:$0xff] %v424
      %512 = vst [vmem:[%s491 + $0xf1] sm:$0xff] %v425
      %513 = vst [vmem:[%s491 + $0xf9] sm:$0xff] %v426
      %514 = vst [vmem:[%s491 + $0x109] sm:$0xff] %v427
      %515 = vst [vmem:[%s491 + $0x111] sm:$0xff] %v428
      %516 = vst [vmem:[%s491 + $0x121] sm:$0xff] %v429
      %517 = vst [vmem:[%s491 + $0x129] sm:$0xff] %v430
      %518 = vst [vmem:[%s491 + $0x139] sm:$0xff] %v431
      %519 = vst [vmem:[%s491 + $0x141] sm:$0xff] %v432
      %520 = vst [vmem:[%s491 + $0x151] sm:$0xff] %v433
      %521 = vst [vmem:[%s491 + $0x159] sm:$0xff] %v434
      %522 = vst [vmem:[%s491 + $0x169] sm:$0xff] %v435
      %523 = vst [vmem:[%s491 + $0x171] sm:$0xff] %v436
      %v524 = vld [vmem:[#allocation2] sm:$0xff]
      %v525 = vld [vmem:[#allocation2 + $0x8] sm:$0xff]
      %v526 = vld [vmem:[#allocation2 + $0x10] sm:$0x3]
      %v527 = vld [vmem:[#allocation2 + $0x18] sm:$0xff]
      %v528 = vld [vmem:[#allocation2 + $0x20] sm:$0xff]
      %v529 = vld [vmem:[#allocation2 + $0x28] sm:$0x3]
      %v530 = vld [vmem:[#allocation2 + $0x30] sm:$0xff]
      %v531 = vld [vmem:[#allocation2 + $0x38] sm:$0xff]
      %v532 = vld [vmem:[#allocation2 + $0x40] sm:$0x3]
      %v533 = vld [vmem:[#allocation2 + $0x48] sm:$0xff]
      %v534 = vld [vmem:[#allocation2 + $0x50] sm:$0xff]
      %v535 = vld [vmem:[#allocation2 + $0x58] sm:$0x3]
      %v536 = vld [vmem:[#allocation2 + $0x60] sm:$0xff]
      %v537 = vld [vmem:[#allocation2 + $0x68] sm:$0xff]
      %v538 = vld [vmem:[#allocation2 + $0x70] sm:$0x3]
      %v539 = vld [vmem:[#allocation2 + $0x78] sm:$0xff]
      %v540 = vld [vmem:[#allocation2 + $0x80] sm:$0xff]
      %v541 = vld [vmem:[#allocation2 + $0x88] sm:$0x3]
      %v542 = vld [vmem:[#allocation2 + $0x90] sm:$0xff]
      %v543 = vld [vmem:[#allocation2 + $0x98] sm:$0xff]
      %v544 = vld [vmem:[#allocation2 + $0xa0] sm:$0x3]
      %v545 = vld [vmem:[#allocation2 + $0xa8] sm:$0xff]
      %v546 = vld [vmem:[#allocation2 + $0xb0] sm:$0xff]
      %v547 = vld [vmem:[#allocation2 + $0xb8] sm:$0x3]
      %v548 = vld [vmem:[#allocation2 + $0xc0] sm:$0xff]
      %v549 = vld [vmem:[#allocation2 + $0xc8] sm:$0xff]
      %v550 = vld [vmem:[#allocation2 + $0xd0] sm:$0x3]
      %v551 = vld [vmem:[#allocation2 + $0xd8] sm:$0xff]
      %v552 = vld [vmem:[#allocation2 + $0xe0] sm:$0xff]
      %v553 = vld [vmem:[#allocation2 + $0xe8] sm:$0x3]
      %v554 = vld [vmem:[#allocation2 + $0xf0] sm:$0xff]
      %v555 = vld [vmem:[#allocation2 + $0xf8] sm:$0xff]
      %v556 = vld [vmem:[#allocation2 + $0x100] sm:$0x3]
      %v557 = vld [vmem:[#allocation2 + $0x108] sm:$0xff]
      %v558 = vld [vmem:[#allocation2 + $0x110] sm:$0xff]
      %v559 = vld [vmem:[#allocation2 + $0x118] sm:$0x3]
      %v560 = vld [vmem:[#allocation2 + $0x120] sm:$0xff]
      %v561 = vld [vmem:[#allocation2 + $0x128] sm:$0xff]
      %v562 = vld [vmem:[#allocation2 + $0x130] sm:$0x3]
      %v563 = vld [vmem:[#allocation2 + $0x138] sm:$0xff]
      %v564 = vld [vmem:[#allocation2 + $0x140] sm:$0xff]
      %v565 = vld [vmem:[#allocation2 + $0x148] sm:$0x3]
      %v566 = vld [vmem:[#allocation2 + $0x150] sm:$0xff]
      %v567 = vld [vmem:[#allocation2 + $0x158] sm:$0xff]
      %v568 = vld [vmem:[#allocation2 + $0x160] sm:$0x3]
      %v569 = vld [vmem:[#allocation2 + $0x168] sm:$0xff]
      %v570 = vld [vmem:[#allocation2 + $0x170] sm:$0xff]
      %v571 = vld [vmem:[#allocation2 + $0x178] sm:$0x3]
      %v572 = vld [vmem:[#allocation2 + $0x180] sm:$0xff]
      %v573 = vld [vmem:[#allocation2 + $0x188] sm:$0xff]
      %v574 = vld [vmem:[#allocation2 + $0x190] sm:$0x3]
      %v575 = vld [vmem:[#allocation2 + $0x198] sm:$0xff]
      %v576 = vld [vmem:[#allocation2 + $0x1a0] sm:$0xff]
      %v577 = vld [vmem:[#allocation2 + $0x1a8] sm:$0x3]
      %v578 = vpack.c.bf16 %v525, %v524
      %v579 = vpack.c.bf16 %v528, %v527
      %v580 = vpack.c.bf16 %v531, %v530
      %v581 = vpack.c.bf16 %v534, %v533
      %v582 = vpack.c.bf16 %v537, %v536
      %v583 = vpack.c.bf16 %v540, %v539
      %v584 = vpack.c.bf16 %v543, %v542
      %v585 = vpack.c.bf16 %v546, %v545
      %v586 = vpack.c.bf16 %v549, %v548
      %v587 = vpack.c.bf16 %v552, %v551
      %v588 = vpack.c.bf16 %v555, %v554
      %v589 = vpack.c.bf16 %v558, %v557
      %v590 = vpack.c.bf16 %v561, %v560
      %v591 = vpack.c.bf16 %v564, %v563
      %v592 = vpack.c.bf16 %v567, %v566
      %v593 = vpack.c.bf16 %v570, %v569
      %v594 = vld [vmem:[%s3] sm:$0xf]
      %v595 = vld [vmem:[%s3 + $0x4] sm:$0xf]
      %v596 = vld [vmem:[%s3 + $0x8] sm:$0xf]
      %v597 = vld [vmem:[%s3 + $0xc] sm:$0xf]
      %v598 = vld [vmem:[%s3 + $0x10] sm:$0xf]
      %v599 = vld [vmem:[%s3 + $0x14] sm:$0xf]
      %v600 = vld [vmem:[%s3 + $0x18] sm:$0xf]
      %v601 = vld [vmem:[%s3 + $0x1c] sm:$0xf]
      %v602 = vld [vmem:[%s3 + $0x20] sm:$0xf]
      %v603 = vld [vmem:[%s3 + $0x24] sm:$0xf]
      %v604 = vld [vmem:[%s3 + $0x28] sm:$0xf]
      %v605 = vld [vmem:[%s3 + $0x2c] sm:$0xf]
      %v606 = vld [vmem:[%s3 + $0x30] sm:$0xf]
      %v607 = vld [vmem:[%s3 + $0x34] sm:$0xf]
      %v608 = vld [vmem:[%s3 + $0x38] sm:$0xf]
      %v609 = vld [vmem:[%s3 + $0x3c] sm:$0xf]
      %vm658 = vcmask 1046528
      %v659 = vrot.slane %v524, 1
      %v660 = vrot.slane %v525, 1
      %v661 = vsel %vm658, %v659, %v660
      %v662 = vrot.slane %v526, 1
      %v663 = vsel %vm658, %v660, %v662
      %v664 = vrot.slane %v527, 1
      %v665 = vrot.slane %v528, 1
      %v666 = vsel %vm658, %v664, %v665
      %v667 = vrot.slane %v529, 1
      %v668 = vsel %vm658, %v665, %v667
      %v669 = vrot.slane %v530, 1
      %v670 = vrot.slane %v531, 1
      %v671 = vsel %vm658, %v669, %v670
      %v672 = vrot.slane %v532, 1
      %v673 = vsel %vm658, %v670, %v672
      %v674 = vrot.slane %v533, 1
      %v675 = vrot.slane %v534, 1
      %v676 = vsel %vm658, %v674, %v675
      %v677 = vrot.slane %v535, 1
      %v678 = vsel %vm658, %v675, %v677
      %v679 = vrot.slane %v536, 1
      %v680 = vrot.slane %v537, 1
      %v681 = vsel %vm658, %v679, %v680
      %v682 = vrot.slane %v538, 1
      %v683 = vsel %vm658, %v680, %v682
      %v684 = vrot.slane %v539, 1
      %v685 = vrot.slane %v540, 1
      %v686 = vsel %vm658, %v684, %v685
      %v687 = vrot.slane %v541, 1
      %v688 = vsel %vm658, %v685, %v687
      %v689 = vrot.slane %v542, 1
      %v690 = vrot.slane %v543, 1
      %v691 = vsel %vm658, %v689, %v690
      %v692 = vrot.slane %v544, 1
      %v693 = vsel %vm658, %v690, %v692
      %v694 = vrot.slane %v545, 1
      %v695 = vrot.slane %v546, 1
      %v696 = vsel %vm658, %v694, %v695
      %v697 = vrot.slane %v547, 1
      %v698 = vsel %vm658, %v695, %v697
      %v699 = vrot.slane %v548, 1
      %v700 = vrot.slane %v549, 1
      %v701 = vsel %vm658, %v699, %v700
      %v702 = vrot.slane %v550, 1
      %v703 = vsel %vm658, %v700, %v702
      %v704 = vrot.slane %v551, 1
      %v705 = vrot.slane %v552, 1
      %v706 = vsel %vm658, %v704, %v705
      %v707 = vrot.slane %v553, 1
      %v708 = vsel %vm658, %v705, %v707
      %v709 = vrot.slane %v554, 1
      %v710 = vrot.slane %v555, 1
      %v711 = vsel %vm658, %v709, %v710
      %v712 = vrot.slane %v556, 1
      %v713 = vsel %vm658, %v710, %v712
      %v714 = vrot.slane %v557, 1
      %v715 = vrot.slane %v558, 1
      %v716 = vsel %vm658, %v714, %v715
      %v717 = vrot.slane %v559, 1
      %v718 = vsel %vm658, %v715, %v717
      %v719 = vrot.slane %v560, 1
      %v720 = vrot.slane %v561, 1
      %v721 = vsel %vm658, %v719, %v720
      %v722 = vrot.slane %v562, 1
      %v723 = vsel %vm658, %v720, %v722
      %v724 = vrot.slane %v563, 1
      %v725 = vrot.slane %v564, 1
      %v726 = vsel %vm658, %v724, %v725
      %v727 = vrot.slane %v565, 1
      %v728 = vsel %vm658, %v725, %v727
      %v729 = vrot.slane %v566, 1
      %v730 = vrot.slane %v567, 1
      %v731 = vsel %vm658, %v729, %v730
      %v732 = vrot.slane %v568, 1
      %v733 = vsel %vm658, %v730, %v732
      %v734 = vrot.slane %v569, 1
      %v735 = vrot.slane %v570, 1
      %v736 = vsel %vm658, %v734, %v735
      %v737 = vrot.slane %v571, 1
      %v738 = vsel %vm658, %v735, %v737
      %v771 = vpack.c.bf16 %v663, %v661
      %v772 = vpack.c.bf16 %v668, %v666
      %v773 = vpack.c.bf16 %v673, %v671
      %v774 = vpack.c.bf16 %v678, %v676
      %v775 = vpack.c.bf16 %v683, %v681
      %v776 = vpack.c.bf16 %v688, %v686
      %v777 = vpack.c.bf16 %v693, %v691
      %v778 = vpack.c.bf16 %v698, %v696
      %v779 = vpack.c.bf16 %v703, %v701
      %v780 = vpack.c.bf16 %v708, %v706
      %v781 = vpack.c.bf16 %v713, %v711
      %v782 = vpack.c.bf16 %v718, %v716
      %v783 = vpack.c.bf16 %v723, %v721
      %v784 = vpack.c.bf16 %v728, %v726
      %v785 = vpack.c.bf16 %v733, %v731
      %v786 = vpack.c.bf16 %v738, %v736
      %s787 = scalar_lea.vmem %s3, 64
      %v788 = vld [vmem:[%s787] sm:$0xf]
      %v789 = vld [vmem:[%s787 + $0x4] sm:$0xf]
      %v790 = vld [vmem:[%s787 + $0x8] sm:$0xf]
      %v791 = vld [vmem:[%s787 + $0xc] sm:$0xf]
      %v792 = vld [vmem:[%s787 + $0x10] sm:$0xf]
      %v793 = vld [vmem:[%s787 + $0x14] sm:$0xf]
      %v794 = vld [vmem:[%s787 + $0x18] sm:$0xf]
      %v795 = vld [vmem:[%s787 + $0x1c] sm:$0xf]
      %v796 = vld [vmem:[%s787 + $0x20] sm:$0xf]
      %v797 = vld [vmem:[%s787 + $0x24] sm:$0xf]
      %v798 = vld [vmem:[%s787 + $0x28] sm:$0xf]
      %v799 = vld [vmem:[%s787 + $0x2c] sm:$0xf]
      %v800 = vld [vmem:[%s787 + $0x30] sm:$0xf]
      %v801 = vld [vmem:[%s787 + $0x34] sm:$0xf]
      %v802 = vld [vmem:[%s787 + $0x38] sm:$0xf]
      %v803 = vld [vmem:[%s787 + $0x3c] sm:$0xf]
      %v820 = vunpack.c.l.b16 %v788
      %v821 = vunpack.c.l.b16 %v789
      %v822 = vunpack.c.l.b16 %v790
      %v823 = vunpack.c.l.b16 %v791
      %v824 = vunpack.c.l.b16 %v792
      %v825 = vunpack.c.l.b16 %v793
      %v826 = vunpack.c.l.b16 %v794
      %v827 = vunpack.c.l.b16 %v795
      %v828 = vunpack.c.l.b16 %v796
      %v829 = vunpack.c.l.b16 %v797
      %v830 = vunpack.c.l.b16 %v798
      %v831 = vunpack.c.l.b16 %v799
      %v832 = vunpack.c.l.b16 %v800
      %v833 = vunpack.c.l.b16 %v801
      %v834 = vunpack.c.l.b16 %v802
      %v835 = vunpack.c.l.b16 %v803
      %v836 = vpack.c.b16 %v821, %v820
      %v837 = vpack.c.b16 %v823, %v822
      %v838 = vpack.c.b16 %v825, %v824
      %v839 = vpack.c.b16 %v827, %v826
      %v840 = vpack.c.b16 %v829, %v828
      %v841 = vpack.c.b16 %v831, %v830
      %v842 = vpack.c.b16 %v833, %v832
      %v843 = vpack.c.b16 %v835, %v834
      %852 = vmatpush.bf16.msra.mxu0 %v843
      %853 = vmatpush.bf16.msra.mxu0 %v842
      %854 = vmatpush.bf16.msra.mxu0 %v841
      %855 = vmatpush.bf16.msra.mxu0 %v840
      %856 = vmatpush.bf16.msra.mxu0 %v839
      %857 = vmatpush.bf16.msra.mxu0 %v838
      %858 = vmatpush.bf16.msra.mxu0 %v837
      %859 = vmatpush.bf16.msra.mxu0 %v836
      %860 = vmatmul.bf16.gmra.mxu0 %v771
      %v861 = vpop.f32.mrf.mxu0
      %v862 = vadd.f32 0.0, %v861
      %v863 = vpop.f32.mrf.mxu0
      %v864 = vadd.f32 0.0, %v863
      %865 = vmatmul.bf16.gmra.mxu0 %v772
      %v866 = vpop.f32.mrf.mxu0
      %v867 = vadd.f32 0.0, %v866
      %v868 = vpop.f32.mrf.mxu0
      %v869 = vadd.f32 0.0, %v868
      %870 = vmatmul.bf16.gmra.mxu0 %v773
      %v871 = vpop.f32.mrf.mxu0
      %v872 = vadd.f32 0.0, %v871
      %v873 = vpop.f32.mrf.mxu0
      %v874 = vadd.f32 0.0, %v873
      %875 = vmatmul.bf16.gmra.mxu0 %v774
      %v876 = vpop.f32.mrf.mxu0
      %v877 = vadd.f32 0.0, %v876
      %v878 = vpop.f32.mrf.mxu0
      %v879 = vadd.f32 0.0, %v878
      %880 = vmatmul.bf16.gmra.mxu0 %v775
      %v881 = vpop.f32.mrf.mxu0
      %v882 = vadd.f32 0.0, %v881
      %v883 = vpop.f32.mrf.mxu0
      %v884 = vadd.f32 0.0, %v883
      %885 = vmatmul.bf16.gmra.mxu0 %v776
      %v886 = vpop.f32.mrf.mxu0
      %v887 = vadd.f32 0.0, %v886
      %v888 = vpop.f32.mrf.mxu0
      %v889 = vadd.f32 0.0, %v888
      %890 = vmatmul.bf16.gmra.mxu0 %v777
      %v891 = vpop.f32.mrf.mxu0
      %v892 = vadd.f32 0.0, %v891
      %v893 = vpop.f32.mrf.mxu0
      %v894 = vadd.f32 0.0, %v893
      %895 = vmatmul.bf16.gmra.mxu0 %v778
      %v896 = vpop.f32.mrf.mxu0
      %v897 = vadd.f32 0.0, %v896
      %v898 = vpop.f32.mrf.mxu0
      %v899 = vadd.f32 0.0, %v898
      %900 = vmatmul.bf16.gmra.mxu0 %v779
      %v901 = vpop.f32.mrf.mxu0
      %v902 = vadd.f32 0.0, %v901
      %v903 = vpop.f32.mrf.mxu0
      %v904 = vadd.f32 0.0, %v903
      %905 = vmatmul.bf16.gmra.mxu0 %v780
      %v906 = vpop.f32.mrf.mxu0
      %v907 = vadd.f32 0.0, %v906
      %v908 = vpop.f32.mrf.mxu0
      %v909 = vadd.f32 0.0, %v908
      %910 = vmatmul.bf16.gmra.mxu0 %v781
      %v911 = vpop.f32.mrf.mxu0
      %v912 = vadd.f32 0.0, %v911
      %v913 = vpop.f32.mrf.mxu0
      %v914 = vadd.f32 0.0, %v913
      %915 = vmatmul.bf16.gmra.mxu0 %v782
      %v916 = vpop.f32.mrf.mxu0
      %v917 = vadd.f32 0.0, %v916
      %v918 = vpop.f32.mrf.mxu0
      %v919 = vadd.f32 0.0, %v918
      %920 = vmatmul.bf16.gmra.mxu0 %v783
      %v921 = vpop.f32.mrf.mxu0
      %v922 = vadd.f32 0.0, %v921
      %v923 = vpop.f32.mrf.mxu0
      %v924 = vadd.f32 0.0, %v923
      %925 = vmatmul.bf16.gmra.mxu0 %v784
      %v926 = vpop.f32.mrf.mxu0
      %v927 = vadd.f32 0.0, %v926
      %v928 = vpop.f32.mrf.mxu0
      %v929 = vadd.f32 0.0, %v928
      %930 = vmatmul.bf16.gmra.mxu0 %v785
      %v931 = vpop.f32.mrf.mxu0
      %v932 = vadd.f32 0.0, %v931
      %v933 = vpop.f32.mrf.mxu0
      %v934 = vadd.f32 0.0, %v933
      %935 = vmatmul.bf16.gmra.mxu0 %v786
      %v936 = vpop.f32.mrf.mxu0
      %v937 = vadd.f32 0.0, %v936
      %v938 = vpop.f32.mrf.mxu0
      %v939 = vadd.f32 0.0, %v938
      %940 = vdwg.mxu0
      %v957 = vunpack.c.l.b16 %v594
      %v958 = vunpack.c.l.b16 %v595
      %v959 = vunpack.c.l.b16 %v596
      %v960 = vunpack.c.l.b16 %v597
      %v961 = vunpack.c.l.b16 %v598
      %v962 = vunpack.c.l.b16 %v599
      %v963 = vunpack.c.l.b16 %v600
      %v964 = vunpack.c.l.b16 %v601
      %v965 = vunpack.c.l.b16 %v602
      %v966 = vunpack.c.l.b16 %v603
      %v967 = vunpack.c.l.b16 %v604
      %v968 = vunpack.c.l.b16 %v605
      %v969 = vunpack.c.l.b16 %v606
      %v970 = vunpack.c.l.b16 %v607
      %v971 = vunpack.c.l.b16 %v608
      %v972 = vunpack.c.l.b16 %v609
      %v973 = vpack.c.b16 %v958, %v957
      %v974 = vpack.c.b16 %v960, %v959
      %v975 = vpack.c.b16 %v962, %v961
      %v976 = vpack.c.b16 %v964, %v963
      %v977 = vpack.c.b16 %v966, %v965
      %v978 = vpack.c.b16 %v968, %v967
      %v979 = vpack.c.b16 %v970, %v969
      %v980 = vpack.c.b16 %v972, %v971
      %989 = vmatpush.bf16.msra.mxu0 %v980
      %990 = vmatpush.bf16.msra.mxu0 %v979
      %991 = vmatpush.bf16.msra.mxu0 %v978
      %992 = vmatpush.bf16.msra.mxu0 %v977
      %993 = vmatpush.bf16.msra.mxu0 %v976
      %994 = vmatpush.bf16.msra.mxu0 %v975
      %995 = vmatpush.bf16.msra.mxu0 %v974
      %996 = vmatpush.bf16.msra.mxu0 %v973
      %997 = vmatmul.bf16.gmra.mxu0 %v578
      %v998 = vpop.f32.mrf.mxu0
      %v999 = vadd.f32 %v862, %v998
      %v1000 = vpop.f32.mrf.mxu0
      %v1001 = vadd.f32 %v864, %v1000
      %1002 = vmatmul.bf16.gmra.mxu0 %v579
      %v1003 = vpop.f32.mrf.mxu0
      %v1004 = vadd.f32 %v867, %v1003
      %v1005 = vpop.f32.mrf.mxu0
      %v1006 = vadd.f32 %v869, %v1005
      %1007 = vmatmul.bf16.gmra.mxu0 %v580
      %v1008 = vpop.f32.mrf.mxu0
      %v1009 = vadd.f32 %v872, %v1008
      %v1010 = vpop.f32.mrf.mxu0
      %v1011 = vadd.f32 %v874, %v1010
      %1012 = vmatmul.bf16.gmra.mxu0 %v581
      %v1013 = vpop.f32.mrf.mxu0
      %v1014 = vadd.f32 %v877, %v1013
      %v1015 = vpop.f32.mrf.mxu0
      %v1016 = vadd.f32 %v879, %v1015
      %1017 = vmatmul.bf16.gmra.mxu0 %v582
      %v1018 = vpop.f32.mrf.mxu0
      %v1019 = vadd.f32 %v882, %v1018
      %v1020 = vpop.f32.mrf.mxu0
      %v1021 = vadd.f32 %v884, %v1020
      %1022 = vmatmul.bf16.gmra.mxu0 %v583
      %v1023 = vpop.f32.mrf.mxu0
      %v1024 = vadd.f32 %v887, %v1023
      %v1025 = vpop.f32.mrf.mxu0
      %v1026 = vadd.f32 %v889, %v1025
      %1027 = vmatmul.bf16.gmra.mxu0 %v584
      %v1028 = vpop.f32.mrf.mxu0
      %v1029 = vadd.f32 %v892, %v1028
      %v1030 = vpop.f32.mrf.mxu0
      %v1031 = vadd.f32 %v894, %v1030
      %1032 = vmatmul.bf16.gmra.mxu0 %v585
      %v1033 = vpop.f32.mrf.mxu0
      %v1034 = vadd.f32 %v897, %v1033
      %v1035 = vpop.f32.mrf.mxu0
      %v1036 = vadd.f32 %v899, %v1035
      %1037 = vmatmul.bf16.gmra.mxu0 %v586
      %v1038 = vpop.f32.mrf.mxu0
      %v1039 = vadd.f32 %v902, %v1038
      %v1040 = vpop.f32.mrf.mxu0
      %v1041 = vadd.f32 %v904, %v1040
      %1042 = vmatmul.bf16.gmra.mxu0 %v587
      %v1043 = vpop.f32.mrf.mxu0
      %v1044 = vadd.f32 %v907, %v1043
      %v1045 = vpop.f32.mrf.mxu0
      %v1046 = vadd.f32 %v909, %v1045
      %1047 = vmatmul.bf16.gmra.mxu0 %v588
      %v1048 = vpop.f32.mrf.mxu0
      %v1049 = vadd.f32 %v912, %v1048
      %v1050 = vpop.f32.mrf.mxu0
      %v1051 = vadd.f32 %v914, %v1050
      %1052 = vmatmul.bf16.gmra.mxu0 %v589
      %v1053 = vpop.f32.mrf.mxu0
      %v1054 = vadd.f32 %v917, %v1053
      %v1055 = vpop.f32.mrf.mxu0
      %v1056 = vadd.f32 %v919, %v1055
      %1057 = vmatmul.bf16.gmra.mxu0 %v590
      %v1058 = vpop.f32.mrf.mxu0
      %v1059 = vadd.f32 %v922, %v1058
      %v1060 = vpop.f32.mrf.mxu0
      %v1061 = vadd.f32 %v924, %v1060
      %1062 = vmatmul.bf16.gmra.mxu0 %v591
      %v1063 = vpop.f32.mrf.mxu0
      %v1064 = vadd.f32 %v927, %v1063
      %v1065 = vpop.f32.mrf.mxu0
      %v1066 = vadd.f32 %v929, %v1065
      %1067 = vmatmul.bf16.gmra.mxu0 %v592
      %v1068 = vpop.f32.mrf.mxu0
      %v1069 = vadd.f32 %v932, %v1068
      %v1070 = vpop.f32.mrf.mxu0
      %v1071 = vadd.f32 %v934, %v1070
      %1072 = vmatmul.bf16.gmra.mxu0 %v593
      %v1073 = vpop.f32.mrf.mxu0
      %v1074 = vadd.f32 %v937, %v1073
      %v1075 = vpop.f32.mrf.mxu0
      %v1076 = vadd.f32 %v939, %v1075
      %1077 = vdwg.mxu0
      %vm1078 = vcmask 1045504
      %v1079 = vrot.slane %v524, 2
      %v1080 = vrot.slane %v525, 2
      %v1081 = vsel %vm1078, %v1079, %v1080
      %v1082 = vrot.slane %v526, 2
      %v1083 = vsel %vm1078, %v1080, %v1082
      %v1084 = vrot.slane %v527, 2
      %v1085 = vrot.slane %v528, 2
      %v1086 = vsel %vm1078, %v1084, %v1085
      %v1087 = vrot.slane %v529, 2
      %v1088 = vsel %vm1078, %v1085, %v1087
      %v1089 = vrot.slane %v530, 2
      %v1090 = vrot.slane %v531, 2
      %v1091 = vsel %vm1078, %v1089, %v1090
      %v1092 = vrot.slane %v532, 2
      %v1093 = vsel %vm1078, %v1090, %v1092
      %v1094 = vrot.slane %v533, 2
      %v1095 = vrot.slane %v534, 2
      %v1096 = vsel %vm1078, %v1094, %v1095
      %v1097 = vrot.slane %v535, 2
      %v1098 = vsel %vm1078, %v1095, %v1097
      %v1099 = vrot.slane %v536, 2
      %v1100 = vrot.slane %v537, 2
      %v1101 = vsel %vm1078, %v1099, %v1100
      %v1102 = vrot.slane %v538, 2
      %v1103 = vsel %vm1078, %v1100, %v1102
      %v1104 = vrot.slane %v539, 2
      %v1105 = vrot.slane %v540, 2
      %v1106 = vsel %vm1078, %v1104, %v1105
      %v1107 = vrot.slane %v541, 2
      %v1108 = vsel %vm1078, %v1105, %v1107
      %v1109 = vrot.slane %v542, 2
      %v1110 = vrot.slane %v543, 2
      %v1111 = vsel %vm1078, %v1109, %v1110
      %v1112 = vrot.slane %v544, 2
      %v1113 = vsel %vm1078, %v1110, %v1112
      %v1114 = vrot.slane %v545, 2
      %v1115 = vrot.slane %v546, 2
      %v1116 = vsel %vm1078, %v1114, %v1115
      %v1117 = vrot.slane %v547, 2
      %v1118 = vsel %vm1078, %v1115, %v1117
      %v1119 = vrot.slane %v548, 2
      %v1120 = vrot.slane %v549, 2
      %v1121 = vsel %vm1078, %v1119, %v1120
      %v1122 = vrot.slane %v550, 2
      %v1123 = vsel %vm1078, %v1120, %v1122
      %v1124 = vrot.slane %v551, 2
      %v1125 = vrot.slane %v552, 2
      %v1126 = vsel %vm1078, %v1124, %v1125
      %v1127 = vrot.slane %v553, 2
      %v1128 = vsel %vm1078, %v1125, %v1127
      %v1129 = vrot.slane %v554, 2
      %v1130 = vrot.slane %v555, 2
      %v1131 = vsel %vm1078, %v1129, %v1130
      %v1132 = vrot.slane %v556, 2
      %v1133 = vsel %vm1078, %v1130, %v1132
      %v1134 = vrot.slane %v557, 2
      %v1135 = vrot.slane %v558, 2
      %v1136 = vsel %vm1078, %v1134, %v1135
      %v1137 = vrot.slane %v559, 2
      %v1138 = vsel %vm1078, %v1135, %v1137
      %v1139 = vrot.slane %v560, 2
      %v1140 = vrot.slane %v561, 2
      %v1141 = vsel %vm1078, %v1139, %v1140
      %v1142 = vrot.slane %v562, 2
      %v1143 = vsel %vm1078, %v1140, %v1142
      %v1144 = vrot.slane %v563, 2
      %v1145 = vrot.slane %v564, 2
      %v1146 = vsel %vm1078, %v1144, %v1145
      %v1147 = vrot.slane %v565, 2
      %v1148 = vsel %vm1078, %v1145, %v1147
      %v1149 = vrot.slane %v566, 2
      %v1150 = vrot.slane %v567, 2
      %v1151 = vsel %vm1078, %v1149, %v1150
      %v1152 = vrot.slane %v568, 2
      %v1153 = vsel %vm1078, %v1150, %v1152
      %v1154 = vrot.slane %v569, 2
      %v1155 = vrot.slane %v570, 2
      %v1156 = vsel %vm1078, %v1154, %v1155
      %v1157 = vrot.slane %v571, 2
      %v1158 = vsel %vm1078, %v1155, %v1157
      %v1191 = vpack.c.bf16 %v1083, %v1081
      %v1192 = vpack.c.bf16 %v1088, %v1086
      %v1193 = vpack.c.bf16 %v1093, %v1091
      %v1194 = vpack.c.bf16 %v1098, %v1096
      %v1195 = vpack.c.bf16 %v1103, %v1101
      %v1196 = vpack.c.bf16 %v1108, %v1106
      %v1197 = vpack.c.bf16 %v1113, %v1111
      %v1198 = vpack.c.bf16 %v1118, %v1116
      %v1199 = vpack.c.bf16 %v1123, %v1121
      %v1200 = vpack.c.bf16 %v1128, %v1126
      %v1201 = vpack.c.bf16 %v1133, %v1131
      %v1202 = vpack.c.bf16 %v1138, %v1136
      %v1203 = vpack.c.bf16 %v1143, %v1141
      %v1204 = vpack.c.bf16 %v1148, %v1146
      %v1205 = vpack.c.bf16 %v1153, %v1151
      %v1206 = vpack.c.bf16 %v1158, %v1156
      %s1207 = scalar_lea.vmem %s3, 128
      %v1208 = vld [vmem:[%s1207] sm:$0xf]
      %v1209 = vld [vmem:[%s1207 + $0x4] sm:$0xf]
      %v1210 = vld [vmem:[%s1207 + $0x8] sm:$0xf]
      %v1211 = vld [vmem:[%s1207 + $0xc] sm:$0xf]
      %v1212 = vld [vmem:[%s1207 + $0x10] sm:$0xf]
      %v1213 = vld [vmem:[%s1207 + $0x14] sm:$0xf]
      %v1214 = vld [vmem:[%s1207 + $0x18] sm:$0xf]
      %v1215 = vld [vmem:[%s1207 + $0x1c] sm:$0xf]
      %v1216 = vld [vmem:[%s1207 + $0x20] sm:$0xf]
      %v1217 = vld [vmem:[%s1207 + $0x24] sm:$0xf]
      %v1218 = vld [vmem:[%s1207 + $0x28] sm:$0xf]
      %v1219 = vld [vmem:[%s1207 + $0x2c] sm:$0xf]
      %v1220 = vld [vmem:[%s1207 + $0x30] sm:$0xf]
      %v1221 = vld [vmem:[%s1207 + $0x34] sm:$0xf]
      %v1222 = vld [vmem:[%s1207 + $0x38] sm:$0xf]
      %v1223 = vld [vmem:[%s1207 + $0x3c] sm:$0xf]
      %v1240 = vunpack.c.l.b16 %v1208
      %v1241 = vunpack.c.l.b16 %v1209
      %v1242 = vunpack.c.l.b16 %v1210
      %v1243 = vunpack.c.l.b16 %v1211
      %v1244 = vunpack.c.l.b16 %v1212
      %v1245 = vunpack.c.l.b16 %v1213
      %v1246 = vunpack.c.l.b16 %v1214
      %v1247 = vunpack.c.l.b16 %v1215
      %v1248 = vunpack.c.l.b16 %v1216
      %v1249 = vunpack.c.l.b16 %v1217
      %v1250 = vunpack.c.l.b16 %v1218
      %v1251 = vunpack.c.l.b16 %v1219
      %v1252 = vunpack.c.l.b16 %v1220
      %v1253 = vunpack.c.l.b16 %v1221
      %v1254 = vunpack.c.l.b16 %v1222
      %v1255 = vunpack.c.l.b16 %v1223
      %v1256 = vpack.c.b16 %v1241, %v1240
      %v1257 = vpack.c.b16 %v1243, %v1242
      %v1258 = vpack.c.b16 %v1245, %v1244
      %v1259 = vpack.c.b16 %v1247, %v1246
      %v1260 = vpack.c.b16 %v1249, %v1248
      %v1261 = vpack.c.b16 %v1251, %v1250
      %v1262 = vpack.c.b16 %v1253, %v1252
      %v1263 = vpack.c.b16 %v1255, %v1254
      %1272 = vmatpush.bf16.msra.mxu0 %v1263
      %1273 = vmatpush.bf16.msra.mxu0 %v1262
      %1274 = vmatpush.bf16.msra.mxu0 %v1261
      %1275 = vmatpush.bf16.msra.mxu0 %v1260
      %1276 = vmatpush.bf16.msra.mxu0 %v1259
      %1277 = vmatpush.bf16.msra.mxu0 %v1258
      %1278 = vmatpush.bf16.msra.mxu0 %v1257
      %1279 = vmatpush.bf16.msra.mxu0 %v1256
      %1280 = vmatmul.bf16.gmra.mxu0 %v1191
      %v1281 = vpop.f32.mrf.mxu0
      %v1282 = vadd.f32 0.0, %v1281
      %v1283 = vpop.f32.mrf.mxu0
      %v1284 = vadd.f32 0.0, %v1283
      %1285 = vmatmul.bf16.gmra.mxu0 %v1192
      %v1286 = vpop.f32.mrf.mxu0
      %v1287 = vadd.f32 0.0, %v1286
      %v1288 = vpop.f32.mrf.mxu0
      %v1289 = vadd.f32 0.0, %v1288
      %1290 = vmatmul.bf16.gmra.mxu0 %v1193
      %v1291 = vpop.f32.mrf.mxu0
      %v1292 = vadd.f32 0.0, %v1291
      %v1293 = vpop.f32.mrf.mxu0
      %v1294 = vadd.f32 0.0, %v1293
      %1295 = vmatmul.bf16.gmra.mxu0 %v1194
      %v1296 = vpop.f32.mrf.mxu0
      %v1297 = vadd.f32 0.0, %v1296
      %v1298 = vpop.f32.mrf.mxu0
      %v1299 = vadd.f32 0.0, %v1298
      %1300 = vmatmul.bf16.gmra.mxu0 %v1195
      %v1301 = vpop.f32.mrf.mxu0
      %v1302 = vadd.f32 0.0, %v1301
      %v1303 = vpop.f32.mrf.mxu0
      %v1304 = vadd.f32 0.0, %v1303
      %1305 = vmatmul.bf16.gmra.mxu0 %v1196
      %v1306 = vpop.f32.mrf.mxu0
      %v1307 = vadd.f32 0.0, %v1306
      %v1308 = vpop.f32.mrf.mxu0
      %v1309 = vadd.f32 0.0, %v1308
      %1310 = vmatmul.bf16.gmra.mxu0 %v1197
      %v1311 = vpop.f32.mrf.mxu0
      %v1312 = vadd.f32 0.0, %v1311
      %v1313 = vpop.f32.mrf.mxu0
      %v1314 = vadd.f32 0.0, %v1313
      %1315 = vmatmul.bf16.gmra.mxu0 %v1198
      %v1316 = vpop.f32.mrf.mxu0
      %v1317 = vadd.f32 0.0, %v1316
      %v1318 = vpop.f32.mrf.mxu0
      %v1319 = vadd.f32 0.0, %v1318
      %1320 = vmatmul.bf16.gmra.mxu0 %v1199
      %v1321 = vpop.f32.mrf.mxu0
      %v1322 = vadd.f32 0.0, %v1321
      %v1323 = vpop.f32.mrf.mxu0
      %v1324 = vadd.f32 0.0, %v1323
      %1325 = vmatmul.bf16.gmra.mxu0 %v1200
      %v1326 = vpop.f32.mrf.mxu0
      %v1327 = vadd.f32 0.0, %v1326
      %v1328 = vpop.f32.mrf.mxu0
      %v1329 = vadd.f32 0.0, %v1328
      %1330 = vmatmul.bf16.gmra.mxu0 %v1201
      %v1331 = vpop.f32.mrf.mxu0
      %v1332 = vadd.f32 0.0, %v1331
      %v1333 = vpop.f32.mrf.mxu0
      %v1334 = vadd.f32 0.0, %v1333
      %1335 = vmatmul.bf16.gmra.mxu0 %v1202
      %v1336 = vpop.f32.mrf.mxu0
      %v1337 = vadd.f32 0.0, %v1336
      %v1338 = vpop.f32.mrf.mxu0
      %v1339 = vadd.f32 0.0, %v1338
      %1340 = vmatmul.bf16.gmra.mxu0 %v1203
      %v1341 = vpop.f32.mrf.mxu0
      %v1342 = vadd.f32 0.0, %v1341
      %v1343 = vpop.f32.mrf.mxu0
      %v1344 = vadd.f32 0.0, %v1343
      %1345 = vmatmul.bf16.gmra.mxu0 %v1204
      %v1346 = vpop.f32.mrf.mxu0
      %v1347 = vadd.f32 0.0, %v1346
      %v1348 = vpop.f32.mrf.mxu0
      %v1349 = vadd.f32 0.0, %v1348
      %1350 = vmatmul.bf16.gmra.mxu0 %v1205
      %v1351 = vpop.f32.mrf.mxu0
      %v1352 = vadd.f32 0.0, %v1351
      %v1353 = vpop.f32.mrf.mxu0
      %v1354 = vadd.f32 0.0, %v1353
      %1355 = vmatmul.bf16.gmra.mxu0 %v1206
      %v1356 = vpop.f32.mrf.mxu0
      %v1357 = vadd.f32 0.0, %v1356
      %v1358 = vpop.f32.mrf.mxu0
      %v1359 = vadd.f32 0.0, %v1358
      %1360 = vdwg.mxu0
      %v1361 = vadd.f32 %v999, %v1282
      %v1362 = vadd.f32 %v1001, %v1284
      %v1363 = vadd.f32 %v1004, %v1287
      %v1364 = vadd.f32 %v1006, %v1289
      %v1365 = vadd.f32 %v1009, %v1292
      %v1366 = vadd.f32 %v1011, %v1294
      %v1367 = vadd.f32 %v1014, %v1297
      %v1368 = vadd.f32 %v1016, %v1299
      %v1369 = vadd.f32 %v1019, %v1302
      %v1370 = vadd.f32 %v1021, %v1304
      %v1371 = vadd.f32 %v1024, %v1307
      %v1372 = vadd.f32 %v1026, %v1309
      %v1373 = vadd.f32 %v1029, %v1312
      %v1374 = vadd.f32 %v1031, %v1314
      %v1375 = vadd.f32 %v1034, %v1317
      %v1376 = vadd.f32 %v1036, %v1319
      %v1377 = vadd.f32 %v1039, %v1322
      %v1378 = vadd.f32 %v1041, %v1324
      %v1379 = vadd.f32 %v1044, %v1327
      %v1380 = vadd.f32 %v1046, %v1329
      %v1381 = vadd.f32 %v1049, %v1332
      %v1382 = vadd.f32 %v1051, %v1334
      %v1383 = vadd.f32 %v1054, %v1337
      %v1384 = vadd.f32 %v1056, %v1339
      %v1385 = vadd.f32 %v1059, %v1342
      %v1386 = vadd.f32 %v1061, %v1344
      %v1387 = vadd.f32 %v1064, %v1347
      %v1388 = vadd.f32 %v1066, %v1349
      %v1389 = vadd.f32 %v1069, %v1352
      %v1390 = vadd.f32 %v1071, %v1354
      %v1391 = vadd.f32 %v1074, %v1357
      %v1392 = vadd.f32 %v1076, %v1359
      %v1393 = vpack.c.bf16 %v573, %v572
      %s1394 = scalar_lea.vmem %s3, 192
      %v1395 = vld [vmem:[%s1394] sm:$0xf]
      %v1396 = vld [vmem:[%s1394 + $0x4] sm:$0xf]
      %v1397 = vld [vmem:[%s1394 + $0x8] sm:$0xf]
      %v1398 = vld [vmem:[%s1394 + $0xc] sm:$0xf]
      %v1399 = vld [vmem:[%s1394 + $0x10] sm:$0xf]
      %v1400 = vld [vmem:[%s1394 + $0x14] sm:$0xf]
      %v1401 = vld [vmem:[%s1394 + $0x18] sm:$0xf]
      %v1402 = vld [vmem:[%s1394 + $0x1c] sm:$0xf]
      %v1403 = vld [vmem:[%s1394 + $0x20] sm:$0xf]
      %v1404 = vld [vmem:[%s1394 + $0x24] sm:$0xf]
      %v1405 = vld [vmem:[%s1394 + $0x28] sm:$0xf]
      %v1406 = vld [vmem:[%s1394 + $0x2c] sm:$0xf]
      %v1407 = vld [vmem:[%s1394 + $0x30] sm:$0xf]
      %v1408 = vld [vmem:[%s1394 + $0x34] sm:$0xf]
      %v1409 = vld [vmem:[%s1394 + $0x38] sm:$0xf]
      %v1410 = vld [vmem:[%s1394 + $0x3c] sm:$0xf]
      %v1427 = vunpack.c.l.b16 %v1395
      %v1428 = vunpack.c.l.b16 %v1396
      %v1429 = vunpack.c.l.b16 %v1397
      %v1430 = vunpack.c.l.b16 %v1398
      %v1431 = vunpack.c.l.b16 %v1399
      %v1432 = vunpack.c.l.b16 %v1400
      %v1433 = vunpack.c.l.b16 %v1401
      %v1434 = vunpack.c.l.b16 %v1402
      %v1435 = vunpack.c.l.b16 %v1403
      %v1436 = vunpack.c.l.b16 %v1404
      %v1437 = vunpack.c.l.b16 %v1405
      %v1438 = vunpack.c.l.b16 %v1406
      %v1439 = vunpack.c.l.b16 %v1407
      %v1440 = vunpack.c.l.b16 %v1408
      %v1441 = vunpack.c.l.b16 %v1409
      %v1442 = vunpack.c.l.b16 %v1410
      %v1443 = vpack.c.b16 %v1428, %v1427
      %v1444 = vpack.c.b16 %v1430, %v1429
      %v1445 = vpack.c.b16 %v1432, %v1431
      %v1446 = vpack.c.b16 %v1434, %v1433
      %v1447 = vpack.c.b16 %v1436, %v1435
      %v1448 = vpack.c.b16 %v1438, %v1437
      %v1449 = vpack.c.b16 %v1440, %v1439
      %v1450 = vpack.c.b16 %v1442, %v1441
      %1459 = vmatpush.bf16.msra.mxu0 %v1450
      %1460 = vmatpush.bf16.msra.mxu0 %v1449
      %1461 = vmatpush.bf16.msra.mxu0 %v1448
      %1462 = vmatpush.bf16.msra.mxu0 %v1447
      %1463 = vmatpush.bf16.msra.mxu0 %v1446
      %1464 = vmatpush.bf16.msra.mxu0 %v1445
      %1465 = vmatpush.bf16.msra.mxu0 %v1444
      %1466 = vmatpush.bf16.msra.mxu0 %v1443
      %1467 = vmatmul.bf16.gmra.mxu0 %v579
      %v1468 = vpop.f32.mrf.mxu0
      %v1469 = vadd.f32 0.0, %v1468
      %v1470 = vpop.f32.mrf.mxu0
      %v1471 = vadd.f32 0.0, %v1470
      %1472 = vmatmul.bf16.gmra.mxu0 %v580
      %v1473 = vpop.f32.mrf.mxu0
      %v1474 = vadd.f32 0.0, %v1473
      %v1475 = vpop.f32.mrf.mxu0
      %v1476 = vadd.f32 0.0, %v1475
      %1477 = vmatmul.bf16.gmra.mxu0 %v581
      %v1478 = vpop.f32.mrf.mxu0
      %v1479 = vadd.f32 0.0, %v1478
      %v1480 = vpop.f32.mrf.mxu0
      %v1481 = vadd.f32 0.0, %v1480
      %1482 = vmatmul.bf16.gmra.mxu0 %v582
      %v1483 = vpop.f32.mrf.mxu0
      %v1484 = vadd.f32 0.0, %v1483
      %v1485 = vpop.f32.mrf.mxu0
      %v1486 = vadd.f32 0.0, %v1485
      %1487 = vmatmul.bf16.gmra.mxu0 %v583
      %v1488 = vpop.f32.mrf.mxu0
      %v1489 = vadd.f32 0.0, %v1488
      %v1490 = vpop.f32.mrf.mxu0
      %v1491 = vadd.f32 0.0, %v1490
      %1492 = vmatmul.bf16.gmra.mxu0 %v584
      %v1493 = vpop.f32.mrf.mxu0
      %v1494 = vadd.f32 0.0, %v1493
      %v1495 = vpop.f32.mrf.mxu0
      %v1496 = vadd.f32 0.0, %v1495
      %1497 = vmatmul.bf16.gmra.mxu0 %v585
      %v1498 = vpop.f32.mrf.mxu0
      %v1499 = vadd.f32 0.0, %v1498
      %v1500 = vpop.f32.mrf.mxu0
      %v1501 = vadd.f32 0.0, %v1500
      %1502 = vmatmul.bf16.gmra.mxu0 %v586
      %v1503 = vpop.f32.mrf.mxu0
      %v1504 = vadd.f32 0.0, %v1503
      %v1505 = vpop.f32.mrf.mxu0
      %v1506 = vadd.f32 0.0, %v1505
      %1507 = vmatmul.bf16.gmra.mxu0 %v587
      %v1508 = vpop.f32.mrf.mxu0
      %v1509 = vadd.f32 0.0, %v1508
      %v1510 = vpop.f32.mrf.mxu0
      %v1511 = vadd.f32 0.0, %v1510
      %1512 = vmatmul.bf16.gmra.mxu0 %v588
      %v1513 = vpop.f32.mrf.mxu0
      %v1514 = vadd.f32 0.0, %v1513
      %v1515 = vpop.f32.mrf.mxu0
      %v1516 = vadd.f32 0.0, %v1515
      %1517 = vmatmul.bf16.gmra.mxu0 %v589
      %v1518 = vpop.f32.mrf.mxu0
      %v1519 = vadd.f32 0.0, %v1518
      %v1520 = vpop.f32.mrf.mxu0
      %v1521 = vadd.f32 0.0, %v1520
      %1522 = vmatmul.bf16.gmra.mxu0 %v590
      %v1523 = vpop.f32.mrf.mxu0
      %v1524 = vadd.f32 0.0, %v1523
      %v1525 = vpop.f32.mrf.mxu0
      %v1526 = vadd.f32 0.0, %v1525
      %1527 = vmatmul.bf16.gmra.mxu0 %v591
      %v1528 = vpop.f32.mrf.mxu0
      %v1529 = vadd.f32 0.0, %v1528
      %v1530 = vpop.f32.mrf.mxu0
      %v1531 = vadd.f32 0.0, %v1530
      %1532 = vmatmul.bf16.gmra.mxu0 %v592
      %v1533 = vpop.f32.mrf.mxu0
      %v1534 = vadd.f32 0.0, %v1533
      %v1535 = vpop.f32.mrf.mxu0
      %v1536 = vadd.f32 0.0, %v1535
      %1537 = vmatmul.bf16.gmra.mxu0 %v593
      %v1538 = vpop.f32.mrf.mxu0
      %v1539 = vadd.f32 0.0, %v1538
      %v1540 = vpop.f32.mrf.mxu0
      %v1541 = vadd.f32 0.0, %v1540
      %1542 = vmatmul.bf16.gmra.mxu0 %v1393
      %v1543 = vpop.f32.mrf.mxu0
      %v1544 = vadd.f32 0.0, %v1543
      %v1545 = vpop.f32.mrf.mxu0
      %v1546 = vadd.f32 0.0, %v1545
      %1547 = vdwg.mxu0
      %v1548 = vadd.f32 %v1361, %v1469
      %v1549 = vadd.f32 %v1362, %v1471
      %v1550 = vadd.f32 %v1363, %v1474
      %v1551 = vadd.f32 %v1364, %v1476
      %v1552 = vadd.f32 %v1365, %v1479
      %v1553 = vadd.f32 %v1366, %v1481
      %v1554 = vadd.f32 %v1367, %v1484
      %v1555 = vadd.f32 %v1368, %v1486
      %v1556 = vadd.f32 %v1369, %v1489
      %v1557 = vadd.f32 %v1370, %v1491
      %v1558 = vadd.f32 %v1371, %v1494
      %v1559 = vadd.f32 %v1372, %v1496
      %v1560 = vadd.f32 %v1373, %v1499
      %v1561 = vadd.f32 %v1374, %v1501
      %v1562 = vadd.f32 %v1375, %v1504
      %v1563 = vadd.f32 %v1376, %v1506
      %v1564 = vadd.f32 %v1377, %v1509
      %v1565 = vadd.f32 %v1378, %v1511
      %v1566 = vadd.f32 %v1379, %v1514
      %v1567 = vadd.f32 %v1380, %v1516
      %v1568 = vadd.f32 %v1381, %v1519
      %v1569 = vadd.f32 %v1382, %v1521
      %v1570 = vadd.f32 %v1383, %v1524
      %v1571 = vadd.f32 %v1384, %v1526
      %v1572 = vadd.f32 %v1385, %v1529
      %v1573 = vadd.f32 %v1386, %v1531
      %v1574 = vadd.f32 %v1387, %v1534
      %v1575 = vadd.f32 %v1388, %v1536
      %v1576 = vadd.f32 %v1389, %v1539
      %v1577 = vadd.f32 %v1390, %v1541
      %v1578 = vadd.f32 %v1391, %v1544
      %v1579 = vadd.f32 %v1392, %v1546
      %v1583 = vrot.slane %v572, 1
      %v1584 = vrot.slane %v573, 1
      %v1585 = vsel %vm658, %v1583, %v1584
      %v1586 = vrot.slane %v574, 1
      %v1587 = vsel %vm658, %v1584, %v1586
      %v1590 = vpack.c.bf16 %v1587, %v1585
      %s1591 = scalar_lea.vmem %s3, 256
      %v1592 = vld [vmem:[%s1591] sm:$0xf]
      %v1593 = vld [vmem:[%s1591 + $0x4] sm:$0xf]
      %v1594 = vld [vmem:[%s1591 + $0x8] sm:$0xf]
      %v1595 = vld [vmem:[%s1591 + $0xc] sm:$0xf]
      %v1596 = vld [vmem:[%s1591 + $0x10] sm:$0xf]
      %v1597 = vld [vmem:[%s1591 + $0x14] sm:$0xf]
      %v1598 = vld [vmem:[%s1591 + $0x18] sm:$0xf]
      %v1599 = vld [vmem:[%s1591 + $0x1c] sm:$0xf]
      %v1600 = vld [vmem:[%s1591 + $0x20] sm:$0xf]
      %v1601 = vld [vmem:[%s1591 + $0x24] sm:$0xf]
      %v1602 = vld [vmem:[%s1591 + $0x28] sm:$0xf]
      %v1603 = vld [vmem:[%s1591 + $0x2c] sm:$0xf]
      %v1604 = vld [vmem:[%s1591 + $0x30] sm:$0xf]
      %v1605 = vld [vmem:[%s1591 + $0x34] sm:$0xf]
      %v1606 = vld [vmem:[%s1591 + $0x38] sm:$0xf]
      %v1607 = vld [vmem:[%s1591 + $0x3c] sm:$0xf]
      %v1624 = vunpack.c.l.b16 %v1592
      %v1625 = vunpack.c.l.b16 %v1593
      %v1626 = vunpack.c.l.b16 %v1594
      %v1627 = vunpack.c.l.b16 %v1595
      %v1628 = vunpack.c.l.b16 %v1596
      %v1629 = vunpack.c.l.b16 %v1597
      %v1630 = vunpack.c.l.b16 %v1598
      %v1631 = vunpack.c.l.b16 %v1599
      %v1632 = vunpack.c.l.b16 %v1600
      %v1633 = vunpack.c.l.b16 %v1601
      %v1634 = vunpack.c.l.b16 %v1602
      %v1635 = vunpack.c.l.b16 %v1603
      %v1636 = vunpack.c.l.b16 %v1604
      %v1637 = vunpack.c.l.b16 %v1605
      %v1638 = vunpack.c.l.b16 %v1606
      %v1639 = vunpack.c.l.b16 %v1607
      %v1640 = vpack.c.b16 %v1625, %v1624
      %v1641 = vpack.c.b16 %v1627, %v1626
      %v1642 = vpack.c.b16 %v1629, %v1628
      %v1643 = vpack.c.b16 %v1631, %v1630
      %v1644 = vpack.c.b16 %v1633, %v1632
      %v1645 = vpack.c.b16 %v1635, %v1634
      %v1646 = vpack.c.b16 %v1637, %v1636
      %v1647 = vpack.c.b16 %v1639, %v1638
      %1656 = vmatpush.bf16.msra.mxu0 %v1647
      %1657 = vmatpush.bf16.msra.mxu0 %v1646
      %1658 = vmatpush.bf16.msra.mxu0 %v1645
      %1659 = vmatpush.bf16.msra.mxu0 %v1644
      %1660 = vmatpush.bf16.msra.mxu0 %v1643
      %1661 = vmatpush.bf16.msra.mxu0 %v1642
      %1662 = vmatpush.bf16.msra.mxu0 %v1641
      %1663 = vmatpush.bf16.msra.mxu0 %v1640
      %1664 = vmatmul.bf16.gmra.mxu0 %v772
      %v1665 = vpop.f32.mrf.mxu0
      %v1666 = vadd.f32 0.0, %v1665
      %v1667 = vpop.f32.mrf.mxu0
      %v1668 = vadd.f32 0.0, %v1667
      %1669 = vmatmul.bf16.gmra.mxu0 %v773
      %v1670 = vpop.f32.mrf.mxu0
      %v1671 = vadd.f32 0.0, %v1670
      %v1672 = vpop.f32.mrf.mxu0
      %v1673 = vadd.f32 0.0, %v1672
      %1674 = vmatmul.bf16.gmra.mxu0 %v774
      %v1675 = vpop.f32.mrf.mxu0
      %v1676 = vadd.f32 0.0, %v1675
      %v1677 = vpop.f32.mrf.mxu0
      %v1678 = vadd.f32 0.0, %v1677
      %1679 = vmatmul.bf16.gmra.mxu0 %v775
      %v1680 = vpop.f32.mrf.mxu0
      %v1681 = vadd.f32 0.0, %v1680
      %v1682 = vpop.f32.mrf.mxu0
      %v1683 = vadd.f32 0.0, %v1682
      %1684 = vmatmul.bf16.gmra.mxu0 %v776
      %v1685 = vpop.f32.mrf.mxu0
      %v1686 = vadd.f32 0.0, %v1685
      %v1687 = vpop.f32.mrf.mxu0
      %v1688 = vadd.f32 0.0, %v1687
      %1689 = vmatmul.bf16.gmra.mxu0 %v777
      %v1690 = vpop.f32.mrf.mxu0
      %v1691 = vadd.f32 0.0, %v1690
      %v1692 = vpop.f32.mrf.mxu0
      %v1693 = vadd.f32 0.0, %v1692
      %1694 = vmatmul.bf16.gmra.mxu0 %v778
      %v1695 = vpop.f32.mrf.mxu0
      %v1696 = vadd.f32 0.0, %v1695
      %v1697 = vpop.f32.mrf.mxu0
      %v1698 = vadd.f32 0.0, %v1697
      %1699 = vmatmul.bf16.gmra.mxu0 %v779
      %v1700 = vpop.f32.mrf.mxu0
      %v1701 = vadd.f32 0.0, %v1700
      %v1702 = vpop.f32.mrf.mxu0
      %v1703 = vadd.f32 0.0, %v1702
      %1704 = vmatmul.bf16.gmra.mxu0 %v780
      %v1705 = vpop.f32.mrf.mxu0
      %v1706 = vadd.f32 0.0, %v1705
      %v1707 = vpop.f32.mrf.mxu0
      %v1708 = vadd.f32 0.0, %v1707
      %1709 = vmatmul.bf16.gmra.mxu0 %v781
      %v1710 = vpop.f32.mrf.mxu0
      %v1711 = vadd.f32 0.0, %v1710
      %v1712 = vpop.f32.mrf.mxu0
      %v1713 = vadd.f32 0.0, %v1712
      %1714 = vmatmul.bf16.gmra.mxu0 %v782
      %v1715 = vpop.f32.mrf.mxu0
      %v1716 = vadd.f32 0.0, %v1715
      %v1717 = vpop.f32.mrf.mxu0
      %v1718 = vadd.f32 0.0, %v1717
      %1719 = vmatmul.bf16.gmra.mxu0 %v783
      %v1720 = vpop.f32.mrf.mxu0
      %v1721 = vadd.f32 0.0, %v1720
      %v1722 = vpop.f32.mrf.mxu0
      %v1723 = vadd.f32 0.0, %v1722
      %1724 = vmatmul.bf16.gmra.mxu0 %v784
      %v1725 = vpop.f32.mrf.mxu0
      %v1726 = vadd.f32 0.0, %v1725
      %v1727 = vpop.f32.mrf.mxu0
      %v1728 = vadd.f32 0.0, %v1727
      %1729 = vmatmul.bf16.gmra.mxu0 %v785
      %v1730 = vpop.f32.mrf.mxu0
      %v1731 = vadd.f32 0.0, %v1730
      %v1732 = vpop.f32.mrf.mxu0
      %v1733 = vadd.f32 0.0, %v1732
      %1734 = vmatmul.bf16.gmra.mxu0 %v786
      %v1735 = vpop.f32.mrf.mxu0
      %v1736 = vadd.f32 0.0, %v1735
      %v1737 = vpop.f32.mrf.mxu0
      %v1738 = vadd.f32 0.0, %v1737
      %1739 = vmatmul.bf16.gmra.mxu0 %v1590
      %v1740 = vpop.f32.mrf.mxu0
      %v1741 = vadd.f32 0.0, %v1740
      %v1742 = vpop.f32.mrf.mxu0
      %v1743 = vadd.f32 0.0, %v1742
      %1744 = vdwg.mxu0
      %v1745 = vadd.f32 %v1548, %v1666
      %v1746 = vadd.f32 %v1549, %v1668
      %v1747 = vadd.f32 %v1550, %v1671
      %v1748 = vadd.f32 %v1551, %v1673
      %v1749 = vadd.f32 %v1552, %v1676
      %v1750 = vadd.f32 %v1553, %v1678
      %v1751 = vadd.f32 %v1554, %v1681
      %v1752 = vadd.f32 %v1555, %v1683
      %v1753 = vadd.f32 %v1556, %v1686
      %v1754 = vadd.f32 %v1557, %v1688
      %v1755 = vadd.f32 %v1558, %v1691
      %v1756 = vadd.f32 %v1559, %v1693
      %v1757 = vadd.f32 %v1560, %v1696
      %v1758 = vadd.f32 %v1561, %v1698
      %v1759 = vadd.f32 %v1562, %v1701
      %v1760 = vadd.f32 %v1563, %v1703
      %v1761 = vadd.f32 %v1564, %v1706
      %v1762 = vadd.f32 %v1565, %v1708
      %v1763 = vadd.f32 %v1566, %v1711
      %v1764 = vadd.f32 %v1567, %v1713
      %v1765 = vadd.f32 %v1568, %v1716
      %v1766 = vadd.f32 %v1569, %v1718
      %v1767 = vadd.f32 %v1570, %v1721
      %v1768 = vadd.f32 %v1571, %v1723
      %v1769 = vadd.f32 %v1572, %v1726
      %v1770 = vadd.f32 %v1573, %v1728
      %v1771 = vadd.f32 %v1574, %v1731
      %v1772 = vadd.f32 %v1575, %v1733
      %v1773 = vadd.f32 %v1576, %v1736
      %v1774 = vadd.f32 %v1577, %v1738
      %v1775 = vadd.f32 %v1578, %v1741
      %v1776 = vadd.f32 %v1579, %v1743
      %v1777 = vrot.slane %v572, 2
      %v1778 = vrot.slane %v573, 2
      %v1779 = vsel %vm1078, %v1777, %v1778
      %v1780 = vrot.slane %v574, 2
      %v1781 = vsel %vm1078, %v1778, %v1780
      %v1784 = vpack.c.bf16 %v1781, %v1779
      %s1785 = scalar_lea.vmem %s3, 320
      %v1786 = vld [vmem:[%s1785] sm:$0xf]
      %v1787 = vld [vmem:[%s1785 + $0x4] sm:$0xf]
      %v1788 = vld [vmem:[%s1785 + $0x8] sm:$0xf]
      %v1789 = vld [vmem:[%s1785 + $0xc] sm:$0xf]
      %v1790 = vld [vmem:[%s1785 + $0x10] sm:$0xf]
      %v1791 = vld [vmem:[%s1785 + $0x14] sm:$0xf]
      %v1792 = vld [vmem:[%s1785 + $0x18] sm:$0xf]
      %v1793 = vld [vmem:[%s1785 + $0x1c] sm:$0xf]
      %v1794 = vld [vmem:[%s1785 + $0x20] sm:$0xf]
      %v1795 = vld [vmem:[%s1785 + $0x24] sm:$0xf]
      %v1796 = vld [vmem:[%s1785 + $0x28] sm:$0xf]
      %v1797 = vld [vmem:[%s1785 + $0x2c] sm:$0xf]
      %v1798 = vld [vmem:[%s1785 + $0x30] sm:$0xf]
      %v1799 = vld [vmem:[%s1785 + $0x34] sm:$0xf]
      %v1800 = vld [vmem:[%s1785 + $0x38] sm:$0xf]
      %v1801 = vld [vmem:[%s1785 + $0x3c] sm:$0xf]
      %v1818 = vunpack.c.l.b16 %v1786
      %v1819 = vunpack.c.l.b16 %v1787
      %v1820 = vunpack.c.l.b16 %v1788
      %v1821 = vunpack.c.l.b16 %v1789
      %v1822 = vunpack.c.l.b16 %v1790
      %v1823 = vunpack.c.l.b16 %v1791
      %v1824 = vunpack.c.l.b16 %v1792
      %v1825 = vunpack.c.l.b16 %v1793
      %v1826 = vunpack.c.l.b16 %v1794
      %v1827 = vunpack.c.l.b16 %v1795
      %v1828 = vunpack.c.l.b16 %v1796
      %v1829 = vunpack.c.l.b16 %v1797
      %v1830 = vunpack.c.l.b16 %v1798
      %v1831 = vunpack.c.l.b16 %v1799
      %v1832 = vunpack.c.l.b16 %v1800
      %v1833 = vunpack.c.l.b16 %v1801
      %v1834 = vpack.c.b16 %v1819, %v1818
      %v1835 = vpack.c.b16 %v1821, %v1820
      %v1836 = vpack.c.b16 %v1823, %v1822
      %v1837 = vpack.c.b16 %v1825, %v1824
      %v1838 = vpack.c.b16 %v1827, %v1826
      %v1839 = vpack.c.b16 %v1829, %v1828
      %v1840 = vpack.c.b16 %v1831, %v1830
      %v1841 = vpack.c.b16 %v1833, %v1832
      %1850 = vmatpush.bf16.msra.mxu0 %v1841
      %1851 = vmatpush.bf16.msra.mxu0 %v1840
      %1852 = vmatpush.bf16.msra.mxu0 %v1839
      %1853 = vmatpush.bf16.msra.mxu0 %v1838
      %1854 = vmatpush.bf16.msra.mxu0 %v1837
      %1855 = vmatpush.bf16.msra.mxu0 %v1836
      %1856 = vmatpush.bf16.msra.mxu0 %v1835
      %1857 = vmatpush.bf16.msra.mxu0 %v1834
      %1858 = vmatmul.bf16.gmra.mxu0 %v1192
      %v1859 = vpop.f32.mrf.mxu0
      %v1860 = vadd.f32 0.0, %v1859
      %v1861 = vpop.f32.mrf.mxu0
      %v1862 = vadd.f32 0.0, %v1861
      %1863 = vmatmul.bf16.gmra.mxu0 %v1193
      %v1864 = vpop.f32.mrf.mxu0
      %v1865 = vadd.f32 0.0, %v1864
      %v1866 = vpop.f32.mrf.mxu0
      %v1867 = vadd.f32 0.0, %v1866
      %1868 = vmatmul.bf16.gmra.mxu0 %v1194
      %v1869 = vpop.f32.mrf.mxu0
      %v1870 = vadd.f32 0.0, %v1869
      %v1871 = vpop.f32.mrf.mxu0
      %v1872 = vadd.f32 0.0, %v1871
      %1873 = vmatmul.bf16.gmra.mxu0 %v1195
      %v1874 = vpop.f32.mrf.mxu0
      %v1875 = vadd.f32 0.0, %v1874
      %v1876 = vpop.f32.mrf.mxu0
      %v1877 = vadd.f32 0.0, %v1876
      %1878 = vmatmul.bf16.gmra.mxu0 %v1196
      %v1879 = vpop.f32.mrf.mxu0
      %v1880 = vadd.f32 0.0, %v1879
      %v1881 = vpop.f32.mrf.mxu0
      %v1882 = vadd.f32 0.0, %v1881
      %1883 = vmatmul.bf16.gmra.mxu0 %v1197
      %v1884 = vpop.f32.mrf.mxu0
      %v1885 = vadd.f32 0.0, %v1884
      %v1886 = vpop.f32.mrf.mxu0
      %v1887 = vadd.f32 0.0, %v1886
      %1888 = vmatmul.bf16.gmra.mxu0 %v1198
      %v1889 = vpop.f32.mrf.mxu0
      %v1890 = vadd.f32 0.0, %v1889
      %v1891 = vpop.f32.mrf.mxu0
      %v1892 = vadd.f32 0.0, %v1891
      %1893 = vmatmul.bf16.gmra.mxu0 %v1199
      %v1894 = vpop.f32.mrf.mxu0
      %v1895 = vadd.f32 0.0, %v1894
      %v1896 = vpop.f32.mrf.mxu0
      %v1897 = vadd.f32 0.0, %v1896
      %1898 = vmatmul.bf16.gmra.mxu0 %v1200
      %v1899 = vpop.f32.mrf.mxu0
      %v1900 = vadd.f32 0.0, %v1899
      %v1901 = vpop.f32.mrf.mxu0
      %v1902 = vadd.f32 0.0, %v1901
      %1903 = vmatmul.bf16.gmra.mxu0 %v1201
      %v1904 = vpop.f32.mrf.mxu0
      %v1905 = vadd.f32 0.0, %v1904
      %v1906 = vpop.f32.mrf.mxu0
      %v1907 = vadd.f32 0.0, %v1906
      %1908 = vmatmul.bf16.gmra.mxu0 %v1202
      %v1909 = vpop.f32.mrf.mxu0
      %v1910 = vadd.f32 0.0, %v1909
      %v1911 = vpop.f32.mrf.mxu0
      %v1912 = vadd.f32 0.0, %v1911
      %1913 = vmatmul.bf16.gmra.mxu0 %v1203
      %v1914 = vpop.f32.mrf.mxu0
      %v1915 = vadd.f32 0.0, %v1914
      %v1916 = vpop.f32.mrf.mxu0
      %v1917 = vadd.f32 0.0, %v1916
      %1918 = vmatmul.bf16.gmra.mxu0 %v1204
      %v1919 = vpop.f32.mrf.mxu0
      %v1920 = vadd.f32 0.0, %v1919
      %v1921 = vpop.f32.mrf.mxu0
      %v1922 = vadd.f32 0.0, %v1921
      %1923 = vmatmul.bf16.gmra.mxu0 %v1205
      %v1924 = vpop.f32.mrf.mxu0
      %v1925 = vadd.f32 0.0, %v1924
      %v1926 = vpop.f32.mrf.mxu0
      %v1927 = vadd.f32 0.0, %v1926
      %1928 = vmatmul.bf16.gmra.mxu0 %v1206
      %v1929 = vpop.f32.mrf.mxu0
      %v1930 = vadd.f32 0.0, %v1929
      %v1931 = vpop.f32.mrf.mxu0
      %v1932 = vadd.f32 0.0, %v1931
      %1933 = vmatmul.bf16.gmra.mxu0 %v1784
      %v1934 = vpop.f32.mrf.mxu0
      %v1935 = vadd.f32 0.0, %v1934
      %v1936 = vpop.f32.mrf.mxu0
      %v1937 = vadd.f32 0.0, %v1936
      %1938 = vdwg.mxu0
      %v1939 = vadd.f32 %v1745, %v1860
      %v1940 = vadd.f32 %v1746, %v1862
      %v1941 = vadd.f32 %v1747, %v1865
      %v1942 = vadd.f32 %v1748, %v1867
      %v1943 = vadd.f32 %v1749, %v1870
      %v1944 = vadd.f32 %v1750, %v1872
      %v1945 = vadd.f32 %v1751, %v1875
      %v1946 = vadd.f32 %v1752, %v1877
      %v1947 = vadd.f32 %v1753, %v1880
      %v1948 = vadd.f32 %v1754, %v1882
      %v1949 = vadd.f32 %v1755, %v1885
      %v1950 = vadd.f32 %v1756, %v1887
      %v1951 = vadd.f32 %v1757, %v1890
      %v1952 = vadd.f32 %v1758, %v1892
      %v1953 = vadd.f32 %v1759, %v1895
      %v1954 = vadd.f32 %v1760, %v1897
      %v1955 = vadd.f32 %v1761, %v1900
      %v1956 = vadd.f32 %v1762, %v1902
      %v1957 = vadd.f32 %v1763, %v1905
      %v1958 = vadd.f32 %v1764, %v1907
      %v1959 = vadd.f32 %v1765, %v1910
      %v1960 = vadd.f32 %v1766, %v1912
      %v1961 = vadd.f32 %v1767, %v1915
      %v1962 = vadd.f32 %v1768, %v1917
      %v1963 = vadd.f32 %v1769, %v1920
      %v1964 = vadd.f32 %v1770, %v1922
      %v1965 = vadd.f32 %v1771, %v1925
      %v1966 = vadd.f32 %v1772, %v1927
      %v1967 = vadd.f32 %v1773, %v1930
      %v1968 = vadd.f32 %v1774, %v1932
      %v1969 = vadd.f32 %v1775, %v1935
      %v1970 = vadd.f32 %v1776, %v1937
      %v1971 = vpack.c.bf16 %v576, %v575
      %s1972 = scalar_lea.vmem %s3, 384
      %v1973 = vld [vmem:[%s1972] sm:$0xf]
      %v1974 = vld [vmem:[%s1972 + $0x4] sm:$0xf]
      %v1975 = vld [vmem:[%s1972 + $0x8] sm:$0xf]
      %v1976 = vld [vmem:[%s1972 + $0xc] sm:$0xf]
      %v1977 = vld [vmem:[%s1972 + $0x10] sm:$0xf]
      %v1978 = vld [vmem:[%s1972 + $0x14] sm:$0xf]
      %v1979 = vld [vmem:[%s1972 + $0x18] sm:$0xf]
      %v1980 = vld [vmem:[%s1972 + $0x1c] sm:$0xf]
      %v1981 = vld [vmem:[%s1972 + $0x20] sm:$0xf]
      %v1982 = vld [vmem:[%s1972 + $0x24] sm:$0xf]
      %v1983 = vld [vmem:[%s1972 + $0x28] sm:$0xf]
      %v1984 = vld [vmem:[%s1972 + $0x2c] sm:$0xf]
      %v1985 = vld [vmem:[%s1972 + $0x30] sm:$0xf]
      %v1986 = vld [vmem:[%s1972 + $0x34] sm:$0xf]
      %v1987 = vld [vmem:[%s1972 + $0x38] sm:$0xf]
      %v1988 = vld [vmem:[%s1972 + $0x3c] sm:$0xf]
      %v2005 = vunpack.c.l.b16 %v1973
      %v2006 = vunpack.c.l.b16 %v1974
      %v2007 = vunpack.c.l.b16 %v1975
      %v2008 = vunpack.c.l.b16 %v1976
      %v2009 = vunpack.c.l.b16 %v1977
      %v2010 = vunpack.c.l.b16 %v1978
      %v2011 = vunpack.c.l.b16 %v1979
      %v2012 = vunpack.c.l.b16 %v1980
      %v2013 = vunpack.c.l.b16 %v1981
      %v2014 = vunpack.c.l.b16 %v1982
      %v2015 = vunpack.c.l.b16 %v1983
      %v2016 = vunpack.c.l.b16 %v1984
      %v2017 = vunpack.c.l.b16 %v1985
      %v2018 = vunpack.c.l.b16 %v1986
      %v2019 = vunpack.c.l.b16 %v1987
      %v2020 = vunpack.c.l.b16 %v1988
      %v2021 = vpack.c.b16 %v2006, %v2005
      %v2022 = vpack.c.b16 %v2008, %v2007
      %v2023 = vpack.c.b16 %v2010, %v2009
      %v2024 = vpack.c.b16 %v2012, %v2011
      %v2025 = vpack.c.b16 %v2014, %v2013
      %v2026 = vpack.c.b16 %v2016, %v2015
      %v2027 = vpack.c.b16 %v2018, %v2017
      %v2028 = vpack.c.b16 %v2020, %v2019
      %2037 = vmatpush.bf16.msra.mxu0 %v2028
      %2038 = vmatpush.bf16.msra.mxu0 %v2027
      %2039 = vmatpush.bf16.msra.mxu0 %v2026
      %2040 = vmatpush.bf16.msra.mxu0 %v2025
      %2041 = vmatpush.bf16.msra.mxu0 %v2024
      %2042 = vmatpush.bf16.msra.mxu0 %v2023
      %2043 = vmatpush.bf16.msra.mxu0 %v2022
      %2044 = vmatpush.bf16.msra.mxu0 %v2021
      %2045 = vmatmul.bf16.gmra.mxu0 %v580
      %v2046 = vpop.f32.mrf.mxu0
      %v2047 = vadd.f32 0.0, %v2046
      %v2048 = vpop.f32.mrf.mxu0
      %v2049 = vadd.f32 0.0, %v2048
      %2050 = vmatmul.bf16.gmra.mxu0 %v581
      %v2051 = vpop.f32.mrf.mxu0
      %v2052 = vadd.f32 0.0, %v2051
      %v2053 = vpop.f32.mrf.mxu0
      %v2054 = vadd.f32 0.0, %v2053
      %2055 = vmatmul.bf16.gmra.mxu0 %v582
      %v2056 = vpop.f32.mrf.mxu0
      %v2057 = vadd.f32 0.0, %v2056
      %v2058 = vpop.f32.mrf.mxu0
      %v2059 = vadd.f32 0.0, %v2058
      %2060 = vmatmul.bf16.gmra.mxu0 %v583
      %v2061 = vpop.f32.mrf.mxu0
      %v2062 = vadd.f32 0.0, %v2061
      %v2063 = vpop.f32.mrf.mxu0
      %v2064 = vadd.f32 0.0, %v2063
      %2065 = vmatmul.bf16.gmra.mxu0 %v584
      %v2066 = vpop.f32.mrf.mxu0
      %v2067 = vadd.f32 0.0, %v2066
      %v2068 = vpop.f32.mrf.mxu0
      %v2069 = vadd.f32 0.0, %v2068
      %2070 = vmatmul.bf16.gmra.mxu0 %v585
      %v2071 = vpop.f32.mrf.mxu0
      %v2072 = vadd.f32 0.0, %v2071
      %v2073 = vpop.f32.mrf.mxu0
      %v2074 = vadd.f32 0.0, %v2073
      %2075 = vmatmul.bf16.gmra.mxu0 %v586
      %v2076 = vpop.f32.mrf.mxu0
      %v2077 = vadd.f32 0.0, %v2076
      %v2078 = vpop.f32.mrf.mxu0
      %v2079 = vadd.f32 0.0, %v2078
      %2080 = vmatmul.bf16.gmra.mxu0 %v587
      %v2081 = vpop.f32.mrf.mxu0
      %v2082 = vadd.f32 0.0, %v2081
      %v2083 = vpop.f32.mrf.mxu0
      %v2084 = vadd.f32 0.0, %v2083
      %2085 = vmatmul.bf16.gmra.mxu0 %v588
      %v2086 = vpop.f32.mrf.mxu0
      %v2087 = vadd.f32 0.0, %v2086
      %v2088 = vpop.f32.mrf.mxu0
      %v2089 = vadd.f32 0.0, %v2088
      %2090 = vmatmul.bf16.gmra.mxu0 %v589
      %v2091 = vpop.f32.mrf.mxu0
      %v2092 = vadd.f32 0.0, %v2091
      %v2093 = vpop.f32.mrf.mxu0
      %v2094 = vadd.f32 0.0, %v2093
      %2095 = vmatmul.bf16.gmra.mxu0 %v590
      %v2096 = vpop.f32.mrf.mxu0
      %v2097 = vadd.f32 0.0, %v2096
      %v2098 = vpop.f32.mrf.mxu0
      %v2099 = vadd.f32 0.0, %v2098
      %2100 = vmatmul.bf16.gmra.mxu0 %v591
      %v2101 = vpop.f32.mrf.mxu0
      %v2102 = vadd.f32 0.0, %v2101
      %v2103 = vpop.f32.mrf.mxu0
      %v2104 = vadd.f32 0.0, %v2103
      %2105 = vmatmul.bf16.gmra.mxu0 %v592
      %v2106 = vpop.f32.mrf.mxu0
      %v2107 = vadd.f32 0.0, %v2106
      %v2108 = vpop.f32.mrf.mxu0
      %v2109 = vadd.f32 0.0, %v2108
      %2110 = vmatmul.bf16.gmra.mxu0 %v593
      %v2111 = vpop.f32.mrf.mxu0
      %v2112 = vadd.f32 0.0, %v2111
      %v2113 = vpop.f32.mrf.mxu0
      %v2114 = vadd.f32 0.0, %v2113
      %2115 = vmatmul.bf16.gmra.mxu0 %v1393
      %v2116 = vpop.f32.mrf.mxu0
      %v2117 = vadd.f32 0.0, %v2116
      %v2118 = vpop.f32.mrf.mxu0
      %v2119 = vadd.f32 0.0, %v2118
      %2120 = vmatmul.bf16.gmra.mxu0 %v1971
      %v2121 = vpop.f32.mrf.mxu0
      %v2122 = vadd.f32 0.0, %v2121
      %v2123 = vpop.f32.mrf.mxu0
      %v2124 = vadd.f32 0.0, %v2123
      %2125 = vdwg.mxu0
      %v2126 = vadd.f32 %v1939, %v2047
      %v2127 = vadd.f32 %v1940, %v2049
      %v2128 = vadd.f32 %v1941, %v2052
      %v2129 = vadd.f32 %v1942, %v2054
      %v2130 = vadd.f32 %v1943, %v2057
      %v2131 = vadd.f32 %v1944, %v2059
      %v2132 = vadd.f32 %v1945, %v2062
      %v2133 = vadd.f32 %v1946, %v2064
      %v2134 = vadd.f32 %v1947, %v2067
      %v2135 = vadd.f32 %v1948, %v2069
      %v2136 = vadd.f32 %v1949, %v2072
      %v2137 = vadd.f32 %v1950, %v2074
      %v2138 = vadd.f32 %v1951, %v2077
      %v2139 = vadd.f32 %v1952, %v2079
      %v2140 = vadd.f32 %v1953, %v2082
      %v2141 = vadd.f32 %v1954, %v2084
      %v2142 = vadd.f32 %v1955, %v2087
      %v2143 = vadd.f32 %v1956, %v2089
      %v2144 = vadd.f32 %v1957, %v2092
      %v2145 = vadd.f32 %v1958, %v2094
      %v2146 = vadd.f32 %v1959, %v2097
      %v2147 = vadd.f32 %v1960, %v2099
      %v2148 = vadd.f32 %v1961, %v2102
      %v2149 = vadd.f32 %v1962, %v2104
      %v2150 = vadd.f32 %v1963, %v2107
      %v2151 = vadd.f32 %v1964, %v2109
      %v2152 = vadd.f32 %v1965, %v2112
      %v2153 = vadd.f32 %v1966, %v2114
      %v2154 = vadd.f32 %v1967, %v2117
      %v2155 = vadd.f32 %v1968, %v2119
      %v2156 = vadd.f32 %v1969, %v2122
      %v2157 = vadd.f32 %v1970, %v2124
      %v2161 = vrot.slane %v575, 1
      %v2162 = vrot.slane %v576, 1
      %v2163 = vsel %vm658, %v2161, %v2162
      %v2164 = vrot.slane %v577, 1
      %v2165 = vsel %vm658, %v2162, %v2164
      %v2168 = vpack.c.bf16 %v2165, %v2163
      %s2169 = scalar_lea.vmem %s3, 448
      %v2170 = vld [vmem:[%s2169] sm:$0xf]
      %v2171 = vld [vmem:[%s2169 + $0x4] sm:$0xf]
      %v2172 = vld [vmem:[%s2169 + $0x8] sm:$0xf]
      %v2173 = vld [vmem:[%s2169 + $0xc] sm:$0xf]
      %v2174 = vld [vmem:[%s2169 + $0x10] sm:$0xf]
      %v2175 = vld [vmem:[%s2169 + $0x14] sm:$0xf]
      %v2176 = vld [vmem:[%s2169 + $0x18] sm:$0xf]
      %v2177 = vld [vmem:[%s2169 + $0x1c] sm:$0xf]
      %v2178 = vld [vmem:[%s2169 + $0x20] sm:$0xf]
      %v2179 = vld [vmem:[%s2169 + $0x24] sm:$0xf]
      %v2180 = vld [vmem:[%s2169 + $0x28] sm:$0xf]
      %v2181 = vld [vmem:[%s2169 + $0x2c] sm:$0xf]
      %v2182 = vld [vmem:[%s2169 + $0x30] sm:$0xf]
      %v2183 = vld [vmem:[%s2169 + $0x34] sm:$0xf]
      %v2184 = vld [vmem:[%s2169 + $0x38] sm:$0xf]
      %v2185 = vld [vmem:[%s2169 + $0x3c] sm:$0xf]
      %v2202 = vunpack.c.l.b16 %v2170
      %v2203 = vunpack.c.l.b16 %v2171
      %v2204 = vunpack.c.l.b16 %v2172
      %v2205 = vunpack.c.l.b16 %v2173
      %v2206 = vunpack.c.l.b16 %v2174
      %v2207 = vunpack.c.l.b16 %v2175
      %v2208 = vunpack.c.l.b16 %v2176
      %v2209 = vunpack.c.l.b16 %v2177
      %v2210 = vunpack.c.l.b16 %v2178
      %v2211 = vunpack.c.l.b16 %v2179
      %v2212 = vunpack.c.l.b16 %v2180
      %v2213 = vunpack.c.l.b16 %v2181
      %v2214 = vunpack.c.l.b16 %v2182
      %v2215 = vunpack.c.l.b16 %v2183
      %v2216 = vunpack.c.l.b16 %v2184
      %v2217 = vunpack.c.l.b16 %v2185
      %v2218 = vpack.c.b16 %v2203, %v2202
      %v2219 = vpack.c.b16 %v2205, %v2204
      %v2220 = vpack.c.b16 %v2207, %v2206
      %v2221 = vpack.c.b16 %v2209, %v2208
      %v2222 = vpack.c.b16 %v2211, %v2210
      %v2223 = vpack.c.b16 %v2213, %v2212
      %v2224 = vpack.c.b16 %v2215, %v2214
      %v2225 = vpack.c.b16 %v2217, %v2216
      %2234 = vmatpush.bf16.msra.mxu0 %v2225
      %2235 = vmatpush.bf16.msra.mxu0 %v2224
      %2236 = vmatpush.bf16.msra.mxu0 %v2223
      %2237 = vmatpush.bf16.msra.mxu0 %v2222
      %2238 = vmatpush.bf16.msra.mxu0 %v2221
      %2239 = vmatpush.bf16.msra.mxu0 %v2220
      %2240 = vmatpush.bf16.msra.mxu0 %v2219
      %2241 = vmatpush.bf16.msra.mxu0 %v2218
      %2242 = vmatmul.bf16.gmra.mxu0 %v773
      %v2243 = vpop.f32.mrf.mxu0
      %v2244 = vadd.f32 0.0, %v2243
      %v2245 = vpop.f32.mrf.mxu0
      %v2246 = vadd.f32 0.0, %v2245
      %2247 = vmatmul.bf16.gmra.mxu0 %v774
      %v2248 = vpop.f32.mrf.mxu0
      %v2249 = vadd.f32 0.0, %v2248
      %v2250 = vpop.f32.mrf.mxu0
      %v2251 = vadd.f32 0.0, %v2250
      %2252 = vmatmul.bf16.gmra.mxu0 %v775
      %v2253 = vpop.f32.mrf.mxu0
      %v2254 = vadd.f32 0.0, %v2253
      %v2255 = vpop.f32.mrf.mxu0
      %v2256 = vadd.f32 0.0, %v2255
      %2257 = vmatmul.bf16.gmra.mxu0 %v776
      %v2258 = vpop.f32.mrf.mxu0
      %v2259 = vadd.f32 0.0, %v2258
      %v2260 = vpop.f32.mrf.mxu0
      %v2261 = vadd.f32 0.0, %v2260
      %2262 = vmatmul.bf16.gmra.mxu0 %v777
      %v2263 = vpop.f32.mrf.mxu0
      %v2264 = vadd.f32 0.0, %v2263
      %v2265 = vpop.f32.mrf.mxu0
      %v2266 = vadd.f32 0.0, %v2265
      %2267 = vmatmul.bf16.gmra.mxu0 %v778
      %v2268 = vpop.f32.mrf.mxu0
      %v2269 = vadd.f32 0.0, %v2268
      %v2270 = vpop.f32.mrf.mxu0
      %v2271 = vadd.f32 0.0, %v2270
      %2272 = vmatmul.bf16.gmra.mxu0 %v779
      %v2273 = vpop.f32.mrf.mxu0
      %v2274 = vadd.f32 0.0, %v2273
      %v2275 = vpop.f32.mrf.mxu0
      %v2276 = vadd.f32 0.0, %v2275
      %2277 = vmatmul.bf16.gmra.mxu0 %v780
      %v2278 = vpop.f32.mrf.mxu0
      %v2279 = vadd.f32 0.0, %v2278
      %v2280 = vpop.f32.mrf.mxu0
      %v2281 = vadd.f32 0.0, %v2280
      %2282 = vmatmul.bf16.gmra.mxu0 %v781
      %v2283 = vpop.f32.mrf.mxu0
      %v2284 = vadd.f32 0.0, %v2283
      %v2285 = vpop.f32.mrf.mxu0
      %v2286 = vadd.f32 0.0, %v2285
      %2287 = vmatmul.bf16.gmra.mxu0 %v782
      %v2288 = vpop.f32.mrf.mxu0
      %v2289 = vadd.f32 0.0, %v2288
      %v2290 = vpop.f32.mrf.mxu0
      %v2291 = vadd.f32 0.0, %v2290
      %2292 = vmatmul.bf16.gmra.mxu0 %v783
      %v2293 = vpop.f32.mrf.mxu0
      %v2294 = vadd.f32 0.0, %v2293
      %v2295 = vpop.f32.mrf.mxu0
      %v2296 = vadd.f32 0.0, %v2295
      %2297 = vmatmul.bf16.gmra.mxu0 %v784
      %v2298 = vpop.f32.mrf.mxu0
      %v2299 = vadd.f32 0.0, %v2298
      %v2300 = vpop.f32.mrf.mxu0
      %v2301 = vadd.f32 0.0, %v2300
      %2302 = vmatmul.bf16.gmra.mxu0 %v785
      %v2303 = vpop.f32.mrf.mxu0
      %v2304 = vadd.f32 0.0, %v2303
      %v2305 = vpop.f32.mrf.mxu0
      %v2306 = vadd.f32 0.0, %v2305
      %2307 = vmatmul.bf16.gmra.mxu0 %v786
      %v2308 = vpop.f32.mrf.mxu0
      %v2309 = vadd.f32 0.0, %v2308
      %v2310 = vpop.f32.mrf.mxu0
      %v2311 = vadd.f32 0.0, %v2310
      %2312 = vmatmul.bf16.gmra.mxu0 %v1590
      %v2313 = vpop.f32.mrf.mxu0
      %v2314 = vadd.f32 0.0, %v2313
      %v2315 = vpop.f32.mrf.mxu0
      %v2316 = vadd.f32 0.0, %v2315
      %2317 = vmatmul.bf16.gmra.mxu0 %v2168
      %v2318 = vpop.f32.mrf.mxu0
      %v2319 = vadd.f32 0.0, %v2318
      %v2320 = vpop.f32.mrf.mxu0
      %v2321 = vadd.f32 0.0, %v2320
      %2322 = vdwg.mxu0
      %v2323 = vadd.f32 %v2126, %v2244
      %v2324 = vadd.f32 %v2127, %v2246
      %v2325 = vadd.f32 %v2128, %v2249
      %v2326 = vadd.f32 %v2129, %v2251
      %v2327 = vadd.f32 %v2130, %v2254
      %v2328 = vadd.f32 %v2131, %v2256
      %v2329 = vadd.f32 %v2132, %v2259
      %v2330 = vadd.f32 %v2133, %v2261
      %v2331 = vadd.f32 %v2134, %v2264
      %v2332 = vadd.f32 %v2135, %v2266
      %v2333 = vadd.f32 %v2136, %v2269
      %v2334 = vadd.f32 %v2137, %v2271
      %v2335 = vadd.f32 %v2138, %v2274
      %v2336 = vadd.f32 %v2139, %v2276
      %v2337 = vadd.f32 %v2140, %v2279
      %v2338 = vadd.f32 %v2141, %v2281
      %v2339 = vadd.f32 %v2142, %v2284
      %v2340 = vadd.f32 %v2143, %v2286
      %v2341 = vadd.f32 %v2144, %v2289
      %v2342 = vadd.f32 %v2145, %v2291
      %v2343 = vadd.f32 %v2146, %v2294
      %v2344 = vadd.f32 %v2147, %v2296
      %v2345 = vadd.f32 %v2148, %v2299
      %v2346 = vadd.f32 %v2149, %v2301
      %v2347 = vadd.f32 %v2150, %v2304
      %v2348 = vadd.f32 %v2151, %v2306
      %v2349 = vadd.f32 %v2152, %v2309
      %v2350 = vadd.f32 %v2153, %v2311
      %v2351 = vadd.f32 %v2154, %v2314
      %v2352 = vadd.f32 %v2155, %v2316
      %v2353 = vadd.f32 %v2156, %v2319
      %v2354 = vadd.f32 %v2157, %v2321
      %v2355 = vrot.slane %v575, 2
      %v2356 = vrot.slane %v576, 2
      %v2357 = vsel %vm1078, %v2355, %v2356
      %v2358 = vrot.slane %v577, 2
      %v2359 = vsel %vm1078, %v2356, %v2358
      %v2362 = vpack.c.bf16 %v2359, %v2357
      %s2363 = scalar_lea.vmem %s3, 512
      %v2364 = vld [vmem:[%s2363] sm:$0xf]
      %v2365 = vld [vmem:[%s2363 + $0x4] sm:$0xf]
      %v2366 = vld [vmem:[%s2363 + $0x8] sm:$0xf]
      %v2367 = vld [vmem:[%s2363 + $0xc] sm:$0xf]
      %v2368 = vld [vmem:[%s2363 + $0x10] sm:$0xf]
      %v2369 = vld [vmem:[%s2363 + $0x14] sm:$0xf]
      %v2370 = vld [vmem:[%s2363 + $0x18] sm:$0xf]
      %v2371 = vld [vmem:[%s2363 + $0x1c] sm:$0xf]
      %v2372 = vld [vmem:[%s2363 + $0x20] sm:$0xf]
      %v2373 = vld [vmem:[%s2363 + $0x24] sm:$0xf]
      %v2374 = vld [vmem:[%s2363 + $0x28] sm:$0xf]
      %v2375 = vld [vmem:[%s2363 + $0x2c] sm:$0xf]
      %v2376 = vld [vmem:[%s2363 + $0x30] sm:$0xf]
      %v2377 = vld [vmem:[%s2363 + $0x34] sm:$0xf]
      %v2378 = vld [vmem:[%s2363 + $0x38] sm:$0xf]
      %v2379 = vld [vmem:[%s2363 + $0x3c] sm:$0xf]
      %v2396 = vunpack.c.l.b16 %v2364
      %v2397 = vunpack.c.l.b16 %v2365
      %v2398 = vunpack.c.l.b16 %v2366
      %v2399 = vunpack.c.l.b16 %v2367
      %v2400 = vunpack.c.l.b16 %v2368
      %v2401 = vunpack.c.l.b16 %v2369
      %v2402 = vunpack.c.l.b16 %v2370
      %v2403 = vunpack.c.l.b16 %v2371
      %v2404 = vunpack.c.l.b16 %v2372
      %v2405 = vunpack.c.l.b16 %v2373
      %v2406 = vunpack.c.l.b16 %v2374
      %v2407 = vunpack.c.l.b16 %v2375
      %v2408 = vunpack.c.l.b16 %v2376
      %v2409 = vunpack.c.l.b16 %v2377
      %v2410 = vunpack.c.l.b16 %v2378
      %v2411 = vunpack.c.l.b16 %v2379
      %v2412 = vpack.c.b16 %v2397, %v2396
      %v2413 = vpack.c.b16 %v2399, %v2398
      %v2414 = vpack.c.b16 %v2401, %v2400
      %v2415 = vpack.c.b16 %v2403, %v2402
      %v2416 = vpack.c.b16 %v2405, %v2404
      %v2417 = vpack.c.b16 %v2407, %v2406
      %v2418 = vpack.c.b16 %v2409, %v2408
      %v2419 = vpack.c.b16 %v2411, %v2410
      %2428 = vmatpush.bf16.msra.mxu0 %v2419
      %2429 = vmatpush.bf16.msra.mxu0 %v2418
      %2430 = vmatpush.bf16.msra.mxu0 %v2417
      %2431 = vmatpush.bf16.msra.mxu0 %v2416
      %2432 = vmatpush.bf16.msra.mxu0 %v2415
      %2433 = vmatpush.bf16.msra.mxu0 %v2414
      %2434 = vmatpush.bf16.msra.mxu0 %v2413
      %2435 = vmatpush.bf16.msra.mxu0 %v2412
      %2436 = vmatmul.bf16.gmra.mxu0 %v1193
      %v2437 = vpop.f32.mrf.mxu0
      %v2438 = vadd.f32 0.0, %v2437
      %v2439 = vpop.f32.mrf.mxu0
      %v2440 = vadd.f32 0.0, %v2439
      %2441 = vmatmul.bf16.gmra.mxu0 %v1194
      %v2442 = vpop.f32.mrf.mxu0
      %v2443 = vadd.f32 0.0, %v2442
      %v2444 = vpop.f32.mrf.mxu0
      %v2445 = vadd.f32 0.0, %v2444
      %2446 = vmatmul.bf16.gmra.mxu0 %v1195
      %v2447 = vpop.f32.mrf.mxu0
      %v2448 = vadd.f32 0.0, %v2447
      %v2449 = vpop.f32.mrf.mxu0
      %v2450 = vadd.f32 0.0, %v2449
      %2451 = vmatmul.bf16.gmra.mxu0 %v1196
      %v2452 = vpop.f32.mrf.mxu0
      %v2453 = vadd.f32 0.0, %v2452
      %v2454 = vpop.f32.mrf.mxu0
      %v2455 = vadd.f32 0.0, %v2454
      %2456 = vmatmul.bf16.gmra.mxu0 %v1197
      %v2457 = vpop.f32.mrf.mxu0
      %v2458 = vadd.f32 0.0, %v2457
      %v2459 = vpop.f32.mrf.mxu0
      %v2460 = vadd.f32 0.0, %v2459
      %2461 = vmatmul.bf16.gmra.mxu0 %v1198
      %v2462 = vpop.f32.mrf.mxu0
      %v2463 = vadd.f32 0.0, %v2462
      %v2464 = vpop.f32.mrf.mxu0
      %v2465 = vadd.f32 0.0, %v2464
      %2466 = vmatmul.bf16.gmra.mxu0 %v1199
      %v2467 = vpop.f32.mrf.mxu0
      %v2468 = vadd.f32 0.0, %v2467
      %v2469 = vpop.f32.mrf.mxu0
      %v2470 = vadd.f32 0.0, %v2469
      %2471 = vmatmul.bf16.gmra.mxu0 %v1200
      %v2472 = vpop.f32.mrf.mxu0
      %v2473 = vadd.f32 0.0, %v2472
      %v2474 = vpop.f32.mrf.mxu0
      %v2475 = vadd.f32 0.0, %v2474
      %2476 = vmatmul.bf16.gmra.mxu0 %v1201
      %v2477 = vpop.f32.mrf.mxu0
      %v2478 = vadd.f32 0.0, %v2477
      %v2479 = vpop.f32.mrf.mxu0
      %v2480 = vadd.f32 0.0, %v2479
      %2481 = vmatmul.bf16.gmra.mxu0 %v1202
      %v2482 = vpop.f32.mrf.mxu0
      %v2483 = vadd.f32 0.0, %v2482
      %v2484 = vpop.f32.mrf.mxu0
      %v2485 = vadd.f32 0.0, %v2484
      %2486 = vmatmul.bf16.gmra.mxu0 %v1203
      %v2487 = vpop.f32.mrf.mxu0
      %v2488 = vadd.f32 0.0, %v2487
      %v2489 = vpop.f32.mrf.mxu0
      %v2490 = vadd.f32 0.0, %v2489
      %2491 = vmatmul.bf16.gmra.mxu0 %v1204
      %v2492 = vpop.f32.mrf.mxu0
      %v2493 = vadd.f32 0.0, %v2492
      %v2494 = vpop.f32.mrf.mxu0
      %v2495 = vadd.f32 0.0, %v2494
      %2496 = vmatmul.bf16.gmra.mxu0 %v1205
      %v2497 = vpop.f32.mrf.mxu0
      %v2498 = vadd.f32 0.0, %v2497
      %v2499 = vpop.f32.mrf.mxu0
      %v2500 = vadd.f32 0.0, %v2499
      %2501 = vmatmul.bf16.gmra.mxu0 %v1206
      %v2502 = vpop.f32.mrf.mxu0
      %v2503 = vadd.f32 0.0, %v2502
      %v2504 = vpop.f32.mrf.mxu0
      %v2505 = vadd.f32 0.0, %v2504
      %2506 = vmatmul.bf16.gmra.mxu0 %v1784
      %v2507 = vpop.f32.mrf.mxu0
      %v2508 = vadd.f32 0.0, %v2507
      %v2509 = vpop.f32.mrf.mxu0
      %v2510 = vadd.f32 0.0, %v2509
      %2511 = vmatmul.bf16.gmra.mxu0 %v2362
      %v2512 = vpop.f32.mrf.mxu0
      %v2513 = vadd.f32 0.0, %v2512
      %v2514 = vpop.f32.mrf.mxu0
      %v2515 = vadd.f32 0.0, %v2514
      %2516 = vdwg.mxu0
      %v2517 = vadd.f32 %v2323, %v2438
      %v2518 = vadd.f32 %v2324, %v2440
      %v2519 = vadd.f32 %v2325, %v2443
      %v2520 = vadd.f32 %v2326, %v2445
      %v2521 = vadd.f32 %v2327, %v2448
      %v2522 = vadd.f32 %v2328, %v2450
      %v2523 = vadd.f32 %v2329, %v2453
      %v2524 = vadd.f32 %v2330, %v2455
      %v2525 = vadd.f32 %v2331, %v2458
      %v2526 = vadd.f32 %v2332, %v2460
      %v2527 = vadd.f32 %v2333, %v2463
      %v2528 = vadd.f32 %v2334, %v2465
      %v2529 = vadd.f32 %v2335, %v2468
      %v2530 = vadd.f32 %v2336, %v2470
      %v2531 = vadd.f32 %v2337, %v2473
      %v2532 = vadd.f32 %v2338, %v2475
      %v2533 = vadd.f32 %v2339, %v2478
      %v2534 = vadd.f32 %v2340, %v2480
      %v2535 = vadd.f32 %v2341, %v2483
      %v2536 = vadd.f32 %v2342, %v2485
      %v2537 = vadd.f32 %v2343, %v2488
      %v2538 = vadd.f32 %v2344, %v2490
      %v2539 = vadd.f32 %v2345, %v2493
      %v2540 = vadd.f32 %v2346, %v2495
      %v2541 = vadd.f32 %v2347, %v2498
      %v2542 = vadd.f32 %v2348, %v2500
      %v2543 = vadd.f32 %v2349, %v2503
      %v2544 = vadd.f32 %v2350, %v2505
      %v2545 = vadd.f32 %v2351, %v2508
      %v2546 = vadd.f32 %v2352, %v2510
      %v2547 = vadd.f32 %v2353, %v2513
      %v2548 = vadd.f32 %v2354, %v2515
      %2549 = vst [vmem:[%s262] sm:$0xff] %v2517
      %2550 = vst [vmem:[%s262 + $0x8] sm:$0xff] %v2518
      %2551 = vst [vmem:[%s262 + $0x10] sm:$0xff] %v2519
      %2552 = vst [vmem:[%s262 + $0x18] sm:$0xff] %v2520
      %2553 = vst [vmem:[%s262 + $0x20] sm:$0xff] %v2521
      %2554 = vst [vmem:[%s262 + $0x28] sm:$0xff] %v2522
      %2555 = vst [vmem:[%s262 + $0x30] sm:$0xff] %v2523
      %2556 = vst [vmem:[%s262 + $0x38] sm:$0xff] %v2524
      %2557 = vst [vmem:[%s262 + $0x40] sm:$0xff] %v2525
      %2558 = vst [vmem:[%s262 + $0x48] sm:$0xff] %v2526
      %2559 = vst [vmem:[%s262 + $0x50] sm:$0xff] %v2527
      %2560 = vst [vmem:[%s262 + $0x58] sm:$0xff] %v2528
      %2561 = vst [vmem:[%s262 + $0x60] sm:$0xff] %v2529
      %2562 = vst [vmem:[%s262 + $0x68] sm:$0xff] %v2530
      %2563 = vst [vmem:[%s262 + $0x70] sm:$0xff] %v2531
      %2564 = vst [vmem:[%s262 + $0x78] sm:$0xff] %v2532
      %2565 = vst [vmem:[%s262 + $0x80] sm:$0xff] %v2533
      %2566 = vst [vmem:[%s262 + $0x88] sm:$0xff] %v2534
      %2567 = vst [vmem:[%s262 + $0x90] sm:$0xff] %v2535
      %2568 = vst [vmem:[%s262 + $0x98] sm:$0xff] %v2536
      %2569 = vst [vmem:[%s262 + $0xa0] sm:$0xff] %v2537
      %2570 = vst [vmem:[%s262 + $0xa8] sm:$0xff] %v2538
      %2571 = vst [vmem:[%s262 + $0xb0] sm:$0xff] %v2539
      %2572 = vst [vmem:[%s262 + $0xb8] sm:$0xff] %v2540
      %2573 = vst [vmem:[%s262 + $0xc0] sm:$0xff] %v2541
      %2574 = vst [vmem:[%s262 + $0xc8] sm:$0xff] %v2542
      %2575 = vst [vmem:[%s262 + $0xd0] sm:$0xff] %v2543
      %2576 = vst [vmem:[%s262 + $0xd8] sm:$0xff] %v2544
      %2577 = vst [vmem:[%s262 + $0xe0] sm:$0xff] %v2545
      %2578 = vst [vmem:[%s262 + $0xe8] sm:$0xff] %v2546
      %2579 = vst [vmem:[%s262 + $0xf0] sm:$0xff] %v2547
      %2580 = vst [vmem:[%s262 + $0xf8] sm:$0xff] %v2548
      %v2581 = vadd.f32 %v2517, %v2518
      %v2582 = vadd.f32 %v2581, %v2519
      %v2583 = vadd.f32 %v2582, %v2520
      %v2584 = vadd.f32 %v2583, %v2521
      %v2585 = vadd.f32 %v2584, %v2522
      %v2586 = vadd.f32 %v2585, %v2523
      %v2587 = vadd.f32 %v2586, %v2524
      %v2588 = vadd.f32 %v2587, %v2525
      %v2589 = vadd.f32 %v2588, %v2526
      %v2590 = vadd.f32 %v2589, %v2527
      %v2591 = vadd.f32 %v2590, %v2528
      %v2592 = vadd.f32 %v2591, %v2529
      %v2593 = vadd.f32 %v2592, %v2530
      %v2594 = vadd.f32 %v2593, %v2531
      %v2595 = vadd.f32 %v2594, %v2532
      %v2596 = vadd.f32 %v2595, %v2533
      %v2597 = vadd.f32 %v2596, %v2534
      %v2598 = vadd.f32 %v2597, %v2535
      %v2599 = vadd.f32 %v2598, %v2536
      %v2600 = vadd.f32 %v2599, %v2537
      %v2601 = vadd.f32 %v2600, %v2538
      %v2602 = vadd.f32 %v2601, %v2539
      %v2603 = vadd.f32 %v2602, %v2540
      %v2604 = vadd.f32 %v2603, %v2541
      %v2605 = vadd.f32 %v2604, %v2542
      %v2606 = vadd.f32 %v2605, %v2543
      %v2607 = vadd.f32 %v2606, %v2544
      %v2608 = vadd.f32 %v2607, %v2545
      %v2609 = vadd.f32 %v2608, %v2546
      %v2610 = vadd.f32 %v2609, %v2547
      %v2611 = vadd.f32 %v2610, %v2548
      %v2612 = vrot.slane %v2611, 4
      %v2613 = vadd.f32 %v2611, %v2612
      %v2614 = vrot.slane %v2613, 2
      %v2615 = vadd.f32 %v2613, %v2614
      %v2616 = vrot.slane %v2615, 1
      %v2617 = vadd.f32 %v2615, %v2616
      %2618 = vst [vmem:[%s265] sm:$0x1] %v2617
      %v2619 = vmul.f32 %v2517, %v2517
      %v2620 = vmul.f32 %v2518, %v2518
      %v2621 = vmul.f32 %v2519, %v2519
      %v2622 = vmul.f32 %v2520, %v2520
      %v2623 = vmul.f32 %v2521, %v2521
      %v2624 = vmul.f32 %v2522, %v2522
      %v2625 = vmul.f32 %v2523, %v2523
      %v2626 = vmul.f32 %v2524, %v2524
      %v2627 = vmul.f32 %v2525, %v2525
      %v2628 = vmul.f32 %v2526, %v2526
      %v2629 = vmul.f32 %v2527, %v2527
      %v2630 = vmul.f32 %v2528, %v2528
      %v2631 = vmul.f32 %v2529, %v2529
      %v2632 = vmul.f32 %v2530, %v2530
      %v2633 = vmul.f32 %v2531, %v2531
      %v2634 = vmul.f32 %v2532, %v2532
      %v2635 = vmul.f32 %v2533, %v2533
      %v2636 = vmul.f32 %v2534, %v2534
      %v2637 = vmul.f32 %v2535, %v2535
      %v2638 = vmul.f32 %v2536, %v2536
      %v2639 = vmul.f32 %v2537, %v2537
      %v2640 = vmul.f32 %v2538, %v2538
      %v2641 = vmul.f32 %v2539, %v2539
      %v2642 = vmul.f32 %v2540, %v2540
      %v2643 = vmul.f32 %v2541, %v2541
      %v2644 = vmul.f32 %v2542, %v2542
      %v2645 = vmul.f32 %v2543, %v2543
      %v2646 = vmul.f32 %v2544, %v2544
      %v2647 = vmul.f32 %v2545, %v2545
      %v2648 = vmul.f32 %v2546, %v2546
      %v2649 = vmul.f32 %v2547, %v2547
      %v2650 = vmul.f32 %v2548, %v2548
      %v2651 = vadd.f32 %v2619, %v2620
      %v2652 = vadd.f32 %v2651, %v2621
      %v2653 = vadd.f32 %v2652, %v2622
      %v2654 = vadd.f32 %v2653, %v2623
      %v2655 = vadd.f32 %v2654, %v2624
      %v2656 = vadd.f32 %v2655, %v2625
      %v2657 = vadd.f32 %v2656, %v2626
      %v2658 = vadd.f32 %v2657, %v2627
      %v2659 = vadd.f32 %v2658, %v2628
      %v2660 = vadd.f32 %v2659, %v2629
      %v2661 = vadd.f32 %v2660, %v2630
      %v2662 = vadd.f32 %v2661, %v2631
      %v2663 = vadd.f32 %v2662, %v2632
      %v2664 = vadd.f32 %v2663, %v2633
      %v2665 = vadd.f32 %v2664, %v2634
      %v2666 = vadd.f32 %v2665, %v2635
      %v2667 = vadd.f32 %v2666, %v2636
      %v2668 = vadd.f32 %v2667, %v2637
      %v2669 = vadd.f32 %v2668, %v2638
      %v2670 = vadd.f32 %v2669, %v2639
      %v2671 = vadd.f32 %v2670, %v2640
      %v2672 = vadd.f32 %v2671, %v2641
      %v2673 = vadd.f32 %v2672, %v2642
      %v2674 = vadd.f32 %v2673, %v2643
      %v2675 = vadd.f32 %v2674, %v2644
      %v2676 = vadd.f32 %v2675, %v2645
      %v2677 = vadd.f32 %v2676, %v2646
      %v2678 = vadd.f32 %v2677, %v2647
      %v2679 = vadd.f32 %v2678, %v2648
      %v2680 = vadd.f32 %v2679, %v2649
      %v2681 = vadd.f32 %v2680, %v2650
      %v2682 = vrot.slane %v2681, 4
      %v2683 = vadd.f32 %v2681, %v2682
      %v2684 = vrot.slane %v2683, 2
      %v2685 = vadd.f32 %v2683, %v2684
      %v2686 = vrot.slane %v2685, 1
      %v2687 = vadd.f32 %v2685, %v2686
      %2688 = vst [vmem:[%s268] sm:$0x1] %v2687
      %p2689 = scmp.lt.s32.totalorder %s18, 1
      %s2690 = scalar_select %p2689, %s18, 1
      %s2691 = smul.addr %s2690, 32
      %s2692 = smul.addr %s2691, 8
      %s2693 = scalar_lea.vmem %s4, %s2692
      %p2694 = scmp.lt.s32.totalorder %s18, 1
      %s2695 = scalar_select %p2694, %s18, 1
      %s2696 = scalar_lea.vmem %s5, %s2695
      %p2697 = scmp.lt.s32.totalorder %s18, 1
      %s2698 = scalar_select %p2697, %s18, 1
      %s2699 = scalar_lea.vmem %s6, %s2698
      // Predicated region
      $region37: #{basicblock_forward.4} parent=35 // pred_check
        %p2700 = pneg %p125
      $region38: #{basicblock_forward.4} parent=35 // pred_check_branch
        %2702 = sbr.rel (%p2700) target = $region40
      $region39: #{basicblock_forward.4} parent=35 // pred_region
        _
      $region40: #{basicblock_forward.4} parent=35 // pred_fallthru
        _
      // Predicated region
      $region41: #{basicblock_forward.4} parent=35 // pred_check
        %p2703 = pneg %p151
      $region42: #{basicblock_forward.4} parent=35 // pred_check_branch
        %2705 = sbr.rel (%p2703) target = $region44
      $region43: #{basicblock_forward.4} parent=35 // pred_region
        _
      $region44: #{basicblock_forward.4} parent=35 // pred_fallthru
        _
      // Predicated region
      $region45: #{basicblock_forward.4} parent=35 // pred_check
        %p2706 = pneg %p177
      $region46: #{basicblock_forward.4} parent=35 // pred_check_branch
        %2708 = sbr.rel (%p2706) target = $region48
      $region47: #{basicblock_forward.4} parent=35 // pred_region
        _
      $region48: #{basicblock_forward.4} parent=35 // pred_fallthru
        _
    $region36: #{basicblock_forward.4} parent=5 // pred_fallthru
      _
    %p2709 = scmp.le.s32.totalorder 2, %s13
    // Predicated region
    $region49: #{basicblock_forward.4} parent=5 // pred_check
      %p2710 = pneg %p2709
    $region50: #{basicblock_forward.4} parent=5 // pred_check_branch
      %2712 = sbr.rel (%p2710) target = $region52
    $region51: #{basicblock_forward.4} parent=5 // pred_region
      %s2713 = ssub.s32 %s13, 2
      // Predicated region
      $region53: #{basicblock_forward.4} parent=51 // pred_check
        %p2714 = pneg %p131
      $region54: #{basicblock_forward.4} parent=51 // pred_check_branch
        %2716 = sbr.rel (%p2714) target = $region56
      $region55: #{basicblock_forward.4} parent=51 // pred_region
        %p2717 = scmp.lt.s32.totalorder %s19, 1
        %s2718 = scalar_select %p2717, %s19, 1
        %s2719 = smul.addr %s2718, 32
        %s2720 = smul.addr %s2719, 8
        %s2721 = scalar_lea.vmem %s4, %s2720
      $region56: #{basicblock_forward.4} parent=51 // pred_fallthru
        _
      // Predicated region
      $region57: #{basicblock_forward.4} parent=51 // pred_check
        %p2722 = pneg %p157
      $region58: #{basicblock_forward.4} parent=51 // pred_check_branch
        %2724 = sbr.rel (%p2722) target = $region60
      $region59: #{basicblock_forward.4} parent=51 // pred_region
        %p2725 = scmp.lt.s32.totalorder %s19, 1
        %s2726 = scalar_select %p2725, %s19, 1
        %s2727 = scalar_lea.vmem %s5, %s2726
      $region60: #{basicblock_forward.4} parent=51 // pred_fallthru
        _
      // Predicated region
      $region61: #{basicblock_forward.4} parent=51 // pred_check
        %p2728 = pneg %p183
      $region62: #{basicblock_forward.4} parent=51 // pred_check_branch
        %2730 = sbr.rel (%p2728) target = $region64
      $region63: #{basicblock_forward.4} parent=51 // pred_region
        %p2731 = scmp.lt.s32.totalorder %s19, 1
        %s2732 = scalar_select %p2731, %s19, 1
        %s2733 = scalar_lea.vmem %s6, %s2732
      $region64: #{basicblock_forward.4} parent=51 // pred_fallthru
        _
    $region52: #{basicblock_forward.4} parent=5 // pred_fallthru
      _
  $region6: #{basicblock_forward.4} parent=0 // loop_footer
    %s17 = sadd.s32 1, %s13
  $region7: #{basicblock_forward.4} parent=0 // loop_footer_branch
    %12 = sbr.rel target = $region3
  $region8: #{basicblock_forward.4} parent=0 // loop_exit
    _

</llo_original>
